<compile_context>
chip_gen: v5e
topology: v5e:2x2
jax: 0.10.0
libtpu: 0.0.40
codegen_flags: <defaults>
</compile_context>

<pallas_src>
import functools

import jax
import jax.numpy as jnp
from jax.experimental import pallas as pl
from jax.experimental.pallas import tpu as pltpu

EPS = 1e-5


def _bilinear_matrix(h_in, scale=2):
  """Interpolation matrix U (h_in*scale, h_in) for nn.Upsample(scale_factor=2,
  mode='bilinear') with align_corners=False:  out = U @ x along that axis."""
  h_out = h_in * scale
  rows = []
  for i in range(h_out):
    src = max((i + 0.5) / scale - 0.5, 0.0)
    i0 = min(int(src), h_in - 1)
    i1 = min(i0 + 1, h_in - 1)
    lam = src - i0
    r = [0.0] * h_in
    r[i0] += 1.0 - lam
    r[i1] += lam
    rows.append(r)
  return jnp.array(rows, dtype=jnp.float32)


def _up_double_conv_kernel(
    x1f_ref,    # (N*C1, S1)    bf16  deep feature, (image,channel) in sublanes
    x2pf_ref,   # (N, C2, Lpad) bf16  skip feature, F.pad'ed + conv-zero-pad,
                #                     flattened to Hp*Wp and lane-padded to Lpad
    upmat_ref,  # (S1, Lpad)    bf16  bilinear-upsample o scatter-to-padded-flat
    sel_ref,    # (Lpad, HW)    f32   interior-extraction (selection) matrix
    mask_ref,   # (1, N*Lpad)   f32   1.0 at interior pixels, 0.0 on borders/tail
    w1_ref,     # (9, CO, CIN)  bf16  conv1 weights, tap-major (ky*3+kx)
    b1_ref, g1_ref, be1_ref,    # (CO, 1) f32  conv1 bias, BN1 gamma/beta
    w2_ref,     # (9, CO, CO)   bf16
    b2_ref, g2_ref, be2_ref,    # (CO, 1) f32
    out_ref,    # (N, CO, HW)   f32
    xcat_scr,   # VMEM (CIN, PAD + N*Lpad + PAD) bf16
    h_scr,      # VMEM (CO,  PAD + N*Lpad + PAD) bf16
    *, N, Wp, Lpad, HW, C1, C2, CO, PAD):
  CIN = C1 + C2
  L = N * Lpad
  # tap lane offsets: output pixel at padded-flat position p reads position p+d
  taps = [(ky - 1) * Wp + (kx - 1) for ky in range(3) for kx in range(3)]
  inv_cnt = 1.0 / float(N * HW)

  # zero ONLY the conv halos; the [PAD, PAD+L) interiors of both scratches are
  # fully overwritten below (per-image concat stores / hidden store).
  xcat_scr[:, :PAD] = jnp.zeros((CIN, PAD), jnp.bfloat16)
  xcat_scr[:, PAD + L:] = jnp.zeros((CIN, PAD), jnp.bfloat16)
  h_scr[:, :PAD] = jnp.zeros((CO, PAD), jnp.bfloat16)
  h_scr[:, PAD + L:] = jnp.zeros((CO, PAD), jnp.bfloat16)

  # ---- bilinear upsample + scatter-into-padded-flat: ONE matmul, whole batch
  up_all = jnp.dot(x1f_ref[...], upmat_ref[...],
                   preferred_element_type=jnp.float32)        # (N*C1, Lpad) f32
  up_all = up_all.astype(jnp.bfloat16)

  # ---- assemble concat([x2, up(x1)]) in channels-in-sublanes layout ----
  for n in range(N):                         # static, tiny N (unrolled)
    base = PAD + n * Lpad                    # multiple of 128 -> aligned stores
    xcat_scr[0:C2, pl.ds(base, Lpad)] = x2pf_ref[n]
    xcat_scr[C2:CIN, pl.ds(base, Lpad)] = up_all[n * C1:(n + 1) * C1]

  # ---- conv1: 9 lane-shifted bf16 matmuls over the whole batch ----
  acc = jnp.broadcast_to(b1_ref[...], (CO, L))                 # bias, hoisted
  for t, d in enumerate(taps):
    xs = xcat_scr[:, pl.ds(PAD + d, L)]                        # (CIN, L) bf16
    acc = acc + jnp.dot(w1_ref[t], xs, preferred_element_type=jnp.float32)

  # ---- BatchNorm1 (train-mode batch stats over interior pixels) + ReLU ----
  mask = mask_ref[...]                                         # (1, L) f32
  mu1 = jnp.sum(acc * mask, axis=1, keepdims=True) * inv_cnt
  var1 = jnp.sum(jnp.square(acc - mu1) * mask, axis=1, keepdims=True) * inv_cnt
  h = (acc - mu1) * jax.lax.rsqrt(var1 + EPS) * g1_ref[...] + be1_ref[...]
  h = jnp.maximum(h, 0.0) * mask             # re-zero conv padding border/tail
  h_scr[:, pl.ds(PAD, L)] = h.astype(jnp.bfloat16)             # aligned store

  # ---- conv2: same lane-shift + matmul scheme ----
  acc2 = jnp.broadcast_to(b2_ref[...], (CO, L))
  for t, d in enumerate(taps):
    hs = h_scr[:, pl.ds(PAD + d, L)]                           # (CO, L) bf16
    acc2 = acc2 + jnp.dot(w2_ref[t], hs, preferred_element_type=jnp.float32)

  # ---- extract interiors (lane-dense selection matmul), BN2 + ReLU, store ----
  v = [jnp.dot(acc2[:, n * Lpad:(n + 1) * Lpad], sel_ref[...],
               preferred_element_type=jnp.float32)             # (CO, HW) f32
       for n in range(N)]
  mu2 = sum(jnp.sum(vn, axis=1, keepdims=True) for vn in v) * inv_cnt
  var2 = sum(jnp.sum(jnp.square(vn - mu2), axis=1, keepdims=True)
             for vn in v) * inv_cnt
  inv_std2 = jax.lax.rsqrt(var2 + EPS)
  for n in range(N):
    out_ref[n] = jnp.maximum(
        (v[n] - mu2) * inv_std2 * g2_ref[...] + be2_ref[...], 0.0)


def init_params(key, in_ch, out_ch):
  """Deterministic synthetic parameters with the shapes from up.__init__."""
  ks = jax.random.split(key, 8)
  return {
      "w1": 0.1 * jax.random.normal(ks[0], (out_ch, in_ch, 3, 3), jnp.float32),
      "b1": 0.1 * jax.random.normal(ks[1], (out_ch,), jnp.float32),
      "g1": 1.0 + 0.1 * jax.random.normal(ks[2], (out_ch,), jnp.float32),
      "be1": 0.1 * jax.random.normal(ks[3], (out_ch,), jnp.float32),
      "w2": 0.1 * jax.random.normal(ks[4], (out_ch, out_ch, 3, 3), jnp.float32),
      "b2": 0.1 * jax.random.normal(ks[5], (out_ch,), jnp.float32),
      "g2": 1.0 + 0.1 * jax.random.normal(ks[6], (out_ch,), jnp.float32),
      "be2": 0.1 * jax.random.normal(ks[7], (out_ch,), jnp.float32),
  }


@jax.jit
def up_forward(params, x1_nchw, x2_nchw):
  x1 = x1_nchw.astype(jnp.float32)
  x2 = x2_nchw.astype(jnp.float32)
  N, C1, H1, W1 = x1.shape
  _, C2, H2, W2 = x2.shape
  H, W = 2 * H1, 2 * W1                      # upsampled spatial size
  Hp, Wp = H + 2, W + 2                      # conv zero-padded lattice
  HW, S1 = H * W, H1 * W1
  CO, CIN = params["w1"].shape[0], params["w1"].shape[1]
  assert CIN == C1 + C2
  Lpad = ((Hp * Wp + 127) // 128) * 128      # per-image flat row, lane aligned
  PAD = 128                                  # halo for the +/-(Wp+1) tap shifts
  assert PAD >= Wp + 1
  L = N * Lpad

  # --- F.pad(x2, ...) exactly as written in the PyTorch forward (including its
  #     diffX/diffY naming swap: diffX from dim 2 pads W, diffY from dim 3 pads H)
  diffX = H - H2
  diffY = W - W2
  # TODO(synk): negative diffs (cropping) not handled; test shapes give 0 pad.
  x2 = jnp.pad(x2, ((0, 0), (0, 0),
                    (diffY // 2, int(diffY / 2)),
                    (diffX // 2, int(diffX / 2))))
  # conv zero border, flatten spatial, pad lanes to Lpad  -> (N, C2, Lpad)
  x2p = jnp.pad(x2, ((0, 0), (0, 0), (1, 1), (1, 1))).reshape(N, C2, Hp * Wp)
  x2pf = jnp.pad(x2p, ((0, 0), (0, 0), (0, Lpad - Hp * Wp))).astype(jnp.bfloat16)

  # deep feature: pure reshape, (image,channel) stacked in sublanes so the
  # whole-batch upsample is ONE MXU matmul; bf16 for the MXU.
  x1f = x1.reshape(N * C1, S1).astype(jnp.bfloat16)

  # combined bilinear-upsample + scatter-to-padded-flat matrix (S1, Lpad):
  #   up_padded[c, (i+1)*Wp+(j+1)] = sum_s x1_flat[c, s] * T[s, .]
  K = jnp.kron(_bilinear_matrix(H1), _bilinear_matrix(W1))     # (HW, S1)
  T = jnp.zeros((S1, Hp, Wp), jnp.float32)
  T = T.at[:, 1:H + 1, 1:W + 1].set(K.T.reshape(S1, H, W))
  upmat = jnp.pad(T.reshape(S1, Hp * Wp),
                  ((0, 0), (0, Lpad - Hp * Wp))).astype(jnp.bfloat16)

  # interior-selection matrix (Lpad, HW) and interior mask (1, N*Lpad)
  rows = ((jnp.arange(H) + 1)[:, None] * Wp
          + (jnp.arange(W) + 1)[None, :]).reshape(-1)           # (HW,)
  sel = jax.nn.one_hot(rows, Lpad, dtype=jnp.float32).T          # (Lpad, HW)
  m_img = jnp.zeros((Hp, Wp), jnp.float32).at[1:H + 1, 1:W + 1].set(1.0)
  m_img = jnp.pad(m_img.reshape(Hp * Wp), (0, Lpad - Hp * Wp))
  mask = jnp.tile(m_img, (N,)).reshape(1, L)

  # torch conv weights (CO, CIN, 3, 3) -> per-tap (9, CO, CIN), bf16.
  # concat order in the forward is [x2, x1], matching xcat rows [0:C2, C2:CIN].
  w1 = jnp.transpose(params["w1"], (2, 3, 0, 1)).reshape(9, CO, CIN)
  w2 = jnp.transpose(params["w2"], (2, 3, 0, 1)).reshape(9, CO, CO)
  w1 = w1.astype(jnp.bfloat16)
  w2 = w2.astype(jnp.bfloat16)
  b1 = params["b1"].reshape(CO, 1)
  g1 = params["g1"].reshape(CO, 1)
  be1 = params["be1"].reshape(CO, 1)
  b2 = params["b2"].reshape(CO, 1)
  g2 = params["g2"].reshape(CO, 1)
  be2 = params["be2"].reshape(CO, 1)

  kernel = functools.partial(_up_double_conv_kernel,
                             N=N, Wp=Wp, Lpad=Lpad, HW=HW,
                             C1=C1, C2=C2, CO=CO, PAD=PAD)
  vmem = pl.BlockSpec(memory_space=pltpu.MemorySpace.VMEM)
  # Problem sizes are tiny and BatchNorm couples the whole batch, so the kernel
  # runs as a single invocation with full-array VMEM blocks (<1 MiB resident).
  # TODO(synk): at real UNet sizes add a spatial grid (parallel dims for the
  # v7x megacore) and re-derive VMEM tiling; BN then needs a two-pass reduction.
  out_flat = pl.pallas_call(
      kernel,
      out_shape=jax.ShapeDtypeStruct((N, CO, HW), jnp.float32),
      in_specs=[vmem] * 13,
      out_specs=vmem,
      scratch_shapes=[
          pltpu.VMEM((CIN, PAD + L + PAD), jnp.bfloat16),  # concat([x2, up(x1)])
          pltpu.VMEM((CO, PAD + L + PAD), jnp.bfloat16),   # hidden (conv2 input)
      ],
  )(x1f, x2pf, upmat, sel, mask, w1, b1, g1, be1, w2, b2, g2, be2)

  return out_flat.reshape(N, CO, H, W)       # pure reshape, no transpose


@jax.jit
def _reference(params, x1, x2):
  """Pure-JAX f32 reference of the PyTorch forward (for a parity check)."""
  N, C1, H1, W1 = x1.shape
  _, C2, H2, W2 = x2.shape
  H, W = 2 * H1, 2 * W1
  hi = jax.lax.Precision.HIGHEST
  Uh, Uw = _bilinear_matrix(H1), _bilinear_matrix(W1)
  x1u = jnp.einsum("hp,wq,ncpq->nchw", Uh, Uw, x1, precision=hi)
  diffX, diffY = H - H2, W - W2
  x2p = jnp.pad(x2, ((0, 0), (0, 0),
                     (diffY // 2, int(diffY / 2)),
                     (diffX // 2, int(diffX / 2))))
  x = jnp.concatenate([x2p, x1u], axis=1)

  def conv_bn_relu(x, w, b, g, be):
    y = jax.lax.conv_general_dilated(
        x, w, (1, 1), ((1, 1), (1, 1)),
        dimension_numbers=("NCHW", "OIHW", "NCHW"),
        precision=hi) + b.reshape(1, -1, 1, 1)
    mu = jnp.mean(y, axis=(0, 2, 3), keepdims=True)
    var = jnp.mean(jnp.square(y - mu), axis=(0, 2, 3), keepdims=True)
    y = (y - mu) * jax.lax.rsqrt(var + EPS) * g.reshape(1, -1, 1, 1) \
        + be.reshape(1, -1, 1, 1)
    return jnp.maximum(y, 0.0)

  x = conv_bn_relu(x, params["w1"], params["b1"], params["g1"], params["be1"])
  x = conv_bn_relu(x, params["w2"], params["b2"], params["g2"], params["be2"])
  return x


if __name__ == "__main__":
  key = jax.random.PRNGKey(0)
  kx1, kx2, kp = jax.random.split(key, 3)

  N, in_ch, out_ch = 2, 8, 4
  C1 = in_ch // 2          # channels of the deep feature x1
  C2 = in_ch - C1          # channels of the skip feature x2
  H1 = W1 = 8              # x1 spatial; x2 is 2x -> 16x16

  x1 = jax.random.normal(kx1, (N, C1, H1, W1), jnp.float32)          # NCHW
  x2 = jax.random.normal(kx2, (N, C2, 2 * H1, 2 * W1), jnp.float32)  # NCHW
  params = init_params(kp, in_ch, out_ch)

  out = jax.block_until_ready(up_forward(params, x1, x2))
  assert out.shape == (N, out_ch, 2 * H1, 2 * W1), out.shape
  assert bool(jnp.all(jnp.isfinite(out)))

  ref = jax.block_until_ready(_reference(params, x1, x2))
  err = float(jnp.max(jnp.abs(out - ref)))
  assert err < 0.15, f"max abs err vs f32 reference: {err}"  # bf16 MXU tolerance

  print("KERNEL_OK")
</pallas_src>

<mosaic_0001>
module attributes {stable_mosaic.version = 11 : i64} {
  func.func @_up_double_conv_kernel(%arg0: memref<8x64xbf16, #tpu.memory_space<vmem>>, %arg1: memref<2x4x384xbf16, #tpu.memory_space<vmem>>, %arg2: memref<64x384xbf16, #tpu.memory_space<vmem>>, %arg3: memref<384x256xf32, #tpu.memory_space<vmem>>, %arg4: memref<1x768xf32, #tpu.memory_space<vmem>>, %arg5: memref<9x4x8xbf16, #tpu.memory_space<vmem>>, %arg6: memref<4x1xf32, #tpu.memory_space<vmem>>, %arg7: memref<4x1xf32, #tpu.memory_space<vmem>>, %arg8: memref<4x1xf32, #tpu.memory_space<vmem>>, %arg9: memref<9x4x4xbf16, #tpu.memory_space<vmem>>, %arg10: memref<4x1xf32, #tpu.memory_space<vmem>>, %arg11: memref<4x1xf32, #tpu.memory_space<vmem>>, %arg12: memref<4x1xf32, #tpu.memory_space<vmem>>, %arg13: memref<2x4x256xf32, #tpu.memory_space<vmem>>, %arg14: memref<8x1024xbf16, #tpu.memory_space<vmem>>, %arg15: memref<4x1024xbf16, #tpu.memory_space<vmem>>) attributes {dimension_semantics = [], scalar_prefetch = 0 : i64, scratch_operands = 2 : i64, tpu.core_type = #tpu.core_type<tc>} {
    %cst = arith.constant 0.000000e+00 : bf16
    %0 = vector.broadcast %cst : bf16 to vector<8x128xbf16>
    %c0 = arith.constant 0 : index
    %c0_0 = arith.constant 0 : index
    %1 = vector.load %arg14[%c0, %c0_0] : memref<8x1024xbf16, #tpu.memory_space<vmem>>, vector<8x128xbf16>
    tpu.vector_store %arg14[%c0, %c0_0], %0 {strides = array<i32>} : memref<8x1024xbf16, #tpu.memory_space<vmem>>, vector<8x128xbf16>,
    %cst_1 = arith.constant 0.000000e+00 : bf16
    %2 = vector.broadcast %cst_1 : bf16 to vector<8x128xbf16>
    %c0_2 = arith.constant 0 : index
    %c896 = arith.constant 896 : index
    %3 = vector.load %arg14[%c0_2, %c896] : memref<8x1024xbf16, #tpu.memory_space<vmem>>, vector<8x128xbf16>
    tpu.vector_store %arg14[%c0_2, %c896], %2 {strides = array<i32>} : memref<8x1024xbf16, #tpu.memory_space<vmem>>, vector<8x128xbf16>,
    %cst_3 = arith.constant 0.000000e+00 : bf16
    %4 = vector.broadcast %cst_3 : bf16 to vector<4x128xbf16>
    %c0_4 = arith.constant 0 : index
    %c0_5 = arith.constant 0 : index
    %5 = vector.load %arg15[%c0_4, %c0_5] : memref<4x1024xbf16, #tpu.memory_space<vmem>>, vector<4x128xbf16>
    tpu.vector_store %arg15[%c0_4, %c0_5], %4 {strides = array<i32>} : memref<4x1024xbf16, #tpu.memory_space<vmem>>, vector<4x128xbf16>,
    %cst_6 = arith.constant 0.000000e+00 : bf16
    %6 = vector.broadcast %cst_6 : bf16 to vector<4x128xbf16>
    %c0_7 = arith.constant 0 : index
    %c896_8 = arith.constant 896 : index
    %7 = vector.load %arg15[%c0_7, %c896_8] : memref<4x1024xbf16, #tpu.memory_space<vmem>>, vector<4x128xbf16>
    tpu.vector_store %arg15[%c0_7, %c896_8], %6 {strides = array<i32>} : memref<4x1024xbf16, #tpu.memory_space<vmem>>, vector<4x128xbf16>,
    %c0_9 = arith.constant 0 : index
    %c0_10 = arith.constant 0 : index
    %8 = vector.load %arg0[%c0_9, %c0_10] : memref<8x64xbf16, #tpu.memory_space<vmem>>, vector<8x64xbf16>
    %c0_11 = arith.constant 0 : index
    %c0_12 = arith.constant 0 : index
    %9 = vector.load %arg2[%c0_11, %c0_12] : memref<64x384xbf16, #tpu.memory_space<vmem>>, vector<64x384xbf16>
    %cst_13 = arith.constant dense<0.000000e+00> : vector<8x384xf32>
    %10 = tpu.matmul %8, %9, %cst_13 {dimension_numbers = #tpu.dot_dimension_numbers<[1], [0], [0], [1], [0, 0, 1, 1], [], []>} : vector<8x64xbf16>, vector<64x384xbf16>, vector<8x384xf32> -> vector<8x384xf32>
    %11 = arith.truncf %10 : vector<8x384xf32> to vector<8x384xbf16>
    %c0_14 = arith.constant 0 : index
    %c0_15 = arith.constant 0 : index
    %c0_16 = arith.constant 0 : index
    %12 = vector.load %arg1[%c0_14, %c0_15, %c0_16] : memref<2x4x384xbf16, #tpu.memory_space<vmem>>, vector<1x4x384xbf16>
    %13 = vector.shape_cast %12 : vector<1x4x384xbf16> to vector<4x384xbf16>
    %c0_17 = arith.constant 0 : index
    %c128 = arith.constant 128 : index
    %14 = vector.load %arg14[%c0_17, %c128] : memref<8x1024xbf16, #tpu.memory_space<vmem>>, vector<4x384xbf16>
    tpu.vector_store %arg14[%c0_17, %c128], %13 {strides = array<i32>} : memref<8x1024xbf16, #tpu.memory_space<vmem>>, vector<4x384xbf16>,
    %15 = vector.extract_strided_slice %11 {offsets = [0, 0], sizes = [4, 384], strides = [1, 1]} : vector<8x384xbf16> to vector<4x384xbf16>
    %c4 = arith.constant 4 : index
    %c128_18 = arith.constant 128 : index
    %16 = vector.load %arg14[%c4, %c128_18] : memref<8x1024xbf16, #tpu.memory_space<vmem>>, vector<4x384xbf16>
    tpu.vector_store %arg14[%c4, %c128_18], %15 {strides = array<i32>} : memref<8x1024xbf16, #tpu.memory_space<vmem>>, vector<4x384xbf16>,
    %c1 = arith.constant 1 : index
    %c0_19 = arith.constant 0 : index
    %c0_20 = arith.constant 0 : index
    %17 = vector.load %arg1[%c1, %c0_19, %c0_20] : memref<2x4x384xbf16, #tpu.memory_space<vmem>>, vector<1x4x384xbf16>
    %18 = vector.shape_cast %17 : vector<1x4x384xbf16> to vector<4x384xbf16>
    %c0_21 = arith.constant 0 : index
    %c512 = arith.constant 512 : index
    %19 = vector.load %arg14[%c0_21, %c512] : memref<8x1024xbf16, #tpu.memory_space<vmem>>, vector<4x384xbf16>
    tpu.vector_store %arg14[%c0_21, %c512], %18 {strides = array<i32>} : memref<8x1024xbf16, #tpu.memory_space<vmem>>, vector<4x384xbf16>,
    %20 = vector.extract_strided_slice %11 {offsets = [4, 0], sizes = [4, 384], strides = [1, 1]} : vector<8x384xbf16> to vector<4x384xbf16>
    %c4_22 = arith.constant 4 : index
    %c512_23 = arith.constant 512 : index
    %21 = vector.load %arg14[%c4_22, %c512_23] : memref<8x1024xbf16, #tpu.memory_space<vmem>>, vector<4x384xbf16>
    tpu.vector_store %arg14[%c4_22, %c512_23], %20 {strides = array<i32>} : memref<8x1024xbf16, #tpu.memory_space<vmem>>, vector<4x384xbf16>,
    %c0_24 = arith.constant 0 : index
    %c0_25 = arith.constant 0 : index
    %22 = vector.load %arg6[%c0_24, %c0_25] : memref<4x1xf32, #tpu.memory_space<vmem>>, vector<4x1xf32>
    %23 = vector.shape_cast %22 : vector<4x1xf32> to vector<4x1xf32>
    %24 = vector.broadcast %23 : vector<4x1xf32> to vector<4x768xf32>
    %c0_26 = arith.constant 0 : index
    %c109 = arith.constant 109 : index
    %25 = vector.load %arg14[%c0_26, %c109] : memref<8x1024xbf16, #tpu.memory_space<vmem>>, vector<8x768xbf16>
    %c0_27 = arith.constant 0 : index
    %c0_28 = arith.constant 0 : index
    %c0_29 = arith.constant 0 : index
    %26 = vector.load %arg5[%c0_27, %c0_28, %c0_29] : memref<9x4x8xbf16, #tpu.memory_space<vmem>>, vector<1x4x8xbf16>
    %27 = vector.shape_cast %26 : vector<1x4x8xbf16> to vector<4x8xbf16>
    %cst_30 = arith.constant dense<0.000000e+00> : vector<4x768xf32>
    %28 = tpu.matmul %27, %25, %cst_30 {dimension_numbers = #tpu.dot_dimension_numbers<[1], [0], [0], [1], [0, 0, 1, 1], [], []>} : vector<4x8xbf16>, vector<8x768xbf16>, vector<4x768xf32> -> vector<4x768xf32>
    %29 = arith.addf %24, %28 : vector<4x768xf32>
    %c0_31 = arith.constant 0 : index
    %c110 = arith.constant 110 : index
    %30 = vector.load %arg14[%c0_31, %c110] : memref<8x1024xbf16, #tpu.memory_space<vmem>>, vector<8x768xbf16>
    %c1_32 = arith.constant 1 : index
    %c0_33 = arith.constant 0 : index
    %c0_34 = arith.constant 0 : index
    %31 = vector.load %arg5[%c1_32, %c0_33, %c0_34] : memref<9x4x8xbf16, #tpu.memory_space<vmem>>, vector<1x4x8xbf16>
    %32 = vector.shape_cast %31 : vector<1x4x8xbf16> to vector<4x8xbf16>
    %cst_35 = arith.constant dense<0.000000e+00> : vector<4x768xf32>
    %33 = tpu.matmul %32, %30, %cst_35 {dimension_numbers = #tpu.dot_dimension_numbers<[1], [0], [0], [1], [0, 0, 1, 1], [], []>} : vector<4x8xbf16>, vector<8x768xbf16>, vector<4x768xf32> -> vector<4x768xf32>
    %34 = arith.addf %29, %33 : vector<4x768xf32>
    %c0_36 = arith.constant 0 : index
    %c111 = arith.constant 111 : index
    %35 = vector.load %arg14[%c0_36, %c111] : memref<8x1024xbf16, #tpu.memory_space<vmem>>, vector<8x768xbf16>
    %c2 = arith.constant 2 : index
    %c0_37 = arith.constant 0 : index
    %c0_38 = arith.constant 0 : index
    %36 = vector.load %arg5[%c2, %c0_37, %c0_38] : memref<9x4x8xbf16, #tpu.memory_space<vmem>>, vector<1x4x8xbf16>
    %37 = vector.shape_cast %36 : vector<1x4x8xbf16> to vector<4x8xbf16>
    %cst_39 = arith.constant dense<0.000000e+00> : vector<4x768xf32>
    %38 = tpu.matmul %37, %35, %cst_39 {dimension_numbers = #tpu.dot_dimension_numbers<[1], [0], [0], [1], [0, 0, 1, 1], [], []>} : vector<4x8xbf16>, vector<8x768xbf16>, vector<4x768xf32> -> vector<4x768xf32>
    %39 = arith.addf %34, %38 : vector<4x768xf32>
    %c0_40 = arith.constant 0 : index
    %c127 = arith.constant 127 : index
    %40 = vector.load %arg14[%c0_40, %c127] : memref<8x1024xbf16, #tpu.memory_space<vmem>>, vector<8x768xbf16>
    %c3 = arith.constant 3 : index
    %c0_41 = arith.constant 0 : index
    %c0_42 = arith.constant 0 : index
    %41 = vector.load %arg5[%c3, %c0_41, %c0_42] : memref<9x4x8xbf16, #tpu.memory_space<vmem>>, vector<1x4x8xbf16>
    %42 = vector.shape_cast %41 : vector<1x4x8xbf16> to vector<4x8xbf16>
    %cst_43 = arith.constant dense<0.000000e+00> : vector<4x768xf32>
    %43 = tpu.matmul %42, %40, %cst_43 {dimension_numbers = #tpu.dot_dimension_numbers<[1], [0], [0], [1], [0, 0, 1, 1], [], []>} : vector<4x8xbf16>, vector<8x768xbf16>, vector<4x768xf32> -> vector<4x768xf32>
    %44 = arith.addf %39, %43 : vector<4x768xf32>
    %c0_44 = arith.constant 0 : index
    %c128_45 = arith.constant 128 : index
    %45 = vector.load %arg14[%c0_44, %c128_45] : memref<8x1024xbf16, #tpu.memory_space<vmem>>, vector<8x768xbf16>
    %c4_46 = arith.constant 4 : index
    %c0_47 = arith.constant 0 : index
    %c0_48 = arith.constant 0 : index
    %46 = vector.load %arg5[%c4_46, %c0_47, %c0_48] : memref<9x4x8xbf16, #tpu.memory_space<vmem>>, vector<1x4x8xbf16>
    %47 = vector.shape_cast %46 : vector<1x4x8xbf16> to vector<4x8xbf16>
    %cst_49 = arith.constant dense<0.000000e+00> : vector<4x768xf32>
    %48 = tpu.matmul %47, %45, %cst_49 {dimension_numbers = #tpu.dot_dimension_numbers<[1], [0], [0], [1], [0, 0, 1, 1], [], []>} : vector<4x8xbf16>, vector<8x768xbf16>, vector<4x768xf32> -> vector<4x768xf32>
    %49 = arith.addf %44, %48 : vector<4x768xf32>
    %c0_50 = arith.constant 0 : index
    %c129 = arith.constant 129 : index
    %50 = vector.load %arg14[%c0_50, %c129] : memref<8x1024xbf16, #tpu.memory_space<vmem>>, vector<8x768xbf16>
    %c5 = arith.constant 5 : index
    %c0_51 = arith.constant 0 : index
    %c0_52 = arith.constant 0 : index
    %51 = vector.load %arg5[%c5, %c0_51, %c0_52] : memref<9x4x8xbf16, #tpu.memory_space<vmem>>, vector<1x4x8xbf16>
    %52 = vector.shape_cast %51 : vector<1x4x8xbf16> to vector<4x8xbf16>
    %cst_53 = arith.constant dense<0.000000e+00> : vector<4x768xf32>
    %53 = tpu.matmul %52, %50, %cst_53 {dimension_numbers = #tpu.dot_dimension_numbers<[1], [0], [0], [1], [0, 0, 1, 1], [], []>} : vector<4x8xbf16>, vector<8x768xbf16>, vector<4x768xf32> -> vector<4x768xf32>
    %54 = arith.addf %49, %53 : vector<4x768xf32>
    %c0_54 = arith.constant 0 : index
    %c145 = arith.constant 145 : index
    %55 = vector.load %arg14[%c0_54, %c145] : memref<8x1024xbf16, #tpu.memory_space<vmem>>, vector<8x768xbf16>
    %c6 = arith.constant 6 : index
    %c0_55 = arith.constant 0 : index
    %c0_56 = arith.constant 0 : index
    %56 = vector.load %arg5[%c6, %c0_55, %c0_56] : memref<9x4x8xbf16, #tpu.memory_space<vmem>>, vector<1x4x8xbf16>
    %57 = vector.shape_cast %56 : vector<1x4x8xbf16> to vector<4x8xbf16>
    %cst_57 = arith.constant dense<0.000000e+00> : vector<4x768xf32>
    %58 = tpu.matmul %57, %55, %cst_57 {dimension_numbers = #tpu.dot_dimension_numbers<[1], [0], [0], [1], [0, 0, 1, 1], [], []>} : vector<4x8xbf16>, vector<8x768xbf16>, vector<4x768xf32> -> vector<4x768xf32>
    %59 = arith.addf %54, %58 : vector<4x768xf32>
    %c0_58 = arith.constant 0 : index
    %c146 = arith.constant 146 : index
    %60 = vector.load %arg14[%c0_58, %c146] : memref<8x1024xbf16, #tpu.memory_space<vmem>>, vector<8x768xbf16>
    %c7 = arith.constant 7 : index
    %c0_59 = arith.constant 0 : index
    %c0_60 = arith.constant 0 : index
    %61 = vector.load %arg5[%c7, %c0_59, %c0_60] : memref<9x4x8xbf16, #tpu.memory_space<vmem>>, vector<1x4x8xbf16>
    %62 = vector.shape_cast %61 : vector<1x4x8xbf16> to vector<4x8xbf16>
    %cst_61 = arith.constant dense<0.000000e+00> : vector<4x768xf32>
    %63 = tpu.matmul %62, %60, %cst_61 {dimension_numbers = #tpu.dot_dimension_numbers<[1], [0], [0], [1], [0, 0, 1, 1], [], []>} : vector<4x8xbf16>, vector<8x768xbf16>, vector<4x768xf32> -> vector<4x768xf32>
    %64 = arith.addf %59, %63 : vector<4x768xf32>
    %c0_62 = arith.constant 0 : index
    %c147 = arith.constant 147 : index
    %65 = vector.load %arg14[%c0_62, %c147] : memref<8x1024xbf16, #tpu.memory_space<vmem>>, vector<8x768xbf16>
    %c8 = arith.constant 8 : index
    %c0_63 = arith.constant 0 : index
    %c0_64 = arith.constant 0 : index
    %66 = vector.load %arg5[%c8, %c0_63, %c0_64] : memref<9x4x8xbf16, #tpu.memory_space<vmem>>, vector<1x4x8xbf16>
    %67 = vector.shape_cast %66 : vector<1x4x8xbf16> to vector<4x8xbf16>
    %cst_65 = arith.constant dense<0.000000e+00> : vector<4x768xf32>
    %68 = tpu.matmul %67, %65, %cst_65 {dimension_numbers = #tpu.dot_dimension_numbers<[1], [0], [0], [1], [0, 0, 1, 1], [], []>} : vector<4x8xbf16>, vector<8x768xbf16>, vector<4x768xf32> -> vector<4x768xf32>
    %69 = arith.addf %64, %68 : vector<4x768xf32>
    %c0_66 = arith.constant 0 : index
    %c0_67 = arith.constant 0 : index
    %70 = vector.load %arg4[%c0_66, %c0_67] : memref<1x768xf32, #tpu.memory_space<vmem>>, vector<1x768xf32>
    %71 = vector.broadcast %70 : vector<1x768xf32> to vector<4x768xf32>
    %72 = arith.mulf %69, %71 : vector<4x768xf32>
    %cst_68 = arith.constant dense<0.000000e+00> : vector<4xf32>
    %73 = vector.multi_reduction <add>, %72, %cst_68 [1] : vector<4x768xf32> to vector<4xf32>
    %74 = vector.shape_cast %73 : vector<4xf32> to vector<4x1xf32>
    %cst_69 = arith.constant 0.001953125 : f32
    %75 = vector.broadcast %cst_69 : f32 to vector<4x1xf32>
    %76 = arith.mulf %74, %75 : vector<4x1xf32>
    %77 = vector.broadcast %76 : vector<4x1xf32> to vector<4x768xf32>
    %78 = arith.subf %69, %77 : vector<4x768xf32>
    %79 = arith.mulf %78, %78 : vector<4x768xf32>
    %80 = vector.broadcast %70 : vector<1x768xf32> to vector<4x768xf32>
    %81 = arith.mulf %79, %80 : vector<4x768xf32>
    %cst_70 = arith.constant dense<0.000000e+00> : vector<4xf32>
    %82 = vector.multi_reduction <add>, %81, %cst_70 [1] : vector<4x768xf32> to vector<4xf32>
    %83 = vector.shape_cast %82 : vector<4xf32> to vector<4x1xf32>
    %cst_71 = arith.constant 0.001953125 : f32
    %84 = vector.broadcast %cst_71 : f32 to vector<4x1xf32>
    %85 = arith.mulf %83, %84 : vector<4x1xf32>
    %86 = vector.broadcast %76 : vector<4x1xf32> to vector<4x768xf32>
    %87 = arith.subf %69, %86 : vector<4x768xf32>
    %cst_72 = arith.constant 9.99999974E-6 : f32
    %88 = vector.broadcast %cst_72 : f32 to vector<4x1xf32>
    %89 = arith.addf %85, %88 : vector<4x1xf32>
    %90 = math.rsqrt %89 : vector<4x1xf32>
    %91 = vector.broadcast %90 : vector<4x1xf32> to vector<4x768xf32>
    %92 = arith.mulf %87, %91 : vector<4x768xf32>
    %c0_73 = arith.constant 0 : index
    %c0_74 = arith.constant 0 : index
    %93 = vector.load %arg7[%c0_73, %c0_74] : memref<4x1xf32, #tpu.memory_space<vmem>>, vector<4x1xf32>
    %94 = vector.broadcast %93 : vector<4x1xf32> to vector<4x768xf32>
    %95 = arith.mulf %92, %94 : vector<4x768xf32>
    %c0_75 = arith.constant 0 : index
    %c0_76 = arith.constant 0 : index
    %96 = vector.load %arg8[%c0_75, %c0_76] : memref<4x1xf32, #tpu.memory_space<vmem>>, vector<4x1xf32>
    %97 = vector.broadcast %96 : vector<4x1xf32> to vector<4x768xf32>
    %98 = arith.addf %95, %97 : vector<4x768xf32>
    %cst_77 = arith.constant 0.000000e+00 : f32
    %99 = vector.broadcast %cst_77 : f32 to vector<4x768xf32>
    %100 = arith.maximumf %98, %99 : vector<4x768xf32>
    %101 = vector.broadcast %70 : vector<1x768xf32> to vector<4x768xf32>
    %102 = arith.mulf %100, %101 : vector<4x768xf32>
    %103 = arith.truncf %102 : vector<4x768xf32> to vector<4x768xbf16>
    %c0_78 = arith.constant 0 : index
    %c128_79 = arith.constant 128 : index
    %104 = vector.load %arg15[%c0_78, %c128_79] : memref<4x1024xbf16, #tpu.memory_space<vmem>>, vector<4x768xbf16>
    tpu.vector_store %arg15[%c0_78, %c128_79], %103 {strides = array<i32>} : memref<4x1024xbf16, #tpu.memory_space<vmem>>, vector<4x768xbf16>,
    %c0_80 = arith.constant 0 : index
    %c0_81 = arith.constant 0 : index
    %105 = vector.load %arg10[%c0_80, %c0_81] : memref<4x1xf32, #tpu.memory_space<vmem>>, vector<4x1xf32>
    %106 = vector.shape_cast %105 : vector<4x1xf32> to vector<4x1xf32>
    %107 = vector.broadcast %106 : vector<4x1xf32> to vector<4x768xf32>
    %c0_82 = arith.constant 0 : index
    %c109_83 = arith.constant 109 : index
    %108 = vector.load %arg15[%c0_82, %c109_83] : memref<4x1024xbf16, #tpu.memory_space<vmem>>, vector<4x768xbf16>
    %c0_84 = arith.constant 0 : index
    %c0_85 = arith.constant 0 : index
    %c0_86 = arith.constant 0 : index
    %109 = vector.load %arg9[%c0_84, %c0_85, %c0_86] : memref<9x4x4xbf16, #tpu.memory_space<vmem>>, vector<1x4x4xbf16>
    %110 = vector.shape_cast %109 : vector<1x4x4xbf16> to vector<4x4xbf16>
    %cst_87 = arith.constant dense<0.000000e+00> : vector<4x768xf32>
    %111 = tpu.matmul %110, %108, %cst_87 {dimension_numbers = #tpu.dot_dimension_numbers<[1], [0], [0], [1], [0, 0, 1, 1], [], []>} : vector<4x4xbf16>, vector<4x768xbf16>, vector<4x768xf32> -> vector<4x768xf32>
    %112 = arith.addf %107, %111 : vector<4x768xf32>
    %c0_88 = arith.constant 0 : index
    %c110_89 = arith.constant 110 : index
    %113 = vector.load %arg15[%c0_88, %c110_89] : memref<4x1024xbf16, #tpu.memory_space<vmem>>, vector<4x768xbf16>
    %c1_90 = arith.constant 1 : index
    %c0_91 = arith.constant 0 : index
    %c0_92 = arith.constant 0 : index
    %114 = vector.load %arg9[%c1_90, %c0_91, %c0_92] : memref<9x4x4xbf16, #tpu.memory_space<vmem>>, vector<1x4x4xbf16>
    %115 = vector.shape_cast %114 : vector<1x4x4xbf16> to vector<4x4xbf16>
    %cst_93 = arith.constant dense<0.000000e+00> : vector<4x768xf32>
    %116 = tpu.matmul %115, %113, %cst_93 {dimension_numbers = #tpu.dot_dimension_numbers<[1], [0], [0], [1], [0, 0, 1, 1], [], []>} : vector<4x4xbf16>, vector<4x768xbf16>, vector<4x768xf32> -> vector<4x768xf32>
    %117 = arith.addf %112, %116 : vector<4x768xf32>
    %c0_94 = arith.constant 0 : index
    %c111_95 = arith.constant 111 : index
    %118 = vector.load %arg15[%c0_94, %c111_95] : memref<4x1024xbf16, #tpu.memory_space<vmem>>, vector<4x768xbf16>
    %c2_96 = arith.constant 2 : index
    %c0_97 = arith.constant 0 : index
    %c0_98 = arith.constant 0 : index
    %119 = vector.load %arg9[%c2_96, %c0_97, %c0_98] : memref<9x4x4xbf16, #tpu.memory_space<vmem>>, vector<1x4x4xbf16>
    %120 = vector.shape_cast %119 : vector<1x4x4xbf16> to vector<4x4xbf16>
    %cst_99 = arith.constant dense<0.000000e+00> : vector<4x768xf32>
    %121 = tpu.matmul %120, %118, %cst_99 {dimension_numbers = #tpu.dot_dimension_numbers<[1], [0], [0], [1], [0, 0, 1, 1], [], []>} : vector<4x4xbf16>, vector<4x768xbf16>, vector<4x768xf32> -> vector<4x768xf32>
    %122 = arith.addf %117, %121 : vector<4x768xf32>
    %c0_100 = arith.constant 0 : index
    %c127_101 = arith.constant 127 : index
    %123 = vector.load %arg15[%c0_100, %c127_101] : memref<4x1024xbf16, #tpu.memory_space<vmem>>, vector<4x768xbf16>
    %c3_102 = arith.constant 3 : index
    %c0_103 = arith.constant 0 : index
    %c0_104 = arith.constant 0 : index
    %124 = vector.load %arg9[%c3_102, %c0_103, %c0_104] : memref<9x4x4xbf16, #tpu.memory_space<vmem>>, vector<1x4x4xbf16>
    %125 = vector.shape_cast %124 : vector<1x4x4xbf16> to vector<4x4xbf16>
    %cst_105 = arith.constant dense<0.000000e+00> : vector<4x768xf32>
    %126 = tpu.matmul %125, %123, %cst_105 {dimension_numbers = #tpu.dot_dimension_numbers<[1], [0], [0], [1], [0, 0, 1, 1], [], []>} : vector<4x4xbf16>, vector<4x768xbf16>, vector<4x768xf32> -> vector<4x768xf32>
    %127 = arith.addf %122, %126 : vector<4x768xf32>
    %c0_106 = arith.constant 0 : index
    %c128_107 = arith.constant 128 : index
    %128 = vector.load %arg15[%c0_106, %c128_107] : memref<4x1024xbf16, #tpu.memory_space<vmem>>, vector<4x768xbf16>
    %c4_108 = arith.constant 4 : index
    %c0_109 = arith.constant 0 : index
    %c0_110 = arith.constant 0 : index
    %129 = vector.load %arg9[%c4_108, %c0_109, %c0_110] : memref<9x4x4xbf16, #tpu.memory_space<vmem>>, vector<1x4x4xbf16>
    %130 = vector.shape_cast %129 : vector<1x4x4xbf16> to vector<4x4xbf16>
    %cst_111 = arith.constant dense<0.000000e+00> : vector<4x768xf32>
    %131 = tpu.matmul %130, %128, %cst_111 {dimension_numbers = #tpu.dot_dimension_numbers<[1], [0], [0], [1], [0, 0, 1, 1], [], []>} : vector<4x4xbf16>, vector<4x768xbf16>, vector<4x768xf32> -> vector<4x768xf32>
    %132 = arith.addf %127, %131 : vector<4x768xf32>
    %c0_112 = arith.constant 0 : index
    %c129_113 = arith.constant 129 : index
    %133 = vector.load %arg15[%c0_112, %c129_113] : memref<4x1024xbf16, #tpu.memory_space<vmem>>, vector<4x768xbf16>
    %c5_114 = arith.constant 5 : index
    %c0_115 = arith.constant 0 : index
    %c0_116 = arith.constant 0 : index
    %134 = vector.load %arg9[%c5_114, %c0_115, %c0_116] : memref<9x4x4xbf16, #tpu.memory_space<vmem>>, vector<1x4x4xbf16>
    %135 = vector.shape_cast %134 : vector<1x4x4xbf16> to vector<4x4xbf16>
    %cst_117 = arith.constant dense<0.000000e+00> : vector<4x768xf32>
    %136 = tpu.matmul %135, %133, %cst_117 {dimension_numbers = #tpu.dot_dimension_numbers<[1], [0], [0], [1], [0, 0, 1, 1], [], []>} : vector<4x4xbf16>, vector<4x768xbf16>, vector<4x768xf32> -> vector<4x768xf32>
    %137 = arith.addf %132, %136 : vector<4x768xf32>
    %c0_118 = arith.constant 0 : index
    %c145_119 = arith.constant 145 : index
    %138 = vector.load %arg15[%c0_118, %c145_119] : memref<4x1024xbf16, #tpu.memory_space<vmem>>, vector<4x768xbf16>
    %c6_120 = arith.constant 6 : index
    %c0_121 = arith.constant 0 : index
    %c0_122 = arith.constant 0 : index
    %139 = vector.load %arg9[%c6_120, %c0_121, %c0_122] : memref<9x4x4xbf16, #tpu.memory_space<vmem>>, vector<1x4x4xbf16>
    %140 = vector.shape_cast %139 : vector<1x4x4xbf16> to vector<4x4xbf16>
    %cst_123 = arith.constant dense<0.000000e+00> : vector<4x768xf32>
    %141 = tpu.matmul %140, %138, %cst_123 {dimension_numbers = #tpu.dot_dimension_numbers<[1], [0], [0], [1], [0, 0, 1, 1], [], []>} : vector<4x4xbf16>, vector<4x768xbf16>, vector<4x768xf32> -> vector<4x768xf32>
    %142 = arith.addf %137, %141 : vector<4x768xf32>
    %c0_124 = arith.constant 0 : index
    %c146_125 = arith.constant 146 : index
    %143 = vector.load %arg15[%c0_124, %c146_125] : memref<4x1024xbf16, #tpu.memory_space<vmem>>, vector<4x768xbf16>
    %c7_126 = arith.constant 7 : index
    %c0_127 = arith.constant 0 : index
    %c0_128 = arith.constant 0 : index
    %144 = vector.load %arg9[%c7_126, %c0_127, %c0_128] : memref<9x4x4xbf16, #tpu.memory_space<vmem>>, vector<1x4x4xbf16>
    %145 = vector.shape_cast %144 : vector<1x4x4xbf16> to vector<4x4xbf16>
    %cst_129 = arith.constant dense<0.000000e+00> : vector<4x768xf32>
    %146 = tpu.matmul %145, %143, %cst_129 {dimension_numbers = #tpu.dot_dimension_numbers<[1], [0], [0], [1], [0, 0, 1, 1], [], []>} : vector<4x4xbf16>, vector<4x768xbf16>, vector<4x768xf32> -> vector<4x768xf32>
    %147 = arith.addf %142, %146 : vector<4x768xf32>
    %c0_130 = arith.constant 0 : index
    %c147_131 = arith.constant 147 : index
    %148 = vector.load %arg15[%c0_130, %c147_131] : memref<4x1024xbf16, #tpu.memory_space<vmem>>, vector<4x768xbf16>
    %c8_132 = arith.constant 8 : index
    %c0_133 = arith.constant 0 : index
    %c0_134 = arith.constant 0 : index
    %149 = vector.load %arg9[%c8_132, %c0_133, %c0_134] : memref<9x4x4xbf16, #tpu.memory_space<vmem>>, vector<1x4x4xbf16>
    %150 = vector.shape_cast %149 : vector<1x4x4xbf16> to vector<4x4xbf16>
    %cst_135 = arith.constant dense<0.000000e+00> : vector<4x768xf32>
    %151 = tpu.matmul %150, %148, %cst_135 {dimension_numbers = #tpu.dot_dimension_numbers<[1], [0], [0], [1], [0, 0, 1, 1], [], []>} : vector<4x4xbf16>, vector<4x768xbf16>, vector<4x768xf32> -> vector<4x768xf32>
    %152 = arith.addf %147, %151 : vector<4x768xf32>
    %153 = vector.extract_strided_slice %152 {offsets = [0, 0], sizes = [4, 384], strides = [1, 1]} : vector<4x768xf32> to vector<4x384xf32>
    %c0_136 = arith.constant 0 : index
    %c0_137 = arith.constant 0 : index
    %154 = vector.load %arg3[%c0_136, %c0_137] : memref<384x256xf32, #tpu.memory_space<vmem>>, vector<384x256xf32>
    %cst_138 = arith.constant dense<0.000000e+00> : vector<4x256xf32>
    %155 = tpu.matmul %153, %154, %cst_138 {dimension_numbers = #tpu.dot_dimension_numbers<[1], [0], [0], [1], [0, 0, 1, 1], [], []>} : vector<4x384xf32>, vector<384x256xf32>, vector<4x256xf32> -> vector<4x256xf32>
    %156 = vector.extract_strided_slice %152 {offsets = [0, 384], sizes = [4, 384], strides = [1, 1]} : vector<4x768xf32> to vector<4x384xf32>
    %c0_139 = arith.constant 0 : index
    %c0_140 = arith.constant 0 : index
    %157 = vector.load %arg3[%c0_139, %c0_140] : memref<384x256xf32, #tpu.memory_space<vmem>>, vector<384x256xf32>
    %cst_141 = arith.constant dense<0.000000e+00> : vector<4x256xf32>
    %158 = tpu.matmul %156, %157, %cst_141 {dimension_numbers = #tpu.dot_dimension_numbers<[1], [0], [0], [1], [0, 0, 1, 1], [], []>} : vector<4x384xf32>, vector<384x256xf32>, vector<4x256xf32> -> vector<4x256xf32>
    %cst_142 = arith.constant dense<0.000000e+00> : vector<4xf32>
    %159 = vector.multi_reduction <add>, %155, %cst_142 [1] : vector<4x256xf32> to vector<4xf32>
    %160 = vector.shape_cast %159 : vector<4xf32> to vector<4x1xf32>
    %cst_143 = arith.constant 0.000000e+00 : f32
    %161 = vector.broadcast %cst_143 : f32 to vector<4x1xf32>
    %162 = arith.addf %161, %160 : vector<4x1xf32>
    %cst_144 = arith.constant dense<0.000000e+00> : vector<4xf32>
    %163 = vector.multi_reduction <add>, %158, %cst_144 [1] : vector<4x256xf32> to vector<4xf32>
    %164 = vector.shape_cast %163 : vector<4xf32> to vector<4x1xf32>
    %165 = arith.addf %162, %164 : vector<4x1xf32>
    %cst_145 = arith.constant 0.001953125 : f32
    %166 = vector.broadcast %cst_145 : f32 to vector<4x1xf32>
    %167 = arith.mulf %165, %166 : vector<4x1xf32>
    %168 = vector.broadcast %167 : vector<4x1xf32> to vector<4x256xf32>
    %169 = arith.subf %155, %168 : vector<4x256xf32>
    %170 = arith.mulf %169, %169 : vector<4x256xf32>
    %cst_146 = arith.constant dense<0.000000e+00> : vector<4xf32>
    %171 = vector.multi_reduction <add>, %170, %cst_146 [1] : vector<4x256xf32> to vector<4xf32>
    %172 = vector.shape_cast %171 : vector<4xf32> to vector<4x1xf32>
    %cst_147 = arith.constant 0.000000e+00 : f32
    %173 = vector.broadcast %cst_147 : f32 to vector<4x1xf32>
    %174 = arith.addf %173, %172 : vector<4x1xf32>
    %175 = vector.broadcast %167 : vector<4x1xf32> to vector<4x256xf32>
    %176 = arith.subf %158, %175 : vector<4x256xf32>
    %177 = arith.mulf %176, %176 : vector<4x256xf32>
    %cst_148 = arith.constant dense<0.000000e+00> : vector<4xf32>
    %178 = vector.multi_reduction <add>, %177, %cst_148 [1] : vector<4x256xf32> to vector<4xf32>
    %179 = vector.shape_cast %178 : vector<4xf32> to vector<4x1xf32>
    %180 = arith.addf %174, %179 : vector<4x1xf32>
    %cst_149 = arith.constant 0.001953125 : f32
    %181 = vector.broadcast %cst_149 : f32 to vector<4x1xf32>
    %182 = arith.mulf %180, %181 : vector<4x1xf32>
    %cst_150 = arith.constant 9.99999974E-6 : f32
    %183 = vector.broadcast %cst_150 : f32 to vector<4x1xf32>
    %184 = arith.addf %182, %183 : vector<4x1xf32>
    %185 = math.rsqrt %184 : vector<4x1xf32>
    %186 = vector.broadcast %167 : vector<4x1xf32> to vector<4x256xf32>
    %187 = arith.subf %155, %186 : vector<4x256xf32>
    %188 = vector.broadcast %185 : vector<4x1xf32> to vector<4x256xf32>
    %189 = arith.mulf %187, %188 : vector<4x256xf32>
    %c0_151 = arith.constant 0 : index
    %c0_152 = arith.constant 0 : index
    %190 = vector.load %arg11[%c0_151, %c0_152] : memref<4x1xf32, #tpu.memory_space<vmem>>, vector<4x1xf32>
    %191 = vector.broadcast %190 : vector<4x1xf32> to vector<4x256xf32>
    %192 = arith.mulf %189, %191 : vector<4x256xf32>
    %c0_153 = arith.constant 0 : index
    %c0_154 = arith.constant 0 : index
    %193 = vector.load %arg12[%c0_153, %c0_154] : memref<4x1xf32, #tpu.memory_space<vmem>>, vector<4x1xf32>
    %194 = vector.broadcast %193 : vector<4x1xf32> to vector<4x256xf32>
    %195 = arith.addf %192, %194 : vector<4x256xf32>
    %cst_155 = arith.constant 0.000000e+00 : f32
    %196 = vector.broadcast %cst_155 : f32 to vector<4x256xf32>
    %197 = arith.maximumf %195, %196 : vector<4x256xf32>
    %c0_156 = arith.constant 0 : index
    %c0_157 = arith.constant 0 : index
    %c0_158 = arith.constant 0 : index
    %198 = vector.load %arg13[%c0_156, %c0_157, %c0_158] : memref<2x4x256xf32, #tpu.memory_space<vmem>>, vector<1x4x256xf32>
    %199 = vector.shape_cast %198 : vector<1x4x256xf32> to vector<4x256xf32>
    %200 = vector.shape_cast %197 : vector<4x256xf32> to vector<1x4x256xf32>
    tpu.vector_store %arg13[%c0_156, %c0_157, %c0_158], %200 {strides = array<i32>} : memref<2x4x256xf32, #tpu.memory_space<vmem>>, vector<1x4x256xf32>,
    %201 = vector.broadcast %167 : vector<4x1xf32> to vector<4x256xf32>
    %202 = arith.subf %158, %201 : vector<4x256xf32>
    %203 = vector.broadcast %185 : vector<4x1xf32> to vector<4x256xf32>
    %204 = arith.mulf %202, %203 : vector<4x256xf32>
    %c0_159 = arith.constant 0 : index
    %c0_160 = arith.constant 0 : index
    %205 = vector.load %arg11[%c0_159, %c0_160] : memref<4x1xf32, #tpu.memory_space<vmem>>, vector<4x1xf32>
    %206 = vector.broadcast %205 : vector<4x1xf32> to vector<4x256xf32>
    %207 = arith.mulf %204, %206 : vector<4x256xf32>
    %c0_161 = arith.constant 0 : index
    %c0_162 = arith.constant 0 : index
    %208 = vector.load %arg12[%c0_161, %c0_162] : memref<4x1xf32, #tpu.memory_space<vmem>>, vector<4x1xf32>
    %209 = vector.broadcast %208 : vector<4x1xf32> to vector<4x256xf32>
    %210 = arith.addf %207, %209 : vector<4x256xf32>
    %cst_163 = arith.constant 0.000000e+00 : f32
    %211 = vector.broadcast %cst_163 : f32 to vector<4x256xf32>
    %212 = arith.maximumf %210, %211 : vector<4x256xf32>
    %c1_164 = arith.constant 1 : index
    %c0_165 = arith.constant 0 : index
    %c0_166 = arith.constant 0 : index
    %213 = vector.load %arg13[%c1_164, %c0_165, %c0_166] : memref<2x4x256xf32, #tpu.memory_space<vmem>>, vector<1x4x256xf32>
    %214 = vector.shape_cast %213 : vector<1x4x256xf32> to vector<4x256xf32>
    %215 = vector.shape_cast %212 : vector<4x256xf32> to vector<1x4x256xf32>
    tpu.vector_store %arg13[%c1_164, %c0_165, %c0_166], %215 {strides = array<i32>} : memref<2x4x256xf32, #tpu.memory_space<vmem>>, vector<1x4x256xf32>,
    return
  }
}

</mosaic_0001>

<llo_original>
// kernel: up_forward.1
$region0: #{up_forward.1}
  #allocation0 [shape = 'u32[]', space=smem, size = 0x4, offset = 0x4, fixed_abs, tag = 'smem constant byte address 0x4 - core index']
  #allocation1 [shape = 'u32[72,128]{1,0:T(1,128)}', space=vmem, size = 0x9000, scoped, tag = 'internal scratch']
  #allocation2 [shape = 'bf16[8,1024]{1,0:T(8,128)(2,1)}', space=vmem, size = 0x4000, scoped, tag = 'scratch operand']
  #allocation3 [shape = 'bf16[4,1024]{1,0:T(4,128)(2,1)}', space=vmem, size = 0x2000, scoped, tag = 'scratch operand']
  %s0 = inlined_call_operand.vmem [shape: bf16[8,64], index: 0, kind: input, shape index: {}]
  %s1 = inlined_call_operand.vmem [shape: bf16[2,4,384], index: 1, kind: input, shape index: {}]
  %s2 = inlined_call_operand.vmem [shape: bf16[64,384], index: 2, kind: input, shape index: {}]
  %s3 = inlined_call_operand.vmem [shape: f32[384,256], index: 3, kind: input, shape index: {}]
  %s4 = inlined_call_operand.vmem [shape: f32[1,768], index: 4, kind: input, shape index: {}]
  %s5 = inlined_call_operand.vmem [shape: bf16[9,4,8], index: 5, kind: input, shape index: {}]
  %s6 = inlined_call_operand.vmem [shape: f32[4,1], index: 6, kind: input, shape index: {}]
  %s7 = inlined_call_operand.vmem [shape: f32[4,1], index: 7, kind: input, shape index: {}]
  %s8 = inlined_call_operand.vmem [shape: f32[4,1], index: 8, kind: input, shape index: {}]
  %s9 = inlined_call_operand.vmem [shape: bf16[9,4,4], index: 9, kind: input, shape index: {}]
  %s10 = inlined_call_operand.vmem [shape: f32[4,1], index: 10, kind: input, shape index: {}]
  %s11 = inlined_call_operand.vmem [shape: f32[4,1], index: 11, kind: input, shape index: {}]
  %s12 = inlined_call_operand.vmem [shape: f32[4,1], index: 12, kind: input, shape index: {}]
  %s13 = inlined_call_operand.vmem [shape: f32[2,4,256], index: 13, kind: output, shape index: {}]
  %s14 = sld [smem:[#allocation0]]
  $region62: #{up_forward.1} parent=0
    _
  %s16 = ssub.s32 1, %s14
  %s17 = scalar_select 0, %s16, %s14
  // Predicated region
  $region2: #{up_forward.1} parent=0 // pred_check
    _
  $region3: #{up_forward.1} parent=0 // pred_check_branch
    %19 = sbr.rel (0) target = $region5
  $region4: #{up_forward.1} parent=0 // pred_region
    _
  $region5: #{up_forward.1} parent=0 // pred_fallthru
    _
  // Predicated region
  $region6: #{up_forward.1} parent=0 // pred_check
    _
  $region7: #{up_forward.1} parent=0 // pred_check_branch
    %21 = sbr.rel (0) target = $region9
  $region8: #{up_forward.1} parent=0 // pred_region
    _
  $region9: #{up_forward.1} parent=0 // pred_fallthru
    _
  // Predicated region
  $region10: #{up_forward.1} parent=0 // pred_check
    _
  $region11: #{up_forward.1} parent=0 // pred_check_branch
    %23 = sbr.rel (0) target = $region13
  $region12: #{up_forward.1} parent=0 // pred_region
    _
  $region13: #{up_forward.1} parent=0 // pred_fallthru
    _
  // Predicated region
  $region14: #{up_forward.1} parent=0 // pred_check
    _
  $region15: #{up_forward.1} parent=0 // pred_check_branch
    %25 = sbr.rel (0) target = $region17
  $region16: #{up_forward.1} parent=0 // pred_region
    _
  $region17: #{up_forward.1} parent=0 // pred_fallthru
    _
  // Predicated region
  $region18: #{up_forward.1} parent=0 // pred_check
    _
  $region19: #{up_forward.1} parent=0 // pred_check_branch
    %27 = sbr.rel (0) target = $region21
  $region20: #{up_forward.1} parent=0 // pred_region
    _
  $region21: #{up_forward.1} parent=0 // pred_fallthru
    _
  // Predicated region
  $region22: #{up_forward.1} parent=0 // pred_check
    _
  $region23: #{up_forward.1} parent=0 // pred_check_branch
    %29 = sbr.rel (0) target = $region25
  $region24: #{up_forward.1} parent=0 // pred_region
    _
  $region25: #{up_forward.1} parent=0 // pred_fallthru
    _
  // Predicated region
  $region26: #{up_forward.1} parent=0 // pred_check
    _
  $region27: #{up_forward.1} parent=0 // pred_check_branch
    %31 = sbr.rel (0) target = $region29
  $region28: #{up_forward.1} parent=0 // pred_region
    _
  $region29: #{up_forward.1} parent=0 // pred_fallthru
    _
  // Predicated region
  $region30: #{up_forward.1} parent=0 // pred_check
    _
  $region31: #{up_forward.1} parent=0 // pred_check_branch
    %33 = sbr.rel (0) target = $region33
  $region32: #{up_forward.1} parent=0 // pred_region
    _
  $region33: #{up_forward.1} parent=0 // pred_fallthru
    _
  // Predicated region
  $region34: #{up_forward.1} parent=0 // pred_check
    _
  $region35: #{up_forward.1} parent=0 // pred_check_branch
    %35 = sbr.rel (0) target = $region37
  $region36: #{up_forward.1} parent=0 // pred_region
    _
  $region37: #{up_forward.1} parent=0 // pred_fallthru
    _
  // Predicated region
  $region38: #{up_forward.1} parent=0 // pred_check
    _
  $region39: #{up_forward.1} parent=0 // pred_check_branch
    %37 = sbr.rel (0) target = $region41
  $region40: #{up_forward.1} parent=0 // pred_region
    _
  $region41: #{up_forward.1} parent=0 // pred_fallthru
    _
  // Predicated region
  $region42: #{up_forward.1} parent=0 // pred_check
    _
  $region43: #{up_forward.1} parent=0 // pred_check_branch
    %39 = sbr.rel (0) target = $region45
  $region44: #{up_forward.1} parent=0 // pred_region
    _
  $region45: #{up_forward.1} parent=0 // pred_fallthru
    _
  // Predicated region
  $region46: #{up_forward.1} parent=0 // pred_check
    _
  $region47: #{up_forward.1} parent=0 // pred_check_branch
    %41 = sbr.rel (0) target = $region49
  $region48: #{up_forward.1} parent=0 // pred_region
    _
  $region49: #{up_forward.1} parent=0 // pred_fallthru
    _
  // Predicated region
  $region50: #{up_forward.1} parent=0 // pred_check
    _
  $region51: #{up_forward.1} parent=0 // pred_check_branch
    %43 = sbr.rel (0) target = $region53
  $region52: #{up_forward.1} parent=0 // pred_region
    _
  $region53: #{up_forward.1} parent=0 // pred_fallthru
    _
  %45 = vst [vmem:[#allocation2] sm:$0xf] 0
  %46 = vst [vmem:[#allocation2 + $0x1c] sm:$0xf] 0
  %47 = vst [vmem:[#allocation3] sm:$0x3] 0
  %48 = vst [vmem:[#allocation3 + $0xe] sm:$0x3] 0
  %v49 = vld [vmem:[%s0] sm:$0xf]
  %v50 = vld [vmem:[%s2] sm:$0xff]
  %v51 = vld [vmem:[%s2 + $0x8] sm:$0xf]
  %v52 = vld [vmem:[%s2 + $0xc] sm:$0xff]
  %v53 = vld [vmem:[%s2 + $0x14] sm:$0xf]
  %v54 = vld [vmem:[%s2 + $0x18] sm:$0xff]
  %v55 = vld [vmem:[%s2 + $0x20] sm:$0xf]
  %v56 = vld [vmem:[%s2 + $0x24] sm:$0xff]
  %v57 = vld [vmem:[%s2 + $0x2c] sm:$0xf]
  %v58 = vld [vmem:[%s2 + $0x30] sm:$0xff]
  %v59 = vld [vmem:[%s2 + $0x38] sm:$0xf]
  %v60 = vld [vmem:[%s2 + $0x3c] sm:$0xff]
  %v61 = vld [vmem:[%s2 + $0x44] sm:$0xf]
  %v62 = vld [vmem:[%s2 + $0x48] sm:$0xff]
  %v63 = vld [vmem:[%s2 + $0x50] sm:$0xf]
  %v64 = vld [vmem:[%s2 + $0x54] sm:$0xff]
  %v65 = vld [vmem:[%s2 + $0x5c] sm:$0xf]
  %v82 = vunpack.c.l.b16 %v50
  %v83 = vunpack.c.h.b16 %v50
  %v84 = vunpack.c.l.b16 %v51
  %v85 = vunpack.c.l.b16 %v52
  %v86 = vunpack.c.h.b16 %v52
  %v87 = vunpack.c.l.b16 %v53
  %v88 = vunpack.c.l.b16 %v54
  %v89 = vunpack.c.h.b16 %v54
  %v90 = vunpack.c.l.b16 %v55
  %v91 = vunpack.c.l.b16 %v56
  %v92 = vunpack.c.h.b16 %v56
  %v93 = vunpack.c.l.b16 %v57
  %v94 = vunpack.c.l.b16 %v58
  %v95 = vunpack.c.h.b16 %v58
  %v96 = vunpack.c.l.b16 %v59
  %v97 = vunpack.c.l.b16 %v60
  %v98 = vunpack.c.h.b16 %v60
  %v99 = vunpack.c.l.b16 %v61
  %v100 = vunpack.c.l.b16 %v62
  %v101 = vunpack.c.h.b16 %v62
  %v102 = vunpack.c.l.b16 %v63
  %v103 = vunpack.c.l.b16 %v64
  %v104 = vunpack.c.h.b16 %v64
  %v105 = vunpack.c.l.b16 %v65
  %v106 = vpack.c.b16 %v85, %v82
  %v107 = vpack.c.b16 %v86, %v83
  %v108 = vpack.c.b16 %v87, %v84
  %v109 = vpack.c.b16 %v91, %v88
  %v110 = vpack.c.b16 %v92, %v89
  %v111 = vpack.c.b16 %v93, %v90
  %v112 = vpack.c.b16 %v97, %v94
  %v113 = vpack.c.b16 %v98, %v95
  %v114 = vpack.c.b16 %v99, %v96
  %v115 = vpack.c.b16 %v103, %v100
  %v116 = vpack.c.b16 %v104, %v101
  %v117 = vpack.c.b16 %v105, %v102
  %vm130 = vcmask 523264
  %v132 = vsel %vm130, %v49, 0
  %134 = vmatpush.bf16.msra.mxu0 0
  %135 = vmatpush.bf16.msra.mxu0 0
  %136 = vmatpush.bf16.msra.mxu0 0
  %137 = vmatpush.bf16.msra.mxu0 0
  %138 = vmatpush.bf16.msra.mxu0 %v115
  %139 = vmatpush.bf16.msra.mxu0 %v112
  %140 = vmatpush.bf16.msra.mxu0 %v109
  %141 = vmatpush.bf16.msra.mxu0 %v106
  %142 = vmatmul.bf16.gmra.mxu0 %v132
  %v143 = vpop.f32.mrf.mxu0
  %v144 = vadd.f32 0.0, %v143
  %v145 = vpop.f32.mrf.mxu0
  %146 = vdwg.mxu0
  %147 = vmatpush.bf16.msra.mxu0 0
  %148 = vmatpush.bf16.msra.mxu0 0
  %149 = vmatpush.bf16.msra.mxu0 0
  %150 = vmatpush.bf16.msra.mxu0 0
  %151 = vmatpush.bf16.msra.mxu0 %v116
  %152 = vmatpush.bf16.msra.mxu0 %v113
  %153 = vmatpush.bf16.msra.mxu0 %v110
  %154 = vmatpush.bf16.msra.mxu0 %v107
  %155 = vmatmul.bf16.gmra.mxu0 %v132
  %v156 = vpop.f32.mrf.mxu0
  %v157 = vadd.f32 0.0, %v156
  %v158 = vpop.f32.mrf.mxu0
  %159 = vdwg.mxu0
  %160 = vmatpush.bf16.msra.mxu0 0
  %161 = vmatpush.bf16.msra.mxu0 0
  %162 = vmatpush.bf16.msra.mxu0 0
  %163 = vmatpush.bf16.msra.mxu0 0
  %164 = vmatpush.bf16.msra.mxu0 %v117
  %165 = vmatpush.bf16.msra.mxu0 %v114
  %166 = vmatpush.bf16.msra.mxu0 %v111
  %167 = vmatpush.bf16.msra.mxu0 %v108
  %168 = vmatmul.bf16.gmra.mxu0 %v132
  %v169 = vpop.f32.mrf.mxu0
  %v170 = vadd.f32 0.0, %v169
  %v171 = vpop.f32.mrf.mxu0
  %172 = vdwg.mxu0
  %v173 = vpack.c.bf16 %v157, %v144
  %v174 = vpack.c.bf16 %v170, %v170
  %v175 = vld [vmem:[%s1] sm:$0x3f]
  %177 = vst [vmem:[#allocation1] ss:$2 sm:$0xff] %v175
  %v178 = vld.sshfl [vmem:[#allocation1] sm:$0xff pattern:$0x75643120]
  %v179 = vld.sshfl [vmem:[#allocation1 + $0x8] sm:$0xff pattern:$0x75643120]
  %182 = vst [vmem:[#allocation2 + $0x4] sm:$0x33] %v178
  %183 = vst [vmem:[#allocation2 + $0xc] sm:$0x3] %v179
  %v186 = vrot.slane %v173, 6
  %v187 = vrot.slane %v174, 6
  %190 = vst [vmem:[#allocation2 + $0x4] sm:$0xcc] %v186
  %191 = vst [vmem:[#allocation2 + $0xc] sm:$0xc] %v187
  %s192 = scalar_lea.vmem %s1, 6
  %v193 = vld [vmem:[%s192] sm:$0x3f]
  %195 = vst [vmem:[#allocation1] ss:$2 sm:$0xff] %v193
  %v196 = vld.sshfl [vmem:[#allocation1] sm:$0xff pattern:$0x75643120]
  %v197 = vld.sshfl [vmem:[#allocation1 + $0x8] sm:$0xff pattern:$0x75643120]
  %200 = vst [vmem:[#allocation2 + $0x10] sm:$0x33] %v196
  %201 = vst [vmem:[#allocation2 + $0x18] sm:$0x3] %v197
  %202 = vst [vmem:[#allocation2 + $0x10] sm:$0xcc] %v173
  %203 = vst [vmem:[#allocation2 + $0x18] sm:$0xc] %v174
  %v204 = vld [vmem:[%s6] sm:$0xf]
  %206 = vset.pattern.permute.xlu0 0
  %207 = vperm.xlu0 %206, %v204
  %v208 = vpop.permute.xlu0 %207
  %v210 = vld [vmem:[#allocation2] sm:$0xff]
  %v211 = vld [vmem:[#allocation2 + $0x8] sm:$0xff]
  %v212 = vld [vmem:[#allocation2 + $0x10] sm:$0xff]
  %v213 = vld [vmem:[#allocation2 + $0x18] sm:$0xf]
  %v214 = vld [vmem:[%s5] sm:$0x3]
  %v219 = vunpack.c.l.b16 %v210
  %v220 = vunpack.c.h.b16 %v210
  %v221 = vunpack.c.l.b16 %v211
  %v222 = vunpack.c.h.b16 %v211
  %v223 = vunpack.c.l.b16 %v212
  %v224 = vunpack.c.h.b16 %v212
  %v225 = vunpack.c.l.b16 %v213
  %v226 = vpack.c.b16 %v219, %v219
  %v227 = vpack.c.b16 %v220, %v220
  %v228 = vpack.c.b16 %v221, %v221
  %v229 = vpack.c.b16 %v222, %v222
  %v230 = vpack.c.b16 %v223, %v223
  %v231 = vpack.c.b16 %v224, %v224
  %v232 = vpack.c.b16 %v225, %v225
  %233 = vrot.lane.b32.xlu0 %v226, 19
  %v234 = vpop.permute.xlu0 %233
  %235 = vrot.lane.b32.xlu0 %v227, 19
  %v236 = vpop.permute.xlu0 %235
  %237 = vrot.lane.b32.xlu0 %v228, 19
  %v238 = vpop.permute.xlu0 %237
  %239 = vrot.lane.b32.xlu0 %v229, 19
  %v240 = vpop.permute.xlu0 %239
  %241 = vrot.lane.b32.xlu0 %v230, 19
  %v242 = vpop.permute.xlu0 %241
  %243 = vrot.lane.b32.xlu0 %v231, 19
  %v244 = vpop.permute.xlu0 %243
  %245 = vrot.lane.b32.xlu0 %v232, 19
  %v246 = vpop.permute.xlu0 %245
  %vm247 = vcmask 154624
  %v248 = vsel %vm247, %v234, %v236
  %v249 = vsel %vm247, %v236, %v238
  %v250 = vsel %vm247, %v238, %v240
  %v251 = vsel %vm247, %v240, %v242
  %v252 = vsel %vm247, %v242, %v244
  %v253 = vsel %vm247, %v244, %v246
  %vm254 = vcmask 64512
  %v256 = vsel %vm254, %v214, 0
  %vm258 = vcmask 1043456
  %v260 = vsel %vm258, %v248, 0
  %v263 = vsel %vm258, %v249, 0
  %v266 = vsel %vm258, %v250, 0
  %v269 = vsel %vm258, %v251, 0
  %v272 = vsel %vm258, %v252, 0
  %v275 = vsel %vm258, %v253, 0
  %277 = vmatpush.bf16.msra.mxu0 0
  %278 = vmatpush.bf16.msra.mxu0 0
  %279 = vmatpush.bf16.msra.mxu0 0
  %280 = vmatpush.bf16.msra.mxu0 0
  %281 = vmatpush.bf16.msra.mxu0 0
  %282 = vmatpush.bf16.msra.mxu0 0
  %283 = vmatpush.bf16.msra.mxu0 0
  %284 = vmatpush.bf16.msra.mxu0 %v260
  %285 = vmatmul.bf16.gmra.mxu0 %v256
  %v286 = vpop.f32.mrf.mxu0
  %v287 = vadd.f32 0.0, %v286
  %v288 = vpop.f32.mrf.mxu0
  %289 = vdwg.mxu0
  %290 = vmatpush.bf16.msra.mxu0 0
  %291 = vmatpush.bf16.msra.mxu0 0
  %292 = vmatpush.bf16.msra.mxu0 0
  %293 = vmatpush.bf16.msra.mxu0 0
  %294 = vmatpush.bf16.msra.mxu0 0
  %295 = vmatpush.bf16.msra.mxu0 0
  %296 = vmatpush.bf16.msra.mxu0 0
  %297 = vmatpush.bf16.msra.mxu0 %v263
  %298 = vmatmul.bf16.gmra.mxu0 %v256
  %v299 = vpop.f32.mrf.mxu0
  %v300 = vadd.f32 0.0, %v299
  %v301 = vpop.f32.mrf.mxu0
  %302 = vdwg.mxu0
  %303 = vmatpush.bf16.msra.mxu0 0
  %304 = vmatpush.bf16.msra.mxu0 0
  %305 = vmatpush.bf16.msra.mxu0 0
  %306 = vmatpush.bf16.msra.mxu0 0
  %307 = vmatpush.bf16.msra.mxu0 0
  %308 = vmatpush.bf16.msra.mxu0 0
  %309 = vmatpush.bf16.msra.mxu0 0
  %310 = vmatpush.bf16.msra.mxu0 %v266
  %311 = vmatmul.bf16.gmra.mxu0 %v256
  %v312 = vpop.f32.mrf.mxu0
  %v313 = vadd.f32 0.0, %v312
  %v314 = vpop.f32.mrf.mxu0
  %315 = vdwg.mxu0
  %316 = vmatpush.bf16.msra.mxu0 0
  %317 = vmatpush.bf16.msra.mxu0 0
  %318 = vmatpush.bf16.msra.mxu0 0
  %319 = vmatpush.bf16.msra.mxu0 0
  %320 = vmatpush.bf16.msra.mxu0 0
  %321 = vmatpush.bf16.msra.mxu0 0
  %322 = vmatpush.bf16.msra.mxu0 0
  %323 = vmatpush.bf16.msra.mxu0 %v269
  %324 = vmatmul.bf16.gmra.mxu0 %v256
  %v325 = vpop.f32.mrf.mxu0
  %v326 = vadd.f32 0.0, %v325
  %v327 = vpop.f32.mrf.mxu0
  %328 = vdwg.mxu0
  %329 = vmatpush.bf16.msra.mxu0 0
  %330 = vmatpush.bf16.msra.mxu0 0
  %331 = vmatpush.bf16.msra.mxu0 0
  %332 = vmatpush.bf16.msra.mxu0 0
  %333 = vmatpush.bf16.msra.mxu0 0
  %334 = vmatpush.bf16.msra.mxu0 0
  %335 = vmatpush.bf16.msra.mxu0 0
  %336 = vmatpush.bf16.msra.mxu0 %v272
  %337 = vmatmul.bf16.gmra.mxu0 %v256
  %v338 = vpop.f32.mrf.mxu0
  %v339 = vadd.f32 0.0, %v338
  %v340 = vpop.f32.mrf.mxu0
  %341 = vdwg.mxu0
  %342 = vmatpush.bf16.msra.mxu0 0
  %343 = vmatpush.bf16.msra.mxu0 0
  %344 = vmatpush.bf16.msra.mxu0 0
  %345 = vmatpush.bf16.msra.mxu0 0
  %346 = vmatpush.bf16.msra.mxu0 0
  %347 = vmatpush.bf16.msra.mxu0 0
  %348 = vmatpush.bf16.msra.mxu0 0
  %349 = vmatpush.bf16.msra.mxu0 %v275
  %350 = vmatmul.bf16.gmra.mxu0 %v256
  %v351 = vpop.f32.mrf.mxu0
  %v352 = vadd.f32 0.0, %v351
  %v353 = vpop.f32.mrf.mxu0
  %354 = vdwg.mxu0
  %v355 = vadd.f32 %v208, %v287
  %v356 = vadd.f32 %v208, %v300
  %v357 = vadd.f32 %v208, %v313
  %v358 = vadd.f32 %v208, %v326
  %v359 = vadd.f32 %v208, %v339
  %v360 = vadd.f32 %v208, %v352
  %s361 = scalar_lea.vmem %s5, 2
  %v362 = vld [vmem:[%s361] sm:$0x3]
  %363 = vrot.lane.b32.xlu0 %v226, 18
  %v364 = vpop.permute.xlu0 %363
  %365 = vrot.lane.b32.xlu0 %v227, 18
  %v366 = vpop.permute.xlu0 %365
  %367 = vrot.lane.b32.xlu0 %v228, 18
  %v368 = vpop.permute.xlu0 %367
  %369 = vrot.lane.b32.xlu0 %v229, 18
  %v370 = vpop.permute.xlu0 %369
  %371 = vrot.lane.b32.xlu0 %v230, 18
  %v372 = vpop.permute.xlu0 %371
  %373 = vrot.lane.b32.xlu0 %v231, 18
  %v374 = vpop.permute.xlu0 %373
  %375 = vrot.lane.b32.xlu0 %v232, 18
  %v376 = vpop.permute.xlu0 %375
  %vm377 = vcmask 146432
  %v378 = vsel %vm377, %v364, %v366
  %v379 = vsel %vm377, %v366, %v368
  %v380 = vsel %vm377, %v368, %v370
  %v381 = vsel %vm377, %v370, %v372
  %v382 = vsel %vm377, %v372, %v374
  %v383 = vsel %vm377, %v374, %v376
  %v385 = vsel %vm254, %v362, 0
  %v388 = vsel %vm258, %v378, 0
  %v391 = vsel %vm258, %v379, 0
  %v394 = vsel %vm258, %v380, 0
  %v397 = vsel %vm258, %v381, 0
  %v400 = vsel %vm258, %v382, 0
  %v403 = vsel %vm258, %v383, 0
  %405 = vmatpush.bf16.msra.mxu0 0
  %406 = vmatpush.bf16.msra.mxu0 0
  %407 = vmatpush.bf16.msra.mxu0 0
  %408 = vmatpush.bf16.msra.mxu0 0
  %409 = vmatpush.bf16.msra.mxu0 0
  %410 = vmatpush.bf16.msra.mxu0 0
  %411 = vmatpush.bf16.msra.mxu0 0
  %412 = vmatpush.bf16.msra.mxu0 %v388
  %413 = vmatmul.bf16.gmra.mxu0 %v385
  %v414 = vpop.f32.mrf.mxu0
  %v415 = vadd.f32 0.0, %v414
  %v416 = vpop.f32.mrf.mxu0
  %417 = vdwg.mxu0
  %418 = vmatpush.bf16.msra.mxu0 0
  %419 = vmatpush.bf16.msra.mxu0 0
  %420 = vmatpush.bf16.msra.mxu0 0
  %421 = vmatpush.bf16.msra.mxu0 0
  %422 = vmatpush.bf16.msra.mxu0 0
  %423 = vmatpush.bf16.msra.mxu0 0
  %424 = vmatpush.bf16.msra.mxu0 0
  %425 = vmatpush.bf16.msra.mxu0 %v391
  %426 = vmatmul.bf16.gmra.mxu0 %v385
  %v427 = vpop.f32.mrf.mxu0
  %v428 = vadd.f32 0.0, %v427
  %v429 = vpop.f32.mrf.mxu0
  %430 = vdwg.mxu0
  %431 = vmatpush.bf16.msra.mxu0 0
  %432 = vmatpush.bf16.msra.mxu0 0
  %433 = vmatpush.bf16.msra.mxu0 0
  %434 = vmatpush.bf16.msra.mxu0 0
  %435 = vmatpush.bf16.msra.mxu0 0
  %436 = vmatpush.bf16.msra.mxu0 0
  %437 = vmatpush.bf16.msra.mxu0 0
  %438 = vmatpush.bf16.msra.mxu0 %v394
  %439 = vmatmul.bf16.gmra.mxu0 %v385
  %v440 = vpop.f32.mrf.mxu0
  %v441 = vadd.f32 0.0, %v440
  %v442 = vpop.f32.mrf.mxu0
  %443 = vdwg.mxu0
  %444 = vmatpush.bf16.msra.mxu0 0
  %445 = vmatpush.bf16.msra.mxu0 0
  %446 = vmatpush.bf16.msra.mxu0 0
  %447 = vmatpush.bf16.msra.mxu0 0
  %448 = vmatpush.bf16.msra.mxu0 0
  %449 = vmatpush.bf16.msra.mxu0 0
  %450 = vmatpush.bf16.msra.mxu0 0
  %451 = vmatpush.bf16.msra.mxu0 %v397
  %452 = vmatmul.bf16.gmra.mxu0 %v385
  %v453 = vpop.f32.mrf.mxu0
  %v454 = vadd.f32 0.0, %v453
  %v455 = vpop.f32.mrf.mxu0
  %456 = vdwg.mxu0
  %457 = vmatpush.bf16.msra.mxu0 0
  %458 = vmatpush.bf16.msra.mxu0 0
  %459 = vmatpush.bf16.msra.mxu0 0
  %460 = vmatpush.bf16.msra.mxu0 0
  %461 = vmatpush.bf16.msra.mxu0 0
  %462 = vmatpush.bf16.msra.mxu0 0
  %463 = vmatpush.bf16.msra.mxu0 0
  %464 = vmatpush.bf16.msra.mxu0 %v400
  %465 = vmatmul.bf16.gmra.mxu0 %v385
  %v466 = vpop.f32.mrf.mxu0
  %v467 = vadd.f32 0.0, %v466
  %v468 = vpop.f32.mrf.mxu0
  %469 = vdwg.mxu0
  %470 = vmatpush.bf16.msra.mxu0 0
  %471 = vmatpush.bf16.msra.mxu0 0
  %472 = vmatpush.bf16.msra.mxu0 0
  %473 = vmatpush.bf16.msra.mxu0 0
  %474 = vmatpush.bf16.msra.mxu0 0
  %475 = vmatpush.bf16.msra.mxu0 0
  %476 = vmatpush.bf16.msra.mxu0 0
  %477 = vmatpush.bf16.msra.mxu0 %v403
  %478 = vmatmul.bf16.gmra.mxu0 %v385
  %v479 = vpop.f32.mrf.mxu0
  %v480 = vadd.f32 0.0, %v479
  %v481 = vpop.f32.mrf.mxu0
  %482 = vdwg.mxu0
  %v483 = vadd.f32 %v355, %v415
  %v484 = vadd.f32 %v356, %v428
  %v485 = vadd.f32 %v357, %v441
  %v486 = vadd.f32 %v358, %v454
  %v487 = vadd.f32 %v359, %v467
  %v488 = vadd.f32 %v360, %v480
  %s489 = scalar_lea.vmem %s5, 4
  %v490 = vld [vmem:[%s489] sm:$0x3]
  %491 = vrot.lane.b32.xlu0 %v226, 17
  %v492 = vpop.permute.xlu0 %491
  %493 = vrot.lane.b32.xlu0 %v227, 17
  %v494 = vpop.permute.xlu0 %493
  %495 = vrot.lane.b32.xlu0 %v228, 17
  %v496 = vpop.permute.xlu0 %495
  %497 = vrot.lane.b32.xlu0 %v229, 17
  %v498 = vpop.permute.xlu0 %497
  %499 = vrot.lane.b32.xlu0 %v230, 17
  %v500 = vpop.permute.xlu0 %499
  %501 = vrot.lane.b32.xlu0 %v231, 17
  %v502 = vpop.permute.xlu0 %501
  %503 = vrot.lane.b32.xlu0 %v232, 17
  %v504 = vpop.permute.xlu0 %503
  %vm505 = vcmask 138240
  %v506 = vsel %vm505, %v492, %v494
  %v507 = vsel %vm505, %v494, %v496
  %v508 = vsel %vm505, %v496, %v498
  %v509 = vsel %vm505, %v498, %v500
  %v510 = vsel %vm505, %v500, %v502
  %v511 = vsel %vm505, %v502, %v504
  %v513 = vsel %vm254, %v490, 0
  %v516 = vsel %vm258, %v506, 0
  %v519 = vsel %vm258, %v507, 0
  %v522 = vsel %vm258, %v508, 0
  %v525 = vsel %vm258, %v509, 0
  %v528 = vsel %vm258, %v510, 0
  %v531 = vsel %vm258, %v511, 0
  %533 = vmatpush.bf16.msra.mxu0 0
  %534 = vmatpush.bf16.msra.mxu0 0
  %535 = vmatpush.bf16.msra.mxu0 0
  %536 = vmatpush.bf16.msra.mxu0 0
  %537 = vmatpush.bf16.msra.mxu0 0
  %538 = vmatpush.bf16.msra.mxu0 0
  %539 = vmatpush.bf16.msra.mxu0 0
  %540 = vmatpush.bf16.msra.mxu0 %v516
  %541 = vmatmul.bf16.gmra.mxu0 %v513
  %v542 = vpop.f32.mrf.mxu0
  %v543 = vadd.f32 0.0, %v542
  %v544 = vpop.f32.mrf.mxu0
  %545 = vdwg.mxu0
  %546 = vmatpush.bf16.msra.mxu0 0
  %547 = vmatpush.bf16.msra.mxu0 0
  %548 = vmatpush.bf16.msra.mxu0 0
  %549 = vmatpush.bf16.msra.mxu0 0
  %550 = vmatpush.bf16.msra.mxu0 0
  %551 = vmatpush.bf16.msra.mxu0 0
  %552 = vmatpush.bf16.msra.mxu0 0
  %553 = vmatpush.bf16.msra.mxu0 %v519
  %554 = vmatmul.bf16.gmra.mxu0 %v513
  %v555 = vpop.f32.mrf.mxu0
  %v556 = vadd.f32 0.0, %v555
  %v557 = vpop.f32.mrf.mxu0
  %558 = vdwg.mxu0
  %559 = vmatpush.bf16.msra.mxu0 0
  %560 = vmatpush.bf16.msra.mxu0 0
  %561 = vmatpush.bf16.msra.mxu0 0
  %562 = vmatpush.bf16.msra.mxu0 0
  %563 = vmatpush.bf16.msra.mxu0 0
  %564 = vmatpush.bf16.msra.mxu0 0
  %565 = vmatpush.bf16.msra.mxu0 0
  %566 = vmatpush.bf16.msra.mxu0 %v522
  %567 = vmatmul.bf16.gmra.mxu0 %v513
  %v568 = vpop.f32.mrf.mxu0
  %v569 = vadd.f32 0.0, %v568
  %v570 = vpop.f32.mrf.mxu0
  %571 = vdwg.mxu0
  %572 = vmatpush.bf16.msra.mxu0 0
  %573 = vmatpush.bf16.msra.mxu0 0
  %574 = vmatpush.bf16.msra.mxu0 0
  %575 = vmatpush.bf16.msra.mxu0 0
  %576 = vmatpush.bf16.msra.mxu0 0
  %577 = vmatpush.bf16.msra.mxu0 0
  %578 = vmatpush.bf16.msra.mxu0 0
  %579 = vmatpush.bf16.msra.mxu0 %v525
  %580 = vmatmul.bf16.gmra.mxu0 %v513
  %v581 = vpop.f32.mrf.mxu0
  %v582 = vadd.f32 0.0, %v581
  %v583 = vpop.f32.mrf.mxu0
  %584 = vdwg.mxu0
  %585 = vmatpush.bf16.msra.mxu0 0
  %586 = vmatpush.bf16.msra.mxu0 0
  %587 = vmatpush.bf16.msra.mxu0 0
  %588 = vmatpush.bf16.msra.mxu0 0
  %589 = vmatpush.bf16.msra.mxu0 0
  %590 = vmatpush.bf16.msra.mxu0 0
  %591 = vmatpush.bf16.msra.mxu0 0
  %592 = vmatpush.bf16.msra.mxu0 %v528
  %593 = vmatmul.bf16.gmra.mxu0 %v513
  %v594 = vpop.f32.mrf.mxu0
  %v595 = vadd.f32 0.0, %v594
  %v596 = vpop.f32.mrf.mxu0
  %597 = vdwg.mxu0
  %598 = vmatpush.bf16.msra.mxu0 0
  %599 = vmatpush.bf16.msra.mxu0 0
  %600 = vmatpush.bf16.msra.mxu0 0
  %601 = vmatpush.bf16.msra.mxu0 0
  %602 = vmatpush.bf16.msra.mxu0 0
  %603 = vmatpush.bf16.msra.mxu0 0
  %604 = vmatpush.bf16.msra.mxu0 0
  %605 = vmatpush.bf16.msra.mxu0 %v531
  %606 = vmatmul.bf16.gmra.mxu0 %v513
  %v607 = vpop.f32.mrf.mxu0
  %v608 = vadd.f32 0.0, %v607
  %v609 = vpop.f32.mrf.mxu0
  %610 = vdwg.mxu0
  %v611 = vadd.f32 %v483, %v543
  %v612 = vadd.f32 %v484, %v556
  %v613 = vadd.f32 %v485, %v569
  %v614 = vadd.f32 %v486, %v582
  %v615 = vadd.f32 %v487, %v595
  %v616 = vadd.f32 %v488, %v608
  %s617 = scalar_lea.vmem %s5, 6
  %v618 = vld [vmem:[%s617] sm:$0x3]
  %619 = vrot.lane.b32.xlu0 %v226, 1
  %v620 = vpop.permute.xlu0 %619
  %621 = vrot.lane.b32.xlu0 %v227, 1
  %v622 = vpop.permute.xlu0 %621
  %623 = vrot.lane.b32.xlu0 %v228, 1
  %v624 = vpop.permute.xlu0 %623
  %625 = vrot.lane.b32.xlu0 %v229, 1
  %v626 = vpop.permute.xlu0 %625
  %627 = vrot.lane.b32.xlu0 %v230, 1
  %v628 = vpop.permute.xlu0 %627
  %629 = vrot.lane.b32.xlu0 %v231, 1
  %v630 = vpop.permute.xlu0 %629
  %631 = vrot.lane.b32.xlu0 %v232, 1
  %v632 = vpop.permute.xlu0 %631
  %vm633 = vcmask 7168
  %v634 = vsel %vm633, %v620, %v622
  %v635 = vsel %vm633, %v622, %v624
  %v636 = vsel %vm633, %v624, %v626
  %v637 = vsel %vm633, %v626, %v628
  %v638 = vsel %vm633, %v628, %v630
  %v639 = vsel %vm633, %v630, %v632
  %v641 = vsel %vm254, %v618, 0
  %v644 = vsel %vm258, %v634, 0
  %v647 = vsel %vm258, %v635, 0
  %v650 = vsel %vm258, %v636, 0
  %v653 = vsel %vm258, %v637, 0
  %v656 = vsel %vm258, %v638, 0
  %v659 = vsel %vm258, %v639, 0
  %661 = vmatpush.bf16.msra.mxu0 0
  %662 = vmatpush.bf16.msra.mxu0 0
  %663 = vmatpush.bf16.msra.mxu0 0
  %664 = vmatpush.bf16.msra.mxu0 0
  %665 = vmatpush.bf16.msra.mxu0 0
  %666 = vmatpush.bf16.msra.mxu0 0
  %667 = vmatpush.bf16.msra.mxu0 0
  %668 = vmatpush.bf16.msra.mxu0 %v644
  %669 = vmatmul.bf16.gmra.mxu0 %v641
  %v670 = vpop.f32.mrf.mxu0
  %v671 = vadd.f32 0.0, %v670
  %v672 = vpop.f32.mrf.mxu0
  %673 = vdwg.mxu0
  %674 = vmatpush.bf16.msra.mxu0 0
  %675 = vmatpush.bf16.msra.mxu0 0
  %676 = vmatpush.bf16.msra.mxu0 0
  %677 = vmatpush.bf16.msra.mxu0 0
  %678 = vmatpush.bf16.msra.mxu0 0
  %679 = vmatpush.bf16.msra.mxu0 0
  %680 = vmatpush.bf16.msra.mxu0 0
  %681 = vmatpush.bf16.msra.mxu0 %v647
  %682 = vmatmul.bf16.gmra.mxu0 %v641
  %v683 = vpop.f32.mrf.mxu0
  %v684 = vadd.f32 0.0, %v683
  %v685 = vpop.f32.mrf.mxu0
  %686 = vdwg.mxu0
  %687 = vmatpush.bf16.msra.mxu0 0
  %688 = vmatpush.bf16.msra.mxu0 0
  %689 = vmatpush.bf16.msra.mxu0 0
  %690 = vmatpush.bf16.msra.mxu0 0
  %691 = vmatpush.bf16.msra.mxu0 0
  %692 = vmatpush.bf16.msra.mxu0 0
  %693 = vmatpush.bf16.msra.mxu0 0
  %694 = vmatpush.bf16.msra.mxu0 %v650
  %695 = vmatmul.bf16.gmra.mxu0 %v641
  %v696 = vpop.f32.mrf.mxu0
  %v697 = vadd.f32 0.0, %v696
  %v698 = vpop.f32.mrf.mxu0
  %699 = vdwg.mxu0
  %700 = vmatpush.bf16.msra.mxu0 0
  %701 = vmatpush.bf16.msra.mxu0 0
  %702 = vmatpush.bf16.msra.mxu0 0
  %703 = vmatpush.bf16.msra.mxu0 0
  %704 = vmatpush.bf16.msra.mxu0 0
  %705 = vmatpush.bf16.msra.mxu0 0
  %706 = vmatpush.bf16.msra.mxu0 0
  %707 = vmatpush.bf16.msra.mxu0 %v653
  %708 = vmatmul.bf16.gmra.mxu0 %v641
  %v709 = vpop.f32.mrf.mxu0
  %v710 = vadd.f32 0.0, %v709
  %v711 = vpop.f32.mrf.mxu0
  %712 = vdwg.mxu0
  %713 = vmatpush.bf16.msra.mxu0 0
  %714 = vmatpush.bf16.msra.mxu0 0
  %715 = vmatpush.bf16.msra.mxu0 0
  %716 = vmatpush.bf16.msra.mxu0 0
  %717 = vmatpush.bf16.msra.mxu0 0
  %718 = vmatpush.bf16.msra.mxu0 0
  %719 = vmatpush.bf16.msra.mxu0 0
  %720 = vmatpush.bf16.msra.mxu0 %v656
  %721 = vmatmul.bf16.gmra.mxu0 %v641
  %v722 = vpop.f32.mrf.mxu0
  %v723 = vadd.f32 0.0, %v722
  %v724 = vpop.f32.mrf.mxu0
  %725 = vdwg.mxu0
  %726 = vmatpush.bf16.msra.mxu0 0
  %727 = vmatpush.bf16.msra.mxu0 0
  %728 = vmatpush.bf16.msra.mxu0 0
  %729 = vmatpush.bf16.msra.mxu0 0
  %730 = vmatpush.bf16.msra.mxu0 0
  %731 = vmatpush.bf16.msra.mxu0 0
  %732 = vmatpush.bf16.msra.mxu0 0
  %733 = vmatpush.bf16.msra.mxu0 %v659
  %734 = vmatmul.bf16.gmra.mxu0 %v641
  %v735 = vpop.f32.mrf.mxu0
  %v736 = vadd.f32 0.0, %v735
  %v737 = vpop.f32.mrf.mxu0
  %738 = vdwg.mxu0
  %v739 = vadd.f32 %v611, %v671
  %v740 = vadd.f32 %v612, %v684
  %v741 = vadd.f32 %v613, %v697
  %v742 = vadd.f32 %v614, %v710
  %v743 = vadd.f32 %v615, %v723
  %v744 = vadd.f32 %v616, %v736
  %v745 = vld [vmem:[#allocation2 + $0x4] sm:$0xff]
  %v746 = vld [vmem:[#allocation2 + $0xc] sm:$0xff]
  %v747 = vld [vmem:[#allocation2 + $0x14] sm:$0xff]
  %s748 = scalar_lea.vmem %s5, 8
  %v749 = vld [vmem:[%s748] sm:$0x3]
  %v753 = vunpack.c.l.b16 %v745
  %v754 = vunpack.c.h.b16 %v745
  %v755 = vunpack.c.l.b16 %v746
  %v756 = vunpack.c.h.b16 %v746
  %v757 = vunpack.c.l.b16 %v747
  %v758 = vunpack.c.h.b16 %v747
  %v759 = vpack.c.b16 %v753, %v753
  %v760 = vpack.c.b16 %v754, %v754
  %v761 = vpack.c.b16 %v755, %v755
  %v762 = vpack.c.b16 %v756, %v756
  %v763 = vpack.c.b16 %v757, %v757
  %v764 = vpack.c.b16 %v758, %v758
  %v766 = vsel %vm254, %v749, 0
  %v769 = vsel %vm258, %v759, 0
  %v772 = vsel %vm258, %v760, 0
  %v775 = vsel %vm258, %v761, 0
  %v778 = vsel %vm258, %v762, 0
  %v781 = vsel %vm258, %v763, 0
  %v784 = vsel %vm258, %v764, 0
  %786 = vmatpush.bf16.msra.mxu0 0
  %787 = vmatpush.bf16.msra.mxu0 0
  %788 = vmatpush.bf16.msra.mxu0 0
  %789 = vmatpush.bf16.msra.mxu0 0
  %790 = vmatpush.bf16.msra.mxu0 0
  %791 = vmatpush.bf16.msra.mxu0 0
  %792 = vmatpush.bf16.msra.mxu0 0
  %793 = vmatpush.bf16.msra.mxu0 %v769
  %794 = vmatmul.bf16.gmra.mxu0 %v766
  %v795 = vpop.f32.mrf.mxu0
  %v796 = vadd.f32 0.0, %v795
  %v797 = vpop.f32.mrf.mxu0
  %798 = vdwg.mxu0
  %799 = vmatpush.bf16.msra.mxu0 0
  %800 = vmatpush.bf16.msra.mxu0 0
  %801 = vmatpush.bf16.msra.mxu0 0
  %802 = vmatpush.bf16.msra.mxu0 0
  %803 = vmatpush.bf16.msra.mxu0 0
  %804 = vmatpush.bf16.msra.mxu0 0
  %805 = vmatpush.bf16.msra.mxu0 0
  %806 = vmatpush.bf16.msra.mxu0 %v772
  %807 = vmatmul.bf16.gmra.mxu0 %v766
  %v808 = vpop.f32.mrf.mxu0
  %v809 = vadd.f32 0.0, %v808
  %v810 = vpop.f32.mrf.mxu0
  %811 = vdwg.mxu0
  %812 = vmatpush.bf16.msra.mxu0 0
  %813 = vmatpush.bf16.msra.mxu0 0
  %814 = vmatpush.bf16.msra.mxu0 0
  %815 = vmatpush.bf16.msra.mxu0 0
  %816 = vmatpush.bf16.msra.mxu0 0
  %817 = vmatpush.bf16.msra.mxu0 0
  %818 = vmatpush.bf16.msra.mxu0 0
  %819 = vmatpush.bf16.msra.mxu0 %v775
  %820 = vmatmul.bf16.gmra.mxu0 %v766
  %v821 = vpop.f32.mrf.mxu0
  %v822 = vadd.f32 0.0, %v821
  %v823 = vpop.f32.mrf.mxu0
  %824 = vdwg.mxu0
  %825 = vmatpush.bf16.msra.mxu0 0
  %826 = vmatpush.bf16.msra.mxu0 0
  %827 = vmatpush.bf16.msra.mxu0 0
  %828 = vmatpush.bf16.msra.mxu0 0
  %829 = vmatpush.bf16.msra.mxu0 0
  %830 = vmatpush.bf16.msra.mxu0 0
  %831 = vmatpush.bf16.msra.mxu0 0
  %832 = vmatpush.bf16.msra.mxu0 %v778
  %833 = vmatmul.bf16.gmra.mxu0 %v766
  %v834 = vpop.f32.mrf.mxu0
  %v835 = vadd.f32 0.0, %v834
  %v836 = vpop.f32.mrf.mxu0
  %837 = vdwg.mxu0
  %838 = vmatpush.bf16.msra.mxu0 0
  %839 = vmatpush.bf16.msra.mxu0 0
  %840 = vmatpush.bf16.msra.mxu0 0
  %841 = vmatpush.bf16.msra.mxu0 0
  %842 = vmatpush.bf16.msra.mxu0 0
  %843 = vmatpush.bf16.msra.mxu0 0
  %844 = vmatpush.bf16.msra.mxu0 0
  %845 = vmatpush.bf16.msra.mxu0 %v781
  %846 = vmatmul.bf16.gmra.mxu0 %v766
  %v847 = vpop.f32.mrf.mxu0
  %v848 = vadd.f32 0.0, %v847
  %v849 = vpop.f32.mrf.mxu0
  %850 = vdwg.mxu0
  %851 = vmatpush.bf16.msra.mxu0 0
  %852 = vmatpush.bf16.msra.mxu0 0
  %853 = vmatpush.bf16.msra.mxu0 0
  %854 = vmatpush.bf16.msra.mxu0 0
  %855 = vmatpush.bf16.msra.mxu0 0
  %856 = vmatpush.bf16.msra.mxu0 0
  %857 = vmatpush.bf16.msra.mxu0 0
  %858 = vmatpush.bf16.msra.mxu0 %v784
  %859 = vmatmul.bf16.gmra.mxu0 %v766
  %v860 = vpop.f32.mrf.mxu0
  %v861 = vadd.f32 0.0, %v860
  %v862 = vpop.f32.mrf.mxu0
  %863 = vdwg.mxu0
  %v864 = vadd.f32 %v739, %v796
  %v865 = vadd.f32 %v740, %v809
  %v866 = vadd.f32 %v741, %v822
  %v867 = vadd.f32 %v742, %v835
  %v868 = vadd.f32 %v743, %v848
  %v869 = vadd.f32 %v744, %v861
  %v870 = vld [vmem:[#allocation2 + $0x4] sm:$0xff]
  %v871 = vld [vmem:[#allocation2 + $0xc] sm:$0xff]
  %v872 = vld [vmem:[#allocation2 + $0x14] sm:$0xff]
  %v873 = vld [vmem:[#allocation2 + $0x1c] sm:$0xf]
  %s874 = scalar_lea.vmem %s5, 10
  %v875 = vld [vmem:[%s874] sm:$0x3]
  %v880 = vunpack.c.l.b16 %v870
  %v881 = vunpack.c.h.b16 %v870
  %v882 = vunpack.c.l.b16 %v871
  %v883 = vunpack.c.h.b16 %v871
  %v884 = vunpack.c.l.b16 %v872
  %v885 = vunpack.c.h.b16 %v872
  %v886 = vunpack.c.l.b16 %v873
  %v887 = vpack.c.b16 %v880, %v880
  %v888 = vpack.c.b16 %v881, %v881
  %v889 = vpack.c.b16 %v882, %v882
  %v890 = vpack.c.b16 %v883, %v883
  %v891 = vpack.c.b16 %v884, %v884
  %v892 = vpack.c.b16 %v885, %v885
  %v893 = vpack.c.b16 %v886, %v886
  %894 = vrot.lane.b32.xlu0 %v887, 127
  %v895 = vpop.permute.xlu0 %894
  %896 = vrot.lane.b32.xlu0 %v888, 127
  %v897 = vpop.permute.xlu0 %896
  %898 = vrot.lane.b32.xlu0 %v889, 127
  %v899 = vpop.permute.xlu0 %898
  %900 = vrot.lane.b32.xlu0 %v890, 127
  %v901 = vpop.permute.xlu0 %900
  %902 = vrot.lane.b32.xlu0 %v891, 127
  %v903 = vpop.permute.xlu0 %902
  %904 = vrot.lane.b32.xlu0 %v892, 127
  %v905 = vpop.permute.xlu0 %904
  %906 = vrot.lane.b32.xlu0 %v893, 127
  %v907 = vpop.permute.xlu0 %906
  %vm908 = vcmask 1039360
  %v909 = vsel %vm908, %v895, %v897
  %v910 = vsel %vm908, %v897, %v899
  %v911 = vsel %vm908, %v899, %v901
  %v912 = vsel %vm908, %v901, %v903
  %v913 = vsel %vm908, %v903, %v905
  %v914 = vsel %vm908, %v905, %v907
  %v916 = vsel %vm254, %v875, 0
  %v919 = vsel %vm258, %v909, 0
  %v922 = vsel %vm258, %v910, 0
  %v925 = vsel %vm258, %v911, 0
  %v928 = vsel %vm258, %v912, 0
  %v931 = vsel %vm258, %v913, 0
  %v934 = vsel %vm258, %v914, 0
  %936 = vmatpush.bf16.msra.mxu0 0
  %937 = vmatpush.bf16.msra.mxu0 0
  %938 = vmatpush.bf16.msra.mxu0 0
  %939 = vmatpush.bf16.msra.mxu0 0
  %940 = vmatpush.bf16.msra.mxu0 0
  %941 = vmatpush.bf16.msra.mxu0 0
  %942 = vmatpush.bf16.msra.mxu0 0
  %943 = vmatpush.bf16.msra.mxu0 %v919
  %944 = vmatmul.bf16.gmra.mxu0 %v916
  %v945 = vpop.f32.mrf.mxu0
  %v946 = vadd.f32 0.0, %v945
  %v947 = vpop.f32.mrf.mxu0
  %948 = vdwg.mxu0
  %949 = vmatpush.bf16.msra.mxu0 0
  %950 = vmatpush.bf16.msra.mxu0 0
  %951 = vmatpush.bf16.msra.mxu0 0
  %952 = vmatpush.bf16.msra.mxu0 0
  %953 = vmatpush.bf16.msra.mxu0 0
  %954 = vmatpush.bf16.msra.mxu0 0
  %955 = vmatpush.bf16.msra.mxu0 0
  %956 = vmatpush.bf16.msra.mxu0 %v922
  %957 = vmatmul.bf16.gmra.mxu0 %v916
  %v958 = vpop.f32.mrf.mxu0
  %v959 = vadd.f32 0.0, %v958
  %v960 = vpop.f32.mrf.mxu0
  %961 = vdwg.mxu0
  %962 = vmatpush.bf16.msra.mxu0 0
  %963 = vmatpush.bf16.msra.mxu0 0
  %964 = vmatpush.bf16.msra.mxu0 0
  %965 = vmatpush.bf16.msra.mxu0 0
  %966 = vmatpush.bf16.msra.mxu0 0
  %967 = vmatpush.bf16.msra.mxu0 0
  %968 = vmatpush.bf16.msra.mxu0 0
  %969 = vmatpush.bf16.msra.mxu0 %v925
  %970 = vmatmul.bf16.gmra.mxu0 %v916
  %v971 = vpop.f32.mrf.mxu0
  %v972 = vadd.f32 0.0, %v971
  %v973 = vpop.f32.mrf.mxu0
  %974 = vdwg.mxu0
  %975 = vmatpush.bf16.msra.mxu0 0
  %976 = vmatpush.bf16.msra.mxu0 0
  %977 = vmatpush.bf16.msra.mxu0 0
  %978 = vmatpush.bf16.msra.mxu0 0
  %979 = vmatpush.bf16.msra.mxu0 0
  %980 = vmatpush.bf16.msra.mxu0 0
  %981 = vmatpush.bf16.msra.mxu0 0
  %982 = vmatpush.bf16.msra.mxu0 %v928
  %983 = vmatmul.bf16.gmra.mxu0 %v916
  %v984 = vpop.f32.mrf.mxu0
  %v985 = vadd.f32 0.0, %v984
  %v986 = vpop.f32.mrf.mxu0
  %987 = vdwg.mxu0
  %988 = vmatpush.bf16.msra.mxu0 0
  %989 = vmatpush.bf16.msra.mxu0 0
  %990 = vmatpush.bf16.msra.mxu0 0
  %991 = vmatpush.bf16.msra.mxu0 0
  %992 = vmatpush.bf16.msra.mxu0 0
  %993 = vmatpush.bf16.msra.mxu0 0
  %994 = vmatpush.bf16.msra.mxu0 0
  %995 = vmatpush.bf16.msra.mxu0 %v931
  %996 = vmatmul.bf16.gmra.mxu0 %v916
  %v997 = vpop.f32.mrf.mxu0
  %v998 = vadd.f32 0.0, %v997
  %v999 = vpop.f32.mrf.mxu0
  %1000 = vdwg.mxu0
  %1001 = vmatpush.bf16.msra.mxu0 0
  %1002 = vmatpush.bf16.msra.mxu0 0
  %1003 = vmatpush.bf16.msra.mxu0 0
  %1004 = vmatpush.bf16.msra.mxu0 0
  %1005 = vmatpush.bf16.msra.mxu0 0
  %1006 = vmatpush.bf16.msra.mxu0 0
  %1007 = vmatpush.bf16.msra.mxu0 0
  %1008 = vmatpush.bf16.msra.mxu0 %v934
  %1009 = vmatmul.bf16.gmra.mxu0 %v916
  %v1010 = vpop.f32.mrf.mxu0
  %v1011 = vadd.f32 0.0, %v1010
  %v1012 = vpop.f32.mrf.mxu0
  %1013 = vdwg.mxu0
  %v1014 = vadd.f32 %v864, %v946
  %v1015 = vadd.f32 %v865, %v959
  %v1016 = vadd.f32 %v866, %v972
  %v1017 = vadd.f32 %v867, %v985
  %v1018 = vadd.f32 %v868, %v998
  %v1019 = vadd.f32 %v869, %v1011
  %s1020 = scalar_lea.vmem %s5, 12
  %v1021 = vld [vmem:[%s1020] sm:$0x3]
  %1022 = vrot.lane.b32.xlu0 %v887, 111
  %v1023 = vpop.permute.xlu0 %1022
  %1024 = vrot.lane.b32.xlu0 %v888, 111
  %v1025 = vpop.permute.xlu0 %1024
  %1026 = vrot.lane.b32.xlu0 %v889, 111
  %v1027 = vpop.permute.xlu0 %1026
  %1028 = vrot.lane.b32.xlu0 %v890, 111
  %v1029 = vpop.permute.xlu0 %1028
  %1030 = vrot.lane.b32.xlu0 %v891, 111
  %v1031 = vpop.permute.xlu0 %1030
  %1032 = vrot.lane.b32.xlu0 %v892, 111
  %v1033 = vpop.permute.xlu0 %1032
  %1034 = vrot.lane.b32.xlu0 %v893, 111
  %v1035 = vpop.permute.xlu0 %1034
  %vm1036 = vcmask 908288
  %v1037 = vsel %vm1036, %v1023, %v1025
  %v1038 = vsel %vm1036, %v1025, %v1027
  %v1039 = vsel %vm1036, %v1027, %v1029
  %v1040 = vsel %vm1036, %v1029, %v1031
  %v1041 = vsel %vm1036, %v1031, %v1033
  %v1042 = vsel %vm1036, %v1033, %v1035
  %v1044 = vsel %vm254, %v1021, 0
  %v1047 = vsel %vm258, %v1037, 0
  %v1050 = vsel %vm258, %v1038, 0
  %v1053 = vsel %vm258, %v1039, 0
  %v1056 = vsel %vm258, %v1040, 0
  %v1059 = vsel %vm258, %v1041, 0
  %v1062 = vsel %vm258, %v1042, 0
  %1064 = vmatpush.bf16.msra.mxu0 0
  %1065 = vmatpush.bf16.msra.mxu0 0
  %1066 = vmatpush.bf16.msra.mxu0 0
  %1067 = vmatpush.bf16.msra.mxu0 0
  %1068 = vmatpush.bf16.msra.mxu0 0
  %1069 = vmatpush.bf16.msra.mxu0 0
  %1070 = vmatpush.bf16.msra.mxu0 0
  %1071 = vmatpush.bf16.msra.mxu0 %v1047
  %1072 = vmatmul.bf16.gmra.mxu0 %v1044
  %v1073 = vpop.f32.mrf.mxu0
  %v1074 = vadd.f32 0.0, %v1073
  %v1075 = vpop.f32.mrf.mxu0
  %1076 = vdwg.mxu0
  %1077 = vmatpush.bf16.msra.mxu0 0
  %1078 = vmatpush.bf16.msra.mxu0 0
  %1079 = vmatpush.bf16.msra.mxu0 0
  %1080 = vmatpush.bf16.msra.mxu0 0
  %1081 = vmatpush.bf16.msra.mxu0 0
  %1082 = vmatpush.bf16.msra.mxu0 0
  %1083 = vmatpush.bf16.msra.mxu0 0
  %1084 = vmatpush.bf16.msra.mxu0 %v1050
  %1085 = vmatmul.bf16.gmra.mxu0 %v1044
  %v1086 = vpop.f32.mrf.mxu0
  %v1087 = vadd.f32 0.0, %v1086
  %v1088 = vpop.f32.mrf.mxu0
  %1089 = vdwg.mxu0
  %1090 = vmatpush.bf16.msra.mxu0 0
  %1091 = vmatpush.bf16.msra.mxu0 0
  %1092 = vmatpush.bf16.msra.mxu0 0
  %1093 = vmatpush.bf16.msra.mxu0 0
  %1094 = vmatpush.bf16.msra.mxu0 0
  %1095 = vmatpush.bf16.msra.mxu0 0
  %1096 = vmatpush.bf16.msra.mxu0 0
  %1097 = vmatpush.bf16.msra.mxu0 %v1053
  %1098 = vmatmul.bf16.gmra.mxu0 %v1044
  %v1099 = vpop.f32.mrf.mxu0
  %v1100 = vadd.f32 0.0, %v1099
  %v1101 = vpop.f32.mrf.mxu0
  %1102 = vdwg.mxu0
  %1103 = vmatpush.bf16.msra.mxu0 0
  %1104 = vmatpush.bf16.msra.mxu0 0
  %1105 = vmatpush.bf16.msra.mxu0 0
  %1106 = vmatpush.bf16.msra.mxu0 0
  %1107 = vmatpush.bf16.msra.mxu0 0
  %1108 = vmatpush.bf16.msra.mxu0 0
  %1109 = vmatpush.bf16.msra.mxu0 0
  %1110 = vmatpush.bf16.msra.mxu0 %v1056
  %1111 = vmatmul.bf16.gmra.mxu0 %v1044
  %v1112 = vpop.f32.mrf.mxu0
  %v1113 = vadd.f32 0.0, %v1112
  %v1114 = vpop.f32.mrf.mxu0
  %1115 = vdwg.mxu0
  %1116 = vmatpush.bf16.msra.mxu0 0
  %1117 = vmatpush.bf16.msra.mxu0 0
  %1118 = vmatpush.bf16.msra.mxu0 0
  %1119 = vmatpush.bf16.msra.mxu0 0
  %1120 = vmatpush.bf16.msra.mxu0 0
  %1121 = vmatpush.bf16.msra.mxu0 0
  %1122 = vmatpush.bf16.msra.mxu0 0
  %1123 = vmatpush.bf16.msra.mxu0 %v1059
  %1124 = vmatmul.bf16.gmra.mxu0 %v1044
  %v1125 = vpop.f32.mrf.mxu0
  %v1126 = vadd.f32 0.0, %v1125
  %v1127 = vpop.f32.mrf.mxu0
  %1128 = vdwg.mxu0
  %1129 = vmatpush.bf16.msra.mxu0 0
  %1130 = vmatpush.bf16.msra.mxu0 0
  %1131 = vmatpush.bf16.msra.mxu0 0
  %1132 = vmatpush.bf16.msra.mxu0 0
  %1133 = vmatpush.bf16.msra.mxu0 0
  %1134 = vmatpush.bf16.msra.mxu0 0
  %1135 = vmatpush.bf16.msra.mxu0 0
  %1136 = vmatpush.bf16.msra.mxu0 %v1062
  %1137 = vmatmul.bf16.gmra.mxu0 %v1044
  %v1138 = vpop.f32.mrf.mxu0
  %v1139 = vadd.f32 0.0, %v1138
  %v1140 = vpop.f32.mrf.mxu0
  %1141 = vdwg.mxu0
  %v1142 = vadd.f32 %v1014, %v1074
  %v1143 = vadd.f32 %v1015, %v1087
  %v1144 = vadd.f32 %v1016, %v1100
  %v1145 = vadd.f32 %v1017, %v1113
  %v1146 = vadd.f32 %v1018, %v1126
  %v1147 = vadd.f32 %v1019, %v1139
  %s1148 = scalar_lea.vmem %s5, 14
  %v1149 = vld [vmem:[%s1148] sm:$0x3]
  %1150 = vrot.lane.b32.xlu0 %v887, 110
  %v1151 = vpop.permute.xlu0 %1150
  %1152 = vrot.lane.b32.xlu0 %v888, 110
  %v1153 = vpop.permute.xlu0 %1152
  %1154 = vrot.lane.b32.xlu0 %v889, 110
  %v1155 = vpop.permute.xlu0 %1154
  %1156 = vrot.lane.b32.xlu0 %v890, 110
  %v1157 = vpop.permute.xlu0 %1156
  %1158 = vrot.lane.b32.xlu0 %v891, 110
  %v1159 = vpop.permute.xlu0 %1158
  %1160 = vrot.lane.b32.xlu0 %v892, 110
  %v1161 = vpop.permute.xlu0 %1160
  %1162 = vrot.lane.b32.xlu0 %v893, 110
  %v1163 = vpop.permute.xlu0 %1162
  %vm1164 = vcmask 900096
  %v1165 = vsel %vm1164, %v1151, %v1153
  %v1166 = vsel %vm1164, %v1153, %v1155
  %v1167 = vsel %vm1164, %v1155, %v1157
  %v1168 = vsel %vm1164, %v1157, %v1159
  %v1169 = vsel %vm1164, %v1159, %v1161
  %v1170 = vsel %vm1164, %v1161, %v1163
  %v1172 = vsel %vm254, %v1149, 0
  %v1175 = vsel %vm258, %v1165, 0
  %v1178 = vsel %vm258, %v1166, 0
  %v1181 = vsel %vm258, %v1167, 0
  %v1184 = vsel %vm258, %v1168, 0
  %v1187 = vsel %vm258, %v1169, 0
  %v1190 = vsel %vm258, %v1170, 0
  %1192 = vmatpush.bf16.msra.mxu0 0
  %1193 = vmatpush.bf16.msra.mxu0 0
  %1194 = vmatpush.bf16.msra.mxu0 0
  %1195 = vmatpush.bf16.msra.mxu0 0
  %1196 = vmatpush.bf16.msra.mxu0 0
  %1197 = vmatpush.bf16.msra.mxu0 0
  %1198 = vmatpush.bf16.msra.mxu0 0
  %1199 = vmatpush.bf16.msra.mxu0 %v1175
  %1200 = vmatmul.bf16.gmra.mxu0 %v1172
  %v1201 = vpop.f32.mrf.mxu0
  %v1202 = vadd.f32 0.0, %v1201
  %v1203 = vpop.f32.mrf.mxu0
  %1204 = vdwg.mxu0
  %1205 = vmatpush.bf16.msra.mxu0 0
  %1206 = vmatpush.bf16.msra.mxu0 0
  %1207 = vmatpush.bf16.msra.mxu0 0
  %1208 = vmatpush.bf16.msra.mxu0 0
  %1209 = vmatpush.bf16.msra.mxu0 0
  %1210 = vmatpush.bf16.msra.mxu0 0
  %1211 = vmatpush.bf16.msra.mxu0 0
  %1212 = vmatpush.bf16.msra.mxu0 %v1178
  %1213 = vmatmul.bf16.gmra.mxu0 %v1172
  %v1214 = vpop.f32.mrf.mxu0
  %v1215 = vadd.f32 0.0, %v1214
  %v1216 = vpop.f32.mrf.mxu0
  %1217 = vdwg.mxu0
  %1218 = vmatpush.bf16.msra.mxu0 0
  %1219 = vmatpush.bf16.msra.mxu0 0
  %1220 = vmatpush.bf16.msra.mxu0 0
  %1221 = vmatpush.bf16.msra.mxu0 0
  %1222 = vmatpush.bf16.msra.mxu0 0
  %1223 = vmatpush.bf16.msra.mxu0 0
  %1224 = vmatpush.bf16.msra.mxu0 0
  %1225 = vmatpush.bf16.msra.mxu0 %v1181
  %1226 = vmatmul.bf16.gmra.mxu0 %v1172
  %v1227 = vpop.f32.mrf.mxu0
  %v1228 = vadd.f32 0.0, %v1227
  %v1229 = vpop.f32.mrf.mxu0
  %1230 = vdwg.mxu0
  %1231 = vmatpush.bf16.msra.mxu0 0
  %1232 = vmatpush.bf16.msra.mxu0 0
  %1233 = vmatpush.bf16.msra.mxu0 0
  %1234 = vmatpush.bf16.msra.mxu0 0
  %1235 = vmatpush.bf16.msra.mxu0 0
  %1236 = vmatpush.bf16.msra.mxu0 0
  %1237 = vmatpush.bf16.msra.mxu0 0
  %1238 = vmatpush.bf16.msra.mxu0 %v1184
  %1239 = vmatmul.bf16.gmra.mxu0 %v1172
  %v1240 = vpop.f32.mrf.mxu0
  %v1241 = vadd.f32 0.0, %v1240
  %v1242 = vpop.f32.mrf.mxu0
  %1243 = vdwg.mxu0
  %1244 = vmatpush.bf16.msra.mxu0 0
  %1245 = vmatpush.bf16.msra.mxu0 0
  %1246 = vmatpush.bf16.msra.mxu0 0
  %1247 = vmatpush.bf16.msra.mxu0 0
  %1248 = vmatpush.bf16.msra.mxu0 0
  %1249 = vmatpush.bf16.msra.mxu0 0
  %1250 = vmatpush.bf16.msra.mxu0 0
  %1251 = vmatpush.bf16.msra.mxu0 %v1187
  %1252 = vmatmul.bf16.gmra.mxu0 %v1172
  %v1253 = vpop.f32.mrf.mxu0
  %v1254 = vadd.f32 0.0, %v1253
  %v1255 = vpop.f32.mrf.mxu0
  %1256 = vdwg.mxu0
  %1257 = vmatpush.bf16.msra.mxu0 0
  %1258 = vmatpush.bf16.msra.mxu0 0
  %1259 = vmatpush.bf16.msra.mxu0 0
  %1260 = vmatpush.bf16.msra.mxu0 0
  %1261 = vmatpush.bf16.msra.mxu0 0
  %1262 = vmatpush.bf16.msra.mxu0 0
  %1263 = vmatpush.bf16.msra.mxu0 0
  %1264 = vmatpush.bf16.msra.mxu0 %v1190
  %1265 = vmatmul.bf16.gmra.mxu0 %v1172
  %v1266 = vpop.f32.mrf.mxu0
  %v1267 = vadd.f32 0.0, %v1266
  %v1268 = vpop.f32.mrf.mxu0
  %1269 = vdwg.mxu0
  %v1270 = vadd.f32 %v1142, %v1202
  %v1271 = vadd.f32 %v1143, %v1215
  %v1272 = vadd.f32 %v1144, %v1228
  %v1273 = vadd.f32 %v1145, %v1241
  %v1274 = vadd.f32 %v1146, %v1254
  %v1275 = vadd.f32 %v1147, %v1267
  %s1276 = scalar_lea.vmem %s5, 16
  %v1277 = vld [vmem:[%s1276] sm:$0x3]
  %1278 = vrot.lane.b32.xlu0 %v887, 109
  %v1279 = vpop.permute.xlu0 %1278
  %1280 = vrot.lane.b32.xlu0 %v888, 109
  %v1281 = vpop.permute.xlu0 %1280
  %1282 = vrot.lane.b32.xlu0 %v889, 109
  %v1283 = vpop.permute.xlu0 %1282
  %1284 = vrot.lane.b32.xlu0 %v890, 109
  %v1285 = vpop.permute.xlu0 %1284
  %1286 = vrot.lane.b32.xlu0 %v891, 109
  %v1287 = vpop.permute.xlu0 %1286
  %1288 = vrot.lane.b32.xlu0 %v892, 109
  %v1289 = vpop.permute.xlu0 %1288
  %1290 = vrot.lane.b32.xlu0 %v893, 109
  %v1291 = vpop.permute.xlu0 %1290
  %vm1292 = vcmask 891904
  %v1293 = vsel %vm1292, %v1279, %v1281
  %v1294 = vsel %vm1292, %v1281, %v1283
  %v1295 = vsel %vm1292, %v1283, %v1285
  %v1296 = vsel %vm1292, %v1285, %v1287
  %v1297 = vsel %vm1292, %v1287, %v1289
  %v1298 = vsel %vm1292, %v1289, %v1291
  %v1300 = vsel %vm254, %v1277, 0
  %v1303 = vsel %vm258, %v1293, 0
  %v1306 = vsel %vm258, %v1294, 0
  %v1309 = vsel %vm258, %v1295, 0
  %v1312 = vsel %vm258, %v1296, 0
  %v1315 = vsel %vm258, %v1297, 0
  %v1318 = vsel %vm258, %v1298, 0
  %1320 = vmatpush.bf16.msra.mxu0 0
  %1321 = vmatpush.bf16.msra.mxu0 0
  %1322 = vmatpush.bf16.msra.mxu0 0
  %1323 = vmatpush.bf16.msra.mxu0 0
  %1324 = vmatpush.bf16.msra.mxu0 0
  %1325 = vmatpush.bf16.msra.mxu0 0
  %1326 = vmatpush.bf16.msra.mxu0 0
  %1327 = vmatpush.bf16.msra.mxu0 %v1303
  %1328 = vmatmul.bf16.gmra.mxu0 %v1300
  %v1329 = vpop.f32.mrf.mxu0
  %v1330 = vadd.f32 0.0, %v1329
  %v1331 = vpop.f32.mrf.mxu0
  %1332 = vdwg.mxu0
  %1333 = vmatpush.bf16.msra.mxu0 0
  %1334 = vmatpush.bf16.msra.mxu0 0
  %1335 = vmatpush.bf16.msra.mxu0 0
  %1336 = vmatpush.bf16.msra.mxu0 0
  %1337 = vmatpush.bf16.msra.mxu0 0
  %1338 = vmatpush.bf16.msra.mxu0 0
  %1339 = vmatpush.bf16.msra.mxu0 0
  %1340 = vmatpush.bf16.msra.mxu0 %v1306
  %1341 = vmatmul.bf16.gmra.mxu0 %v1300
  %v1342 = vpop.f32.mrf.mxu0
  %v1343 = vadd.f32 0.0, %v1342
  %v1344 = vpop.f32.mrf.mxu0
  %1345 = vdwg.mxu0
  %1346 = vmatpush.bf16.msra.mxu0 0
  %1347 = vmatpush.bf16.msra.mxu0 0
  %1348 = vmatpush.bf16.msra.mxu0 0
  %1349 = vmatpush.bf16.msra.mxu0 0
  %1350 = vmatpush.bf16.msra.mxu0 0
  %1351 = vmatpush.bf16.msra.mxu0 0
  %1352 = vmatpush.bf16.msra.mxu0 0
  %1353 = vmatpush.bf16.msra.mxu0 %v1309
  %1354 = vmatmul.bf16.gmra.mxu0 %v1300
  %v1355 = vpop.f32.mrf.mxu0
  %v1356 = vadd.f32 0.0, %v1355
  %v1357 = vpop.f32.mrf.mxu0
  %1358 = vdwg.mxu0
  %1359 = vmatpush.bf16.msra.mxu0 0
  %1360 = vmatpush.bf16.msra.mxu0 0
  %1361 = vmatpush.bf16.msra.mxu0 0
  %1362 = vmatpush.bf16.msra.mxu0 0
  %1363 = vmatpush.bf16.msra.mxu0 0
  %1364 = vmatpush.bf16.msra.mxu0 0
  %1365 = vmatpush.bf16.msra.mxu0 0
  %1366 = vmatpush.bf16.msra.mxu0 %v1312
  %1367 = vmatmul.bf16.gmra.mxu0 %v1300
  %v1368 = vpop.f32.mrf.mxu0
  %v1369 = vadd.f32 0.0, %v1368
  %v1370 = vpop.f32.mrf.mxu0
  %1371 = vdwg.mxu0
  %1372 = vmatpush.bf16.msra.mxu0 0
  %1373 = vmatpush.bf16.msra.mxu0 0
  %1374 = vmatpush.bf16.msra.mxu0 0
  %1375 = vmatpush.bf16.msra.mxu0 0
  %1376 = vmatpush.bf16.msra.mxu0 0
  %1377 = vmatpush.bf16.msra.mxu0 0
  %1378 = vmatpush.bf16.msra.mxu0 0
  %1379 = vmatpush.bf16.msra.mxu0 %v1315
  %1380 = vmatmul.bf16.gmra.mxu0 %v1300
  %v1381 = vpop.f32.mrf.mxu0
  %v1382 = vadd.f32 0.0, %v1381
  %v1383 = vpop.f32.mrf.mxu0
  %1384 = vdwg.mxu0
  %1385 = vmatpush.bf16.msra.mxu0 0
  %1386 = vmatpush.bf16.msra.mxu0 0
  %1387 = vmatpush.bf16.msra.mxu0 0
  %1388 = vmatpush.bf16.msra.mxu0 0
  %1389 = vmatpush.bf16.msra.mxu0 0
  %1390 = vmatpush.bf16.msra.mxu0 0
  %1391 = vmatpush.bf16.msra.mxu0 0
  %1392 = vmatpush.bf16.msra.mxu0 %v1318
  %1393 = vmatmul.bf16.gmra.mxu0 %v1300
  %v1394 = vpop.f32.mrf.mxu0
  %v1395 = vadd.f32 0.0, %v1394
  %v1396 = vpop.f32.mrf.mxu0
  %1397 = vdwg.mxu0
  %v1398 = vadd.f32 %v1270, %v1330
  %v1399 = vadd.f32 %v1271, %v1343
  %v1400 = vadd.f32 %v1272, %v1356
  %v1401 = vadd.f32 %v1273, %v1369
  %v1402 = vadd.f32 %v1274, %v1382
  %v1403 = vadd.f32 %v1275, %v1395
  %v1404 = vld [vmem:[%s4] sm:$0x3f]
  %v1406 = vperm.slane %v1404, 0
  %v1407 = vperm.slane %v1404, 1
  %v1408 = vperm.slane %v1404, 2
  %v1409 = vperm.slane %v1404, 3
  %v1410 = vperm.slane %v1404, 4
  %v1411 = vperm.slane %v1404, 5
  %v1418 = vmul.f32 %v1398, %v1406
  %v1419 = vmul.f32 %v1399, %v1407
  %v1420 = vmul.f32 %v1400, %v1408
  %v1421 = vmul.f32 %v1401, %v1409
  %v1422 = vmul.f32 %v1402, %v1410
  %v1423 = vmul.f32 %v1403, %v1411
  %v1424 = vsel %vm258, %v1418, 0.0
  %v1425 = vsel %vm258, %v1419, 0.0
  %v1426 = vadd.f32 %v1424, %v1425
  %v1427 = vsel %vm258, %v1420, 0.0
  %v1428 = vadd.f32 %v1426, %v1427
  %v1429 = vsel %vm258, %v1421, 0.0
  %v1430 = vadd.f32 %v1428, %v1429
  %v1431 = vsel %vm258, %v1422, 0.0
  %v1432 = vadd.f32 %v1430, %v1431
  %v1433 = vsel %vm258, %v1423, 0.0
  %v1434 = vadd.f32 %v1432, %v1433
  %1435 = vadd.xlane.f32.xlu0 %v1434
  %v1436 = vpop.xlane.xlu0 %1435
  %v1437 = vmul.f32 %v1436, 0.001953125
  %v1438 = vsub.f32 %v1398, %v1437
  %v1439 = vsub.f32 %v1399, %v1437
  %v1440 = vsub.f32 %v1400, %v1437
  %v1441 = vsub.f32 %v1401, %v1437
  %v1442 = vsub.f32 %v1402, %v1437
  %v1443 = vsub.f32 %v1403, %v1437
  %v1444 = vmul.f32 %v1438, %v1438
  %v1445 = vmul.f32 %v1439, %v1439
  %v1446 = vmul.f32 %v1440, %v1440
  %v1447 = vmul.f32 %v1441, %v1441
  %v1448 = vmul.f32 %v1442, %v1442
  %v1449 = vmul.f32 %v1443, %v1443
  %v1450 = vmul.f32 %v1444, %v1406
  %v1451 = vmul.f32 %v1445, %v1407
  %v1452 = vmul.f32 %v1446, %v1408
  %v1453 = vmul.f32 %v1447, %v1409
  %v1454 = vmul.f32 %v1448, %v1410
  %v1455 = vmul.f32 %v1449, %v1411
  %v1456 = vsel %vm258, %v1450, 0.0
  %v1457 = vsel %vm258, %v1451, 0.0
  %v1458 = vadd.f32 %v1456, %v1457
  %v1459 = vsel %vm258, %v1452, 0.0
  %v1460 = vadd.f32 %v1458, %v1459
  %v1461 = vsel %vm258, %v1453, 0.0
  %v1462 = vadd.f32 %v1460, %v1461
  %v1463 = vsel %vm258, %v1454, 0.0
  %v1464 = vadd.f32 %v1462, %v1463
  %v1465 = vsel %vm258, %v1455, 0.0
  %v1466 = vadd.f32 %v1464, %v1465
  %1467 = vadd.xlane.f32.xlu0 %v1466
  %v1468 = vpop.xlane.xlu0 %1467
  %v1469 = vmul.f32 %v1468, 0.001953125
  %v1470 = vadd.f32 %v1469, 1e-05
  %v1471 = vrsqrt.pop %v1470
  %v1472 = vmul.f32 %v1471, %v1470
  %v1473 = vmul.f32 %v1472, %v1471
  %v1474 = vmul.f32 0.5, %v1473
  %v1475 = vsub.f32 1.5, %v1474
  %v1476 = vmul.f32 %v1471, %v1475
  %vm1477 = vweird.f32 %v1470
  %vm1478 = vweird.f32 %v1471
  %vm1479 = vmor %vm1477, %vm1478
  %v1480 = vsel %vm1479, %v1471, %v1476
  %v1481 = vmul.f32 %v1438, %v1480
  %v1482 = vmul.f32 %v1439, %v1480
  %v1483 = vmul.f32 %v1440, %v1480
  %v1484 = vmul.f32 %v1441, %v1480
  %v1485 = vmul.f32 %v1442, %v1480
  %v1486 = vmul.f32 %v1443, %v1480
  %v1487 = vld [vmem:[%s7] sm:$0xf]
  %1489 = vset.pattern.permute.xlu0 0
  %1490 = vperm.xlu0 %1489, %v1487
  %v1491 = vpop.permute.xlu0 %1490
  %v1493 = vmul.f32 %v1481, %v1491
  %v1494 = vmul.f32 %v1482, %v1491
  %v1495 = vmul.f32 %v1483, %v1491
  %v1496 = vmul.f32 %v1484, %v1491
  %v1497 = vmul.f32 %v1485, %v1491
  %v1498 = vmul.f32 %v1486, %v1491
  %v1499 = vld [vmem:[%s8] sm:$0xf]
  %1501 = vset.pattern.permute.xlu0 0
  %1502 = vperm.xlu0 %1501, %v1499
  %v1503 = vpop.permute.xlu0 %1502
  %v1505 = vadd.f32 %v1493, %v1503
  %v1506 = vadd.f32 %v1494, %v1503
  %v1507 = vadd.f32 %v1495, %v1503
  %v1508 = vadd.f32 %v1496, %v1503
  %v1509 = vadd.f32 %v1497, %v1503
  %v1510 = vadd.f32 %v1498, %v1503
  %v1511 = vmax.f32 %v1505, 0.0
  %v1512 = vmax.f32 %v1506, 0.0
  %v1513 = vmax.f32 %v1507, 0.0
  %v1514 = vmax.f32 %v1508, 0.0
  %v1515 = vmax.f32 %v1509, 0.0
  %v1516 = vmax.f32 %v1510, 0.0
  %v1517 = vmul.f32 %v1511, %v1406
  %v1518 = vmul.f32 %v1512, %v1407
  %v1519 = vmul.f32 %v1513, %v1408
  %v1520 = vmul.f32 %v1514, %v1409
  %v1521 = vmul.f32 %v1515, %v1410
  %v1522 = vmul.f32 %v1516, %v1411
  %v1523 = vpack.c.bf16 %v1518, %v1517
  %v1524 = vpack.c.bf16 %v1520, %v1519
  %v1525 = vpack.c.bf16 %v1522, %v1521
  %v1529 = vrot.slane %v1523, 2
  %v1530 = vrot.slane %v1524, 4
  %v1531 = vrot.slane %v1524, 6
  %v1532 = vrot.slane %v1525, 2
  %vm1533 = vcmask 1041408
  %v1536 = vsel %vm1533, %v1523, %v1529
  %vm1537 = vcmask 1045508
  %v1540 = vsel %vm1537, %v1530, %v1531
  %v1541 = vsel %vm258, %v1536, %v1540
  %v1544 = vsel %vm1533, %v1525, %v1532
  %1547 = vst [vmem:[#allocation3 + $0x2] sm:$0xff] %v1541
  %1548 = vst [vmem:[#allocation3 + $0xa] sm:$0xf] %v1544
  %v1549 = vld [vmem:[%s10] sm:$0xf]
  %1551 = vset.pattern.permute.xlu0 0
  %1552 = vperm.xlu0 %1551, %v1549
  %v1553 = vpop.permute.xlu0 %1552
  %v1555 = vld [vmem:[#allocation3] sm:$0xff]
  %v1556 = vld [vmem:[#allocation3 + $0x8] sm:$0x3f]
  %v1557 = vld [vmem:[%s9] sm:$0x3]
  %1559 = vst [vmem:[#allocation1] ss:$4 sm:$0xff] %v1555
  %s1561 = scalar_lea.vmem [#allocation1], 32
  %1562 = vst [vmem:[%s1561] ss:$4 sm:$0xff] %v1556
  %v1563 = vld.sshfl [vmem:[#allocation1] sm:$0xff pattern:$0x73625140]
  %v1565 = vld.sshfl [vmem:[#allocation1 + $0x8] sm:$0xff pattern:$0x73625140]
  %v1567 = vld.sshfl [vmem:[#allocation1 + $0x10] sm:$0xff pattern:$0x73625140]
  %v1569 = vld.sshfl [vmem:[#allocation1 + $0x18] sm:$0xff pattern:$0x73625140]
  %v1571 = vld.sshfl [vmem:[#allocation1 + $0x20] sm:$0xff pattern:$0x73625140]
  %v1573 = vld.sshfl [vmem:[#allocation1 + $0x28] sm:$0xff pattern:$0x73625140]
  %v1575 = vld.sshfl [vmem:[#allocation1 + $0x30] sm:$0xff pattern:$0x73625140]
  %1577 = vrot.lane.b32.xlu0 %v1563, 19
  %v1578 = vpop.permute.xlu0 %1577
  %1579 = vrot.lane.b32.xlu0 %v1565, 19
  %v1580 = vpop.permute.xlu0 %1579
  %1581 = vrot.lane.b32.xlu0 %v1567, 19
  %v1582 = vpop.permute.xlu0 %1581
  %1583 = vrot.lane.b32.xlu0 %v1569, 19
  %v1584 = vpop.permute.xlu0 %1583
  %1585 = vrot.lane.b32.xlu0 %v1571, 19
  %v1586 = vpop.permute.xlu0 %1585
  %1587 = vrot.lane.b32.xlu0 %v1573, 19
  %v1588 = vpop.permute.xlu0 %1587
  %1589 = vrot.lane.b32.xlu0 %v1575, 19
  %v1590 = vpop.permute.xlu0 %1589
  %v1591 = vsel %vm247, %v1578, %v1580
  %v1592 = vsel %vm247, %v1580, %v1582
  %v1593 = vsel %vm247, %v1582, %v1584
  %v1594 = vsel %vm247, %v1584, %v1586
  %v1595 = vsel %vm247, %v1586, %v1588
  %v1596 = vsel %vm247, %v1588, %v1590
  %vm1597 = vcmask 31744
  %v1599 = vsel %vm1597, %v1557, 0
  %v1602 = vsel %vm1533, %v1591, 0
  %v1605 = vsel %vm1533, %v1592, 0
  %v1608 = vsel %vm1533, %v1593, 0
  %v1611 = vsel %vm1533, %v1594, 0
  %v1614 = vsel %vm1533, %v1595, 0
  %v1617 = vsel %vm1533, %v1596, 0
  %1619 = vmatpush.bf16.msra.mxu0 0
  %1620 = vmatpush.bf16.msra.mxu0 0
  %1621 = vmatpush.bf16.msra.mxu0 0
  %1622 = vmatpush.bf16.msra.mxu0 0
  %1623 = vmatpush.bf16.msra.mxu0 0
  %1624 = vmatpush.bf16.msra.mxu0 0
  %1625 = vmatpush.bf16.msra.mxu0 0
  %1626 = vmatpush.bf16.msra.mxu0 %v1602
  %1627 = vmatmul.bf16.gmra.mxu0 %v1599
  %v1628 = vpop.f32.mrf.mxu0
  %v1629 = vadd.f32 0.0, %v1628
  %v1630 = vpop.f32.mrf.mxu0
  %1631 = vdwg.mxu0
  %1632 = vmatpush.bf16.msra.mxu0 0
  %1633 = vmatpush.bf16.msra.mxu0 0
  %1634 = vmatpush.bf16.msra.mxu0 0
  %1635 = vmatpush.bf16.msra.mxu0 0
  %1636 = vmatpush.bf16.msra.mxu0 0
  %1637 = vmatpush.bf16.msra.mxu0 0
  %1638 = vmatpush.bf16.msra.mxu0 0
  %1639 = vmatpush.bf16.msra.mxu0 %v1605
  %1640 = vmatmul.bf16.gmra.mxu0 %v1599
  %v1641 = vpop.f32.mrf.mxu0
  %v1642 = vadd.f32 0.0, %v1641
  %v1643 = vpop.f32.mrf.mxu0
  %1644 = vdwg.mxu0
  %1645 = vmatpush.bf16.msra.mxu0 0
  %1646 = vmatpush.bf16.msra.mxu0 0
  %1647 = vmatpush.bf16.msra.mxu0 0
  %1648 = vmatpush.bf16.msra.mxu0 0
  %1649 = vmatpush.bf16.msra.mxu0 0
  %1650 = vmatpush.bf16.msra.mxu0 0
  %1651 = vmatpush.bf16.msra.mxu0 0
  %1652 = vmatpush.bf16.msra.mxu0 %v1608
  %1653 = vmatmul.bf16.gmra.mxu0 %v1599
  %v1654 = vpop.f32.mrf.mxu0
  %v1655 = vadd.f32 0.0, %v1654
  %v1656 = vpop.f32.mrf.mxu0
  %1657 = vdwg.mxu0
  %1658 = vmatpush.bf16.msra.mxu0 0
  %1659 = vmatpush.bf16.msra.mxu0 0
  %1660 = vmatpush.bf16.msra.mxu0 0
  %1661 = vmatpush.bf16.msra.mxu0 0
  %1662 = vmatpush.bf16.msra.mxu0 0
  %1663 = vmatpush.bf16.msra.mxu0 0
  %1664 = vmatpush.bf16.msra.mxu0 0
  %1665 = vmatpush.bf16.msra.mxu0 %v1611
  %1666 = vmatmul.bf16.gmra.mxu0 %v1599
  %v1667 = vpop.f32.mrf.mxu0
  %v1668 = vadd.f32 0.0, %v1667
  %v1669 = vpop.f32.mrf.mxu0
  %1670 = vdwg.mxu0
  %1671 = vmatpush.bf16.msra.mxu0 0
  %1672 = vmatpush.bf16.msra.mxu0 0
  %1673 = vmatpush.bf16.msra.mxu0 0
  %1674 = vmatpush.bf16.msra.mxu0 0
  %1675 = vmatpush.bf16.msra.mxu0 0
  %1676 = vmatpush.bf16.msra.mxu0 0
  %1677 = vmatpush.bf16.msra.mxu0 0
  %1678 = vmatpush.bf16.msra.mxu0 %v1614
  %1679 = vmatmul.bf16.gmra.mxu0 %v1599
  %v1680 = vpop.f32.mrf.mxu0
  %v1681 = vadd.f32 0.0, %v1680
  %v1682 = vpop.f32.mrf.mxu0
  %1683 = vdwg.mxu0
  %1684 = vmatpush.bf16.msra.mxu0 0
  %1685 = vmatpush.bf16.msra.mxu0 0
  %1686 = vmatpush.bf16.msra.mxu0 0
  %1687 = vmatpush.bf16.msra.mxu0 0
  %1688 = vmatpush.bf16.msra.mxu0 0
  %1689 = vmatpush.bf16.msra.mxu0 0
  %1690 = vmatpush.bf16.msra.mxu0 0
  %1691 = vmatpush.bf16.msra.mxu0 %v1617
  %1692 = vmatmul.bf16.gmra.mxu0 %v1599
  %v1693 = vpop.f32.mrf.mxu0
  %v1694 = vadd.f32 0.0, %v1693
  %v1695 = vpop.f32.mrf.mxu0
  %1696 = vdwg.mxu0
  %v1697 = vadd.f32 %v1553, %v1629
  %v1698 = vadd.f32 %v1553, %v1642
  %v1699 = vadd.f32 %v1553, %v1655
  %v1700 = vadd.f32 %v1553, %v1668
  %v1701 = vadd.f32 %v1553, %v1681
  %v1702 = vadd.f32 %v1553, %v1694
  %v1703 = vld [vmem:[#allocation3] sm:$0xff]
  %v1704 = vld [vmem:[#allocation3 + $0x8] sm:$0x3f]
  %s1705 = scalar_lea.vmem %s9, 2
  %v1706 = vld [vmem:[%s1705] sm:$0x3]
  %1708 = vst [vmem:[#allocation1] ss:$4 sm:$0xff] %v1703
  %s1710 = scalar_lea.vmem [#allocation1], 32
  %1711 = vst [vmem:[%s1710] ss:$4 sm:$0xff] %v1704
  %v1712 = vld.sshfl [vmem:[#allocation1] sm:$0xff pattern:$0x73625140]
  %v1714 = vld.sshfl [vmem:[#allocation1 + $0x8] sm:$0xff pattern:$0x73625140]
  %v1716 = vld.sshfl [vmem:[#allocation1 + $0x10] sm:$0xff pattern:$0x73625140]
  %v1718 = vld.sshfl [vmem:[#allocation1 + $0x18] sm:$0xff pattern:$0x73625140]
  %v1720 = vld.sshfl [vmem:[#allocation1 + $0x20] sm:$0xff pattern:$0x73625140]
  %v1722 = vld.sshfl [vmem:[#allocation1 + $0x28] sm:$0xff pattern:$0x73625140]
  %v1724 = vld.sshfl [vmem:[#allocation1 + $0x30] sm:$0xff pattern:$0x73625140]
  %1726 = vrot.lane.b32.xlu0 %v1712, 18
  %v1727 = vpop.permute.xlu0 %1726
  %1728 = vrot.lane.b32.xlu0 %v1714, 18
  %v1729 = vpop.permute.xlu0 %1728
  %1730 = vrot.lane.b32.xlu0 %v1716, 18
  %v1731 = vpop.permute.xlu0 %1730
  %1732 = vrot.lane.b32.xlu0 %v1718, 18
  %v1733 = vpop.permute.xlu0 %1732
  %1734 = vrot.lane.b32.xlu0 %v1720, 18
  %v1735 = vpop.permute.xlu0 %1734
  %1736 = vrot.lane.b32.xlu0 %v1722, 18
  %v1737 = vpop.permute.xlu0 %1736
  %1738 = vrot.lane.b32.xlu0 %v1724, 18
  %v1739 = vpop.permute.xlu0 %1738
  %v1740 = vsel %vm377, %v1727, %v1729
  %v1741 = vsel %vm377, %v1729, %v1731
  %v1742 = vsel %vm377, %v1731, %v1733
  %v1743 = vsel %vm377, %v1733, %v1735
  %v1744 = vsel %vm377, %v1735, %v1737
  %v1745 = vsel %vm377, %v1737, %v1739
  %v1747 = vsel %vm1597, %v1706, 0
  %v1750 = vsel %vm1533, %v1740, 0
  %v1753 = vsel %vm1533, %v1741, 0
  %v1756 = vsel %vm1533, %v1742, 0
  %v1759 = vsel %vm1533, %v1743, 0
  %v1762 = vsel %vm1533, %v1744, 0
  %v1765 = vsel %vm1533, %v1745, 0
  %1767 = vmatpush.bf16.msra.mxu0 0
  %1768 = vmatpush.bf16.msra.mxu0 0
  %1769 = vmatpush.bf16.msra.mxu0 0
  %1770 = vmatpush.bf16.msra.mxu0 0
  %1771 = vmatpush.bf16.msra.mxu0 0
  %1772 = vmatpush.bf16.msra.mxu0 0
  %1773 = vmatpush.bf16.msra.mxu0 0
  %1774 = vmatpush.bf16.msra.mxu0 %v1750
  %1775 = vmatmul.bf16.gmra.mxu0 %v1747
  %v1776 = vpop.f32.mrf.mxu0
  %v1777 = vadd.f32 0.0, %v1776
  %v1778 = vpop.f32.mrf.mxu0
  %1779 = vdwg.mxu0
  %1780 = vmatpush.bf16.msra.mxu0 0
  %1781 = vmatpush.bf16.msra.mxu0 0
  %1782 = vmatpush.bf16.msra.mxu0 0
  %1783 = vmatpush.bf16.msra.mxu0 0
  %1784 = vmatpush.bf16.msra.mxu0 0
  %1785 = vmatpush.bf16.msra.mxu0 0
  %1786 = vmatpush.bf16.msra.mxu0 0
  %1787 = vmatpush.bf16.msra.mxu0 %v1753
  %1788 = vmatmul.bf16.gmra.mxu0 %v1747
  %v1789 = vpop.f32.mrf.mxu0
  %v1790 = vadd.f32 0.0, %v1789
  %v1791 = vpop.f32.mrf.mxu0
  %1792 = vdwg.mxu0
  %1793 = vmatpush.bf16.msra.mxu0 0
  %1794 = vmatpush.bf16.msra.mxu0 0
  %1795 = vmatpush.bf16.msra.mxu0 0
  %1796 = vmatpush.bf16.msra.mxu0 0
  %1797 = vmatpush.bf16.msra.mxu0 0
  %1798 = vmatpush.bf16.msra.mxu0 0
  %1799 = vmatpush.bf16.msra.mxu0 0
  %1800 = vmatpush.bf16.msra.mxu0 %v1756
  %1801 = vmatmul.bf16.gmra.mxu0 %v1747
  %v1802 = vpop.f32.mrf.mxu0
  %v1803 = vadd.f32 0.0, %v1802
  %v1804 = vpop.f32.mrf.mxu0
  %1805 = vdwg.mxu0
  %1806 = vmatpush.bf16.msra.mxu0 0
  %1807 = vmatpush.bf16.msra.mxu0 0
  %1808 = vmatpush.bf16.msra.mxu0 0
  %1809 = vmatpush.bf16.msra.mxu0 0
  %1810 = vmatpush.bf16.msra.mxu0 0
  %1811 = vmatpush.bf16.msra.mxu0 0
  %1812 = vmatpush.bf16.msra.mxu0 0
  %1813 = vmatpush.bf16.msra.mxu0 %v1759
  %1814 = vmatmul.bf16.gmra.mxu0 %v1747
  %v1815 = vpop.f32.mrf.mxu0
  %v1816 = vadd.f32 0.0, %v1815
  %v1817 = vpop.f32.mrf.mxu0
  %1818 = vdwg.mxu0
  %1819 = vmatpush.bf16.msra.mxu0 0
  %1820 = vmatpush.bf16.msra.mxu0 0
  %1821 = vmatpush.bf16.msra.mxu0 0
  %1822 = vmatpush.bf16.msra.mxu0 0
  %1823 = vmatpush.bf16.msra.mxu0 0
  %1824 = vmatpush.bf16.msra.mxu0 0
  %1825 = vmatpush.bf16.msra.mxu0 0
  %1826 = vmatpush.bf16.msra.mxu0 %v1762
  %1827 = vmatmul.bf16.gmra.mxu0 %v1747
  %v1828 = vpop.f32.mrf.mxu0
  %v1829 = vadd.f32 0.0, %v1828
  %v1830 = vpop.f32.mrf.mxu0
  %1831 = vdwg.mxu0
  %1832 = vmatpush.bf16.msra.mxu0 0
  %1833 = vmatpush.bf16.msra.mxu0 0
  %1834 = vmatpush.bf16.msra.mxu0 0
  %1835 = vmatpush.bf16.msra.mxu0 0
  %1836 = vmatpush.bf16.msra.mxu0 0
  %1837 = vmatpush.bf16.msra.mxu0 0
  %1838 = vmatpush.bf16.msra.mxu0 0
  %1839 = vmatpush.bf16.msra.mxu0 %v1765
  %1840 = vmatmul.bf16.gmra.mxu0 %v1747
  %v1841 = vpop.f32.mrf.mxu0
  %v1842 = vadd.f32 0.0, %v1841
  %v1843 = vpop.f32.mrf.mxu0
  %1844 = vdwg.mxu0
  %v1845 = vadd.f32 %v1697, %v1777
  %v1846 = vadd.f32 %v1698, %v1790
  %v1847 = vadd.f32 %v1699, %v1803
  %v1848 = vadd.f32 %v1700, %v1816
  %v1849 = vadd.f32 %v1701, %v1829
  %v1850 = vadd.f32 %v1702, %v1842
  %v1851 = vld [vmem:[#allocation3] sm:$0xff]
  %v1852 = vld [vmem:[#allocation3 + $0x8] sm:$0x3f]
  %s1853 = scalar_lea.vmem %s9, 4
  %v1854 = vld [vmem:[%s1853] sm:$0x3]
  %1856 = vst [vmem:[#allocation1] ss:$4 sm:$0xff] %v1851
  %s1858 = scalar_lea.vmem [#allocation1], 32
  %1859 = vst [vmem:[%s1858] ss:$4 sm:$0xff] %v1852
  %v1860 = vld.sshfl [vmem:[#allocation1] sm:$0xff pattern:$0x73625140]
  %v1862 = vld.sshfl [vmem:[#allocation1 + $0x8] sm:$0xff pattern:$0x73625140]
  %v1864 = vld.sshfl [vmem:[#allocation1 + $0x10] sm:$0xff pattern:$0x73625140]
  %v1866 = vld.sshfl [vmem:[#allocation1 + $0x18] sm:$0xff pattern:$0x73625140]
  %v1868 = vld.sshfl [vmem:[#allocation1 + $0x20] sm:$0xff pattern:$0x73625140]
  %v1870 = vld.sshfl [vmem:[#allocation1 + $0x28] sm:$0xff pattern:$0x73625140]
  %v1872 = vld.sshfl [vmem:[#allocation1 + $0x30] sm:$0xff pattern:$0x73625140]
  %1874 = vrot.lane.b32.xlu0 %v1860, 17
  %v1875 = vpop.permute.xlu0 %1874
  %1876 = vrot.lane.b32.xlu0 %v1862, 17
  %v1877 = vpop.permute.xlu0 %1876
  %1878 = vrot.lane.b32.xlu0 %v1864, 17
  %v1879 = vpop.permute.xlu0 %1878
  %1880 = vrot.lane.b32.xlu0 %v1866, 17
  %v1881 = vpop.permute.xlu0 %1880
  %1882 = vrot.lane.b32.xlu0 %v1868, 17
  %v1883 = vpop.permute.xlu0 %1882
  %1884 = vrot.lane.b32.xlu0 %v1870, 17
  %v1885 = vpop.permute.xlu0 %1884
  %1886 = vrot.lane.b32.xlu0 %v1872, 17
  %v1887 = vpop.permute.xlu0 %1886
  %v1888 = vsel %vm505, %v1875, %v1877
  %v1889 = vsel %vm505, %v1877, %v1879
  %v1890 = vsel %vm505, %v1879, %v1881
  %v1891 = vsel %vm505, %v1881, %v1883
  %v1892 = vsel %vm505, %v1883, %v1885
  %v1893 = vsel %vm505, %v1885, %v1887
  %v1895 = vsel %vm1597, %v1854, 0
  %v1898 = vsel %vm1533, %v1888, 0
  %v1901 = vsel %vm1533, %v1889, 0
  %v1904 = vsel %vm1533, %v1890, 0
  %v1907 = vsel %vm1533, %v1891, 0
  %v1910 = vsel %vm1533, %v1892, 0
  %v1913 = vsel %vm1533, %v1893, 0
  %1915 = vmatpush.bf16.msra.mxu0 0
  %1916 = vmatpush.bf16.msra.mxu0 0
  %1917 = vmatpush.bf16.msra.mxu0 0
  %1918 = vmatpush.bf16.msra.mxu0 0
  %1919 = vmatpush.bf16.msra.mxu0 0
  %1920 = vmatpush.bf16.msra.mxu0 0
  %1921 = vmatpush.bf16.msra.mxu0 0
  %1922 = vmatpush.bf16.msra.mxu0 %v1898
  %1923 = vmatmul.bf16.gmra.mxu0 %v1895
  %v1924 = vpop.f32.mrf.mxu0
  %v1925 = vadd.f32 0.0, %v1924
  %v1926 = vpop.f32.mrf.mxu0
  %1927 = vdwg.mxu0
  %1928 = vmatpush.bf16.msra.mxu0 0
  %1929 = vmatpush.bf16.msra.mxu0 0
  %1930 = vmatpush.bf16.msra.mxu0 0
  %1931 = vmatpush.bf16.msra.mxu0 0
  %1932 = vmatpush.bf16.msra.mxu0 0
  %1933 = vmatpush.bf16.msra.mxu0 0
  %1934 = vmatpush.bf16.msra.mxu0 0
  %1935 = vmatpush.bf16.msra.mxu0 %v1901
  %1936 = vmatmul.bf16.gmra.mxu0 %v1895
  %v1937 = vpop.f32.mrf.mxu0
  %v1938 = vadd.f32 0.0, %v1937
  %v1939 = vpop.f32.mrf.mxu0
  %1940 = vdwg.mxu0
  %1941 = vmatpush.bf16.msra.mxu0 0
  %1942 = vmatpush.bf16.msra.mxu0 0
  %1943 = vmatpush.bf16.msra.mxu0 0
  %1944 = vmatpush.bf16.msra.mxu0 0
  %1945 = vmatpush.bf16.msra.mxu0 0
  %1946 = vmatpush.bf16.msra.mxu0 0
  %1947 = vmatpush.bf16.msra.mxu0 0
  %1948 = vmatpush.bf16.msra.mxu0 %v1904
  %1949 = vmatmul.bf16.gmra.mxu0 %v1895
  %v1950 = vpop.f32.mrf.mxu0
  %v1951 = vadd.f32 0.0, %v1950
  %v1952 = vpop.f32.mrf.mxu0
  %1953 = vdwg.mxu0
  %1954 = vmatpush.bf16.msra.mxu0 0
  %1955 = vmatpush.bf16.msra.mxu0 0
  %1956 = vmatpush.bf16.msra.mxu0 0
  %1957 = vmatpush.bf16.msra.mxu0 0
  %1958 = vmatpush.bf16.msra.mxu0 0
  %1959 = vmatpush.bf16.msra.mxu0 0
  %1960 = vmatpush.bf16.msra.mxu0 0
  %1961 = vmatpush.bf16.msra.mxu0 %v1907
  %1962 = vmatmul.bf16.gmra.mxu0 %v1895
  %v1963 = vpop.f32.mrf.mxu0
  %v1964 = vadd.f32 0.0, %v1963
  %v1965 = vpop.f32.mrf.mxu0
  %1966 = vdwg.mxu0
  %1967 = vmatpush.bf16.msra.mxu0 0
  %1968 = vmatpush.bf16.msra.mxu0 0
  %1969 = vmatpush.bf16.msra.mxu0 0
  %1970 = vmatpush.bf16.msra.mxu0 0
  %1971 = vmatpush.bf16.msra.mxu0 0
  %1972 = vmatpush.bf16.msra.mxu0 0
  %1973 = vmatpush.bf16.msra.mxu0 0
  %1974 = vmatpush.bf16.msra.mxu0 %v1910
  %1975 = vmatmul.bf16.gmra.mxu0 %v1895
  %v1976 = vpop.f32.mrf.mxu0
  %v1977 = vadd.f32 0.0, %v1976
  %v1978 = vpop.f32.mrf.mxu0
  %1979 = vdwg.mxu0
  %1980 = vmatpush.bf16.msra.mxu0 0
  %1981 = vmatpush.bf16.msra.mxu0 0
  %1982 = vmatpush.bf16.msra.mxu0 0
  %1983 = vmatpush.bf16.msra.mxu0 0
  %1984 = vmatpush.bf16.msra.mxu0 0
  %1985 = vmatpush.bf16.msra.mxu0 0
  %1986 = vmatpush.bf16.msra.mxu0 0
  %1987 = vmatpush.bf16.msra.mxu0 %v1913
  %1988 = vmatmul.bf16.gmra.mxu0 %v1895
  %v1989 = vpop.f32.mrf.mxu0
  %v1990 = vadd.f32 0.0, %v1989
  %v1991 = vpop.f32.mrf.mxu0
  %1992 = vdwg.mxu0
  %v1993 = vadd.f32 %v1845, %v1925
  %v1994 = vadd.f32 %v1846, %v1938
  %v1995 = vadd.f32 %v1847, %v1951
  %v1996 = vadd.f32 %v1848, %v1964
  %v1997 = vadd.f32 %v1849, %v1977
  %v1998 = vadd.f32 %v1850, %v1990
  %v1999 = vld [vmem:[#allocation3] sm:$0xff]
  %v2000 = vld [vmem:[#allocation3 + $0x8] sm:$0x3f]
  %s2001 = scalar_lea.vmem %s9, 6
  %v2002 = vld [vmem:[%s2001] sm:$0x3]
  %2004 = vst [vmem:[#allocation1] ss:$4 sm:$0xff] %v1999
  %s2006 = scalar_lea.vmem [#allocation1], 32
  %2007 = vst [vmem:[%s2006] ss:$4 sm:$0xff] %v2000
  %v2008 = vld.sshfl [vmem:[#allocation1] sm:$0xff pattern:$0x73625140]
  %v2010 = vld.sshfl [vmem:[#allocation1 + $0x8] sm:$0xff pattern:$0x73625140]
  %v2012 = vld.sshfl [vmem:[#allocation1 + $0x10] sm:$0xff pattern:$0x73625140]
  %v2014 = vld.sshfl [vmem:[#allocation1 + $0x18] sm:$0xff pattern:$0x73625140]
  %v2016 = vld.sshfl [vmem:[#allocation1 + $0x20] sm:$0xff pattern:$0x73625140]
  %v2018 = vld.sshfl [vmem:[#allocation1 + $0x28] sm:$0xff pattern:$0x73625140]
  %v2020 = vld.sshfl [vmem:[#allocation1 + $0x30] sm:$0xff pattern:$0x73625140]
  %2022 = vrot.lane.b32.xlu0 %v2008, 1
  %v2023 = vpop.permute.xlu0 %2022
  %2024 = vrot.lane.b32.xlu0 %v2010, 1
  %v2025 = vpop.permute.xlu0 %2024
  %2026 = vrot.lane.b32.xlu0 %v2012, 1
  %v2027 = vpop.permute.xlu0 %2026
  %2028 = vrot.lane.b32.xlu0 %v2014, 1
  %v2029 = vpop.permute.xlu0 %2028
  %2030 = vrot.lane.b32.xlu0 %v2016, 1
  %v2031 = vpop.permute.xlu0 %2030
  %2032 = vrot.lane.b32.xlu0 %v2018, 1
  %v2033 = vpop.permute.xlu0 %2032
  %2034 = vrot.lane.b32.xlu0 %v2020, 1
  %v2035 = vpop.permute.xlu0 %2034
  %v2036 = vsel %vm633, %v2023, %v2025
  %v2037 = vsel %vm633, %v2025, %v2027
  %v2038 = vsel %vm633, %v2027, %v2029
  %v2039 = vsel %vm633, %v2029, %v2031
  %v2040 = vsel %vm633, %v2031, %v2033
  %v2041 = vsel %vm633, %v2033, %v2035
  %v2043 = vsel %vm1597, %v2002, 0
  %v2046 = vsel %vm1533, %v2036, 0
  %v2049 = vsel %vm1533, %v2037, 0
  %v2052 = vsel %vm1533, %v2038, 0
  %v2055 = vsel %vm1533, %v2039, 0
  %v2058 = vsel %vm1533, %v2040, 0
  %v2061 = vsel %vm1533, %v2041, 0
  %2063 = vmatpush.bf16.msra.mxu0 0
  %2064 = vmatpush.bf16.msra.mxu0 0
  %2065 = vmatpush.bf16.msra.mxu0 0
  %2066 = vmatpush.bf16.msra.mxu0 0
  %2067 = vmatpush.bf16.msra.mxu0 0
  %2068 = vmatpush.bf16.msra.mxu0 0
  %2069 = vmatpush.bf16.msra.mxu0 0
  %2070 = vmatpush.bf16.msra.mxu0 %v2046
  %2071 = vmatmul.bf16.gmra.mxu0 %v2043
  %v2072 = vpop.f32.mrf.mxu0
  %v2073 = vadd.f32 0.0, %v2072
  %v2074 = vpop.f32.mrf.mxu0
  %2075 = vdwg.mxu0
  %2076 = vmatpush.bf16.msra.mxu0 0
  %2077 = vmatpush.bf16.msra.mxu0 0
  %2078 = vmatpush.bf16.msra.mxu0 0
  %2079 = vmatpush.bf16.msra.mxu0 0
  %2080 = vmatpush.bf16.msra.mxu0 0
  %2081 = vmatpush.bf16.msra.mxu0 0
  %2082 = vmatpush.bf16.msra.mxu0 0
  %2083 = vmatpush.bf16.msra.mxu0 %v2049
  %2084 = vmatmul.bf16.gmra.mxu0 %v2043
  %v2085 = vpop.f32.mrf.mxu0
  %v2086 = vadd.f32 0.0, %v2085
  %v2087 = vpop.f32.mrf.mxu0
  %2088 = vdwg.mxu0
  %2089 = vmatpush.bf16.msra.mxu0 0
  %2090 = vmatpush.bf16.msra.mxu0 0
  %2091 = vmatpush.bf16.msra.mxu0 0
  %2092 = vmatpush.bf16.msra.mxu0 0
  %2093 = vmatpush.bf16.msra.mxu0 0
  %2094 = vmatpush.bf16.msra.mxu0 0
  %2095 = vmatpush.bf16.msra.mxu0 0
  %2096 = vmatpush.bf16.msra.mxu0 %v2052
  %2097 = vmatmul.bf16.gmra.mxu0 %v2043
  %v2098 = vpop.f32.mrf.mxu0
  %v2099 = vadd.f32 0.0, %v2098
  %v2100 = vpop.f32.mrf.mxu0
  %2101 = vdwg.mxu0
  %2102 = vmatpush.bf16.msra.mxu0 0
  %2103 = vmatpush.bf16.msra.mxu0 0
  %2104 = vmatpush.bf16.msra.mxu0 0
  %2105 = vmatpush.bf16.msra.mxu0 0
  %2106 = vmatpush.bf16.msra.mxu0 0
  %2107 = vmatpush.bf16.msra.mxu0 0
  %2108 = vmatpush.bf16.msra.mxu0 0
  %2109 = vmatpush.bf16.msra.mxu0 %v2055
  %2110 = vmatmul.bf16.gmra.mxu0 %v2043
  %v2111 = vpop.f32.mrf.mxu0
  %v2112 = vadd.f32 0.0, %v2111
  %v2113 = vpop.f32.mrf.mxu0
  %2114 = vdwg.mxu0
  %2115 = vmatpush.bf16.msra.mxu0 0
  %2116 = vmatpush.bf16.msra.mxu0 0
  %2117 = vmatpush.bf16.msra.mxu0 0
  %2118 = vmatpush.bf16.msra.mxu0 0
  %2119 = vmatpush.bf16.msra.mxu0 0
  %2120 = vmatpush.bf16.msra.mxu0 0
  %2121 = vmatpush.bf16.msra.mxu0 0
  %2122 = vmatpush.bf16.msra.mxu0 %v2058
  %2123 = vmatmul.bf16.gmra.mxu0 %v2043
  %v2124 = vpop.f32.mrf.mxu0
  %v2125 = vadd.f32 0.0, %v2124
  %v2126 = vpop.f32.mrf.mxu0
  %2127 = vdwg.mxu0
  %2128 = vmatpush.bf16.msra.mxu0 0
  %2129 = vmatpush.bf16.msra.mxu0 0
  %2130 = vmatpush.bf16.msra.mxu0 0
  %2131 = vmatpush.bf16.msra.mxu0 0
  %2132 = vmatpush.bf16.msra.mxu0 0
  %2133 = vmatpush.bf16.msra.mxu0 0
  %2134 = vmatpush.bf16.msra.mxu0 0
  %2135 = vmatpush.bf16.msra.mxu0 %v2061
  %2136 = vmatmul.bf16.gmra.mxu0 %v2043
  %v2137 = vpop.f32.mrf.mxu0
  %v2138 = vadd.f32 0.0, %v2137
  %v2139 = vpop.f32.mrf.mxu0
  %2140 = vdwg.mxu0
  %v2141 = vadd.f32 %v1993, %v2073
  %v2142 = vadd.f32 %v1994, %v2086
  %v2143 = vadd.f32 %v1995, %v2099
  %v2144 = vadd.f32 %v1996, %v2112
  %v2145 = vadd.f32 %v1997, %v2125
  %v2146 = vadd.f32 %v1998, %v2138
  %v2147 = vld [vmem:[#allocation3 + $0x2] sm:$0xff]
  %v2148 = vld [vmem:[#allocation3 + $0xa] sm:$0xf]
  %s2149 = scalar_lea.vmem %s9, 8
  %v2150 = vld [vmem:[%s2149] sm:$0x3]
  %2152 = vst [vmem:[#allocation1] ss:$4 sm:$0xff] %v2147
  %s2154 = scalar_lea.vmem [#allocation1], 32
  %2155 = vst [vmem:[%s2154] ss:$4 sm:$0xff] %v2148
  %v2156 = vld.sshfl [vmem:[#allocation1] sm:$0xff pattern:$0x73625140]
  %v2157 = vld.sshfl [vmem:[#allocation1 + $0x8] sm:$0xff pattern:$0x73625140]
  %v2158 = vld.sshfl [vmem:[#allocation1 + $0x10] sm:$0xff pattern:$0x73625140]
  %v2159 = vld.sshfl [vmem:[#allocation1 + $0x18] sm:$0xff pattern:$0x73625140]
  %v2160 = vld.sshfl [vmem:[#allocation1 + $0x20] sm:$0xff pattern:$0x73625140]
  %v2161 = vld.sshfl [vmem:[#allocation1 + $0x28] sm:$0xff pattern:$0x73625140]
  %v2163 = vsel %vm1597, %v2150, 0
  %v2165 = vsel %vm1533, %v2156, 0
  %v2167 = vsel %vm1533, %v2157, 0
  %v2169 = vsel %vm1533, %v2158, 0
  %v2171 = vsel %vm1533, %v2159, 0
  %v2173 = vsel %vm1533, %v2160, 0
  %v2175 = vsel %vm1533, %v2161, 0
  %2177 = vmatpush.bf16.msra.mxu0 0
  %2178 = vmatpush.bf16.msra.mxu0 0
  %2179 = vmatpush.bf16.msra.mxu0 0
  %2180 = vmatpush.bf16.msra.mxu0 0
  %2181 = vmatpush.bf16.msra.mxu0 0
  %2182 = vmatpush.bf16.msra.mxu0 0
  %2183 = vmatpush.bf16.msra.mxu0 0
  %2184 = vmatpush.bf16.msra.mxu0 %v2165
  %2185 = vmatmul.bf16.gmra.mxu0 %v2163
  %v2186 = vpop.f32.mrf.mxu0
  %v2187 = vadd.f32 0.0, %v2186
  %v2188 = vpop.f32.mrf.mxu0
  %2189 = vdwg.mxu0
  %2190 = vmatpush.bf16.msra.mxu0 0
  %2191 = vmatpush.bf16.msra.mxu0 0
  %2192 = vmatpush.bf16.msra.mxu0 0
  %2193 = vmatpush.bf16.msra.mxu0 0
  %2194 = vmatpush.bf16.msra.mxu0 0
  %2195 = vmatpush.bf16.msra.mxu0 0
  %2196 = vmatpush.bf16.msra.mxu0 0
  %2197 = vmatpush.bf16.msra.mxu0 %v2167
  %2198 = vmatmul.bf16.gmra.mxu0 %v2163
  %v2199 = vpop.f32.mrf.mxu0
  %v2200 = vadd.f32 0.0, %v2199
  %v2201 = vpop.f32.mrf.mxu0
  %2202 = vdwg.mxu0
  %2203 = vmatpush.bf16.msra.mxu0 0
  %2204 = vmatpush.bf16.msra.mxu0 0
  %2205 = vmatpush.bf16.msra.mxu0 0
  %2206 = vmatpush.bf16.msra.mxu0 0
  %2207 = vmatpush.bf16.msra.mxu0 0
  %2208 = vmatpush.bf16.msra.mxu0 0
  %2209 = vmatpush.bf16.msra.mxu0 0
  %2210 = vmatpush.bf16.msra.mxu0 %v2169
  %2211 = vmatmul.bf16.gmra.mxu0 %v2163
  %v2212 = vpop.f32.mrf.mxu0
  %v2213 = vadd.f32 0.0, %v2212
  %v2214 = vpop.f32.mrf.mxu0
  %2215 = vdwg.mxu0
  %2216 = vmatpush.bf16.msra.mxu0 0
  %2217 = vmatpush.bf16.msra.mxu0 0
  %2218 = vmatpush.bf16.msra.mxu0 0
  %2219 = vmatpush.bf16.msra.mxu0 0
  %2220 = vmatpush.bf16.msra.mxu0 0
  %2221 = vmatpush.bf16.msra.mxu0 0
  %2222 = vmatpush.bf16.msra.mxu0 0
  %2223 = vmatpush.bf16.msra.mxu0 %v2171
  %2224 = vmatmul.bf16.gmra.mxu0 %v2163
  %v2225 = vpop.f32.mrf.mxu0
  %v2226 = vadd.f32 0.0, %v2225
  %v2227 = vpop.f32.mrf.mxu0
  %2228 = vdwg.mxu0
  %2229 = vmatpush.bf16.msra.mxu0 0
  %2230 = vmatpush.bf16.msra.mxu0 0
  %2231 = vmatpush.bf16.msra.mxu0 0
  %2232 = vmatpush.bf16.msra.mxu0 0
  %2233 = vmatpush.bf16.msra.mxu0 0
  %2234 = vmatpush.bf16.msra.mxu0 0
  %2235 = vmatpush.bf16.msra.mxu0 0
  %2236 = vmatpush.bf16.msra.mxu0 %v2173
  %2237 = vmatmul.bf16.gmra.mxu0 %v2163
  %v2238 = vpop.f32.mrf.mxu0
  %v2239 = vadd.f32 0.0, %v2238
  %v2240 = vpop.f32.mrf.mxu0
  %2241 = vdwg.mxu0
  %2242 = vmatpush.bf16.msra.mxu0 0
  %2243 = vmatpush.bf16.msra.mxu0 0
  %2244 = vmatpush.bf16.msra.mxu0 0
  %2245 = vmatpush.bf16.msra.mxu0 0
  %2246 = vmatpush.bf16.msra.mxu0 0
  %2247 = vmatpush.bf16.msra.mxu0 0
  %2248 = vmatpush.bf16.msra.mxu0 0
  %2249 = vmatpush.bf16.msra.mxu0 %v2175
  %2250 = vmatmul.bf16.gmra.mxu0 %v2163
  %v2251 = vpop.f32.mrf.mxu0
  %v2252 = vadd.f32 0.0, %v2251
  %v2253 = vpop.f32.mrf.mxu0
  %2254 = vdwg.mxu0
  %v2255 = vadd.f32 %v2141, %v2187
  %v2256 = vadd.f32 %v2142, %v2200
  %v2257 = vadd.f32 %v2143, %v2213
  %v2258 = vadd.f32 %v2144, %v2226
  %v2259 = vadd.f32 %v2145, %v2239
  %v2260 = vadd.f32 %v2146, %v2252
  %v2261 = vld [vmem:[#allocation3 + $0x2] sm:$0xff]
  %v2262 = vld [vmem:[#allocation3 + $0xa] sm:$0x3f]
  %s2263 = scalar_lea.vmem %s9, 10
  %v2264 = vld [vmem:[%s2263] sm:$0x3]
  %2266 = vst [vmem:[#allocation1] ss:$4 sm:$0xff] %v2261
  %s2268 = scalar_lea.vmem [#allocation1], 32
  %2269 = vst [vmem:[%s2268] ss:$4 sm:$0xff] %v2262
  %v2270 = vld.sshfl [vmem:[#allocation1] sm:$0xff pattern:$0x73625140]
  %v2272 = vld.sshfl [vmem:[#allocation1 + $0x8] sm:$0xff pattern:$0x73625140]
  %v2274 = vld.sshfl [vmem:[#allocation1 + $0x10] sm:$0xff pattern:$0x73625140]
  %v2276 = vld.sshfl [vmem:[#allocation1 + $0x18] sm:$0xff pattern:$0x73625140]
  %v2278 = vld.sshfl [vmem:[#allocation1 + $0x20] sm:$0xff pattern:$0x73625140]
  %v2280 = vld.sshfl [vmem:[#allocation1 + $0x28] sm:$0xff pattern:$0x73625140]
  %v2282 = vld.sshfl [vmem:[#allocation1 + $0x30] sm:$0xff pattern:$0x73625140]
  %2284 = vrot.lane.b32.xlu0 %v2270, 127
  %v2285 = vpop.permute.xlu0 %2284
  %2286 = vrot.lane.b32.xlu0 %v2272, 127
  %v2287 = vpop.permute.xlu0 %2286
  %2288 = vrot.lane.b32.xlu0 %v2274, 127
  %v2289 = vpop.permute.xlu0 %2288
  %2290 = vrot.lane.b32.xlu0 %v2276, 127
  %v2291 = vpop.permute.xlu0 %2290
  %2292 = vrot.lane.b32.xlu0 %v2278, 127
  %v2293 = vpop.permute.xlu0 %2292
  %2294 = vrot.lane.b32.xlu0 %v2280, 127
  %v2295 = vpop.permute.xlu0 %2294
  %2296 = vrot.lane.b32.xlu0 %v2282, 127
  %v2297 = vpop.permute.xlu0 %2296
  %v2298 = vsel %vm908, %v2285, %v2287
  %v2299 = vsel %vm908, %v2287, %v2289
  %v2300 = vsel %vm908, %v2289, %v2291
  %v2301 = vsel %vm908, %v2291, %v2293
  %v2302 = vsel %vm908, %v2293, %v2295
  %v2303 = vsel %vm908, %v2295, %v2297
  %v2305 = vsel %vm1597, %v2264, 0
  %v2308 = vsel %vm1533, %v2298, 0
  %v2311 = vsel %vm1533, %v2299, 0
  %v2314 = vsel %vm1533, %v2300, 0
  %v2317 = vsel %vm1533, %v2301, 0
  %v2320 = vsel %vm1533, %v2302, 0
  %v2323 = vsel %vm1533, %v2303, 0
  %2325 = vmatpush.bf16.msra.mxu0 0
  %2326 = vmatpush.bf16.msra.mxu0 0
  %2327 = vmatpush.bf16.msra.mxu0 0
  %2328 = vmatpush.bf16.msra.mxu0 0
  %2329 = vmatpush.bf16.msra.mxu0 0
  %2330 = vmatpush.bf16.msra.mxu0 0
  %2331 = vmatpush.bf16.msra.mxu0 0
  %2332 = vmatpush.bf16.msra.mxu0 %v2308
  %2333 = vmatmul.bf16.gmra.mxu0 %v2305
  %v2334 = vpop.f32.mrf.mxu0
  %v2335 = vadd.f32 0.0, %v2334
  %v2336 = vpop.f32.mrf.mxu0
  %2337 = vdwg.mxu0
  %2338 = vmatpush.bf16.msra.mxu0 0
  %2339 = vmatpush.bf16.msra.mxu0 0
  %2340 = vmatpush.bf16.msra.mxu0 0
  %2341 = vmatpush.bf16.msra.mxu0 0
  %2342 = vmatpush.bf16.msra.mxu0 0
  %2343 = vmatpush.bf16.msra.mxu0 0
  %2344 = vmatpush.bf16.msra.mxu0 0
  %2345 = vmatpush.bf16.msra.mxu0 %v2311
  %2346 = vmatmul.bf16.gmra.mxu0 %v2305
  %v2347 = vpop.f32.mrf.mxu0
  %v2348 = vadd.f32 0.0, %v2347
  %v2349 = vpop.f32.mrf.mxu0
  %2350 = vdwg.mxu0
  %2351 = vmatpush.bf16.msra.mxu0 0
  %2352 = vmatpush.bf16.msra.mxu0 0
  %2353 = vmatpush.bf16.msra.mxu0 0
  %2354 = vmatpush.bf16.msra.mxu0 0
  %2355 = vmatpush.bf16.msra.mxu0 0
  %2356 = vmatpush.bf16.msra.mxu0 0
  %2357 = vmatpush.bf16.msra.mxu0 0
  %2358 = vmatpush.bf16.msra.mxu0 %v2314
  %2359 = vmatmul.bf16.gmra.mxu0 %v2305
  %v2360 = vpop.f32.mrf.mxu0
  %v2361 = vadd.f32 0.0, %v2360
  %v2362 = vpop.f32.mrf.mxu0
  %2363 = vdwg.mxu0
  %2364 = vmatpush.bf16.msra.mxu0 0
  %2365 = vmatpush.bf16.msra.mxu0 0
  %2366 = vmatpush.bf16.msra.mxu0 0
  %2367 = vmatpush.bf16.msra.mxu0 0
  %2368 = vmatpush.bf16.msra.mxu0 0
  %2369 = vmatpush.bf16.msra.mxu0 0
  %2370 = vmatpush.bf16.msra.mxu0 0
  %2371 = vmatpush.bf16.msra.mxu0 %v2317
  %2372 = vmatmul.bf16.gmra.mxu0 %v2305
  %v2373 = vpop.f32.mrf.mxu0
  %v2374 = vadd.f32 0.0, %v2373
  %v2375 = vpop.f32.mrf.mxu0
  %2376 = vdwg.mxu0
  %2377 = vmatpush.bf16.msra.mxu0 0
  %2378 = vmatpush.bf16.msra.mxu0 0
  %2379 = vmatpush.bf16.msra.mxu0 0
  %2380 = vmatpush.bf16.msra.mxu0 0
  %2381 = vmatpush.bf16.msra.mxu0 0
  %2382 = vmatpush.bf16.msra.mxu0 0
  %2383 = vmatpush.bf16.msra.mxu0 0
  %2384 = vmatpush.bf16.msra.mxu0 %v2320
  %2385 = vmatmul.bf16.gmra.mxu0 %v2305
  %v2386 = vpop.f32.mrf.mxu0
  %v2387 = vadd.f32 0.0, %v2386
  %v2388 = vpop.f32.mrf.mxu0
  %2389 = vdwg.mxu0
  %2390 = vmatpush.bf16.msra.mxu0 0
  %2391 = vmatpush.bf16.msra.mxu0 0
  %2392 = vmatpush.bf16.msra.mxu0 0
  %2393 = vmatpush.bf16.msra.mxu0 0
  %2394 = vmatpush.bf16.msra.mxu0 0
  %2395 = vmatpush.bf16.msra.mxu0 0
  %2396 = vmatpush.bf16.msra.mxu0 0
  %2397 = vmatpush.bf16.msra.mxu0 %v2323
  %2398 = vmatmul.bf16.gmra.mxu0 %v2305
  %v2399 = vpop.f32.mrf.mxu0
  %v2400 = vadd.f32 0.0, %v2399
  %v2401 = vpop.f32.mrf.mxu0
  %2402 = vdwg.mxu0
  %v2403 = vadd.f32 %v2255, %v2335
  %v2404 = vadd.f32 %v2256, %v2348
  %v2405 = vadd.f32 %v2257, %v2361
  %v2406 = vadd.f32 %v2258, %v2374
  %v2407 = vadd.f32 %v2259, %v2387
  %v2408 = vadd.f32 %v2260, %v2400
  %v2409 = vld [vmem:[#allocation3 + $0x2] sm:$0xff]
  %v2410 = vld [vmem:[#allocation3 + $0xa] sm:$0x3f]
  %s2411 = scalar_lea.vmem %s9, 12
  %v2412 = vld [vmem:[%s2411] sm:$0x3]
  %2414 = vst [vmem:[#allocation1] ss:$4 sm:$0xff] %v2409
  %s2416 = scalar_lea.vmem [#allocation1], 32
  %2417 = vst [vmem:[%s2416] ss:$4 sm:$0xff] %v2410
  %v2418 = vld.sshfl [vmem:[#allocation1] sm:$0xff pattern:$0x73625140]
  %v2420 = vld.sshfl [vmem:[#allocation1 + $0x8] sm:$0xff pattern:$0x73625140]
  %v2422 = vld.sshfl [vmem:[#allocation1 + $0x10] sm:$0xff pattern:$0x73625140]
  %v2424 = vld.sshfl [vmem:[#allocation1 + $0x18] sm:$0xff pattern:$0x73625140]
  %v2426 = vld.sshfl [vmem:[#allocation1 + $0x20] sm:$0xff pattern:$0x73625140]
  %v2428 = vld.sshfl [vmem:[#allocation1 + $0x28] sm:$0xff pattern:$0x73625140]
  %v2430 = vld.sshfl [vmem:[#allocation1 + $0x30] sm:$0xff pattern:$0x73625140]
  %2432 = vrot.lane.b32.xlu0 %v2418, 111
  %v2433 = vpop.permute.xlu0 %2432
  %2434 = vrot.lane.b32.xlu0 %v2420, 111
  %v2435 = vpop.permute.xlu0 %2434
  %2436 = vrot.lane.b32.xlu0 %v2422, 111
  %v2437 = vpop.permute.xlu0 %2436
  %2438 = vrot.lane.b32.xlu0 %v2424, 111
  %v2439 = vpop.permute.xlu0 %2438
  %2440 = vrot.lane.b32.xlu0 %v2426, 111
  %v2441 = vpop.permute.xlu0 %2440
  %2442 = vrot.lane.b32.xlu0 %v2428, 111
  %v2443 = vpop.permute.xlu0 %2442
  %2444 = vrot.lane.b32.xlu0 %v2430, 111
  %v2445 = vpop.permute.xlu0 %2444
  %v2446 = vsel %vm1036, %v2433, %v2435
  %v2447 = vsel %vm1036, %v2435, %v2437
  %v2448 = vsel %vm1036, %v2437, %v2439
  %v2449 = vsel %vm1036, %v2439, %v2441
  %v2450 = vsel %vm1036, %v2441, %v2443
  %v2451 = vsel %vm1036, %v2443, %v2445
  %v2453 = vsel %vm1597, %v2412, 0
  %v2456 = vsel %vm1533, %v2446, 0
  %v2459 = vsel %vm1533, %v2447, 0
  %v2462 = vsel %vm1533, %v2448, 0
  %v2465 = vsel %vm1533, %v2449, 0
  %v2468 = vsel %vm1533, %v2450, 0
  %v2471 = vsel %vm1533, %v2451, 0
  %2473 = vmatpush.bf16.msra.mxu0 0
  %2474 = vmatpush.bf16.msra.mxu0 0
  %2475 = vmatpush.bf16.msra.mxu0 0
  %2476 = vmatpush.bf16.msra.mxu0 0
  %2477 = vmatpush.bf16.msra.mxu0 0
  %2478 = vmatpush.bf16.msra.mxu0 0
  %2479 = vmatpush.bf16.msra.mxu0 0
  %2480 = vmatpush.bf16.msra.mxu0 %v2456
  %2481 = vmatmul.bf16.gmra.mxu0 %v2453
  %v2482 = vpop.f32.mrf.mxu0
  %v2483 = vadd.f32 0.0, %v2482
  %v2484 = vpop.f32.mrf.mxu0
  %2485 = vdwg.mxu0
  %2486 = vmatpush.bf16.msra.mxu0 0
  %2487 = vmatpush.bf16.msra.mxu0 0
  %2488 = vmatpush.bf16.msra.mxu0 0
  %2489 = vmatpush.bf16.msra.mxu0 0
  %2490 = vmatpush.bf16.msra.mxu0 0
  %2491 = vmatpush.bf16.msra.mxu0 0
  %2492 = vmatpush.bf16.msra.mxu0 0
  %2493 = vmatpush.bf16.msra.mxu0 %v2459
  %2494 = vmatmul.bf16.gmra.mxu0 %v2453
  %v2495 = vpop.f32.mrf.mxu0
  %v2496 = vadd.f32 0.0, %v2495
  %v2497 = vpop.f32.mrf.mxu0
  %2498 = vdwg.mxu0
  %2499 = vmatpush.bf16.msra.mxu0 0
  %2500 = vmatpush.bf16.msra.mxu0 0
  %2501 = vmatpush.bf16.msra.mxu0 0
  %2502 = vmatpush.bf16.msra.mxu0 0
  %2503 = vmatpush.bf16.msra.mxu0 0
  %2504 = vmatpush.bf16.msra.mxu0 0
  %2505 = vmatpush.bf16.msra.mxu0 0
  %2506 = vmatpush.bf16.msra.mxu0 %v2462
  %2507 = vmatmul.bf16.gmra.mxu0 %v2453
  %v2508 = vpop.f32.mrf.mxu0
  %v2509 = vadd.f32 0.0, %v2508
  %v2510 = vpop.f32.mrf.mxu0
  %2511 = vdwg.mxu0
  %2512 = vmatpush.bf16.msra.mxu0 0
  %2513 = vmatpush.bf16.msra.mxu0 0
  %2514 = vmatpush.bf16.msra.mxu0 0
  %2515 = vmatpush.bf16.msra.mxu0 0
  %2516 = vmatpush.bf16.msra.mxu0 0
  %2517 = vmatpush.bf16.msra.mxu0 0
  %2518 = vmatpush.bf16.msra.mxu0 0
  %2519 = vmatpush.bf16.msra.mxu0 %v2465
  %2520 = vmatmul.bf16.gmra.mxu0 %v2453
  %v2521 = vpop.f32.mrf.mxu0
  %v2522 = vadd.f32 0.0, %v2521
  %v2523 = vpop.f32.mrf.mxu0
  %2524 = vdwg.mxu0
  %2525 = vmatpush.bf16.msra.mxu0 0
  %2526 = vmatpush.bf16.msra.mxu0 0
  %2527 = vmatpush.bf16.msra.mxu0 0
  %2528 = vmatpush.bf16.msra.mxu0 0
  %2529 = vmatpush.bf16.msra.mxu0 0
  %2530 = vmatpush.bf16.msra.mxu0 0
  %2531 = vmatpush.bf16.msra.mxu0 0
  %2532 = vmatpush.bf16.msra.mxu0 %v2468
  %2533 = vmatmul.bf16.gmra.mxu0 %v2453
  %v2534 = vpop.f32.mrf.mxu0
  %v2535 = vadd.f32 0.0, %v2534
  %v2536 = vpop.f32.mrf.mxu0
  %2537 = vdwg.mxu0
  %2538 = vmatpush.bf16.msra.mxu0 0
  %2539 = vmatpush.bf16.msra.mxu0 0
  %2540 = vmatpush.bf16.msra.mxu0 0
  %2541 = vmatpush.bf16.msra.mxu0 0
  %2542 = vmatpush.bf16.msra.mxu0 0
  %2543 = vmatpush.bf16.msra.mxu0 0
  %2544 = vmatpush.bf16.msra.mxu0 0
  %2545 = vmatpush.bf16.msra.mxu0 %v2471
  %2546 = vmatmul.bf16.gmra.mxu0 %v2453
  %v2547 = vpop.f32.mrf.mxu0
  %v2548 = vadd.f32 0.0, %v2547
  %v2549 = vpop.f32.mrf.mxu0
  %2550 = vdwg.mxu0
  %v2551 = vadd.f32 %v2403, %v2483
  %v2552 = vadd.f32 %v2404, %v2496
  %v2553 = vadd.f32 %v2405, %v2509
  %v2554 = vadd.f32 %v2406, %v2522
  %v2555 = vadd.f32 %v2407, %v2535
  %v2556 = vadd.f32 %v2408, %v2548
  %v2557 = vld [vmem:[#allocation3 + $0x2] sm:$0xff]
  %v2558 = vld [vmem:[#allocation3 + $0xa] sm:$0x3f]
  %s2559 = scalar_lea.vmem %s9, 14
  %v2560 = vld [vmem:[%s2559] sm:$0x3]
  %2562 = vst [vmem:[#allocation1] ss:$4 sm:$0xff] %v2557
  %s2564 = scalar_lea.vmem [#allocation1], 32
  %2565 = vst [vmem:[%s2564] ss:$4 sm:$0xff] %v2558
  %v2566 = vld.sshfl [vmem:[#allocation1] sm:$0xff pattern:$0x73625140]
  %v2568 = vld.sshfl [vmem:[#allocation1 + $0x8] sm:$0xff pattern:$0x73625140]
  %v2570 = vld.sshfl [vmem:[#allocation1 + $0x10] sm:$0xff pattern:$0x73625140]
  %v2572 = vld.sshfl [vmem:[#allocation1 + $0x18] sm:$0xff pattern:$0x73625140]
  %v2574 = vld.sshfl [vmem:[#allocation1 + $0x20] sm:$0xff pattern:$0x73625140]
  %v2576 = vld.sshfl [vmem:[#allocation1 + $0x28] sm:$0xff pattern:$0x73625140]
  %v2578 = vld.sshfl [vmem:[#allocation1 + $0x30] sm:$0xff pattern:$0x73625140]
  %2580 = vrot.lane.b32.xlu0 %v2566, 110
  %v2581 = vpop.permute.xlu0 %2580
  %2582 = vrot.lane.b32.xlu0 %v2568, 110
  %v2583 = vpop.permute.xlu0 %2582
  %2584 = vrot.lane.b32.xlu0 %v2570, 110
  %v2585 = vpop.permute.xlu0 %2584
  %2586 = vrot.lane.b32.xlu0 %v2572, 110
  %v2587 = vpop.permute.xlu0 %2586
  %2588 = vrot.lane.b32.xlu0 %v2574, 110
  %v2589 = vpop.permute.xlu0 %2588
  %2590 = vrot.lane.b32.xlu0 %v2576, 110
  %v2591 = vpop.permute.xlu0 %2590
  %2592 = vrot.lane.b32.xlu0 %v2578, 110
  %v2593 = vpop.permute.xlu0 %2592
  %v2594 = vsel %vm1164, %v2581, %v2583
  %v2595 = vsel %vm1164, %v2583, %v2585
  %v2596 = vsel %vm1164, %v2585, %v2587
  %v2597 = vsel %vm1164, %v2587, %v2589
  %v2598 = vsel %vm1164, %v2589, %v2591
  %v2599 = vsel %vm1164, %v2591, %v2593
  %v2601 = vsel %vm1597, %v2560, 0
  %v2604 = vsel %vm1533, %v2594, 0
  %v2607 = vsel %vm1533, %v2595, 0
  %v2610 = vsel %vm1533, %v2596, 0
  %v2613 = vsel %vm1533, %v2597, 0
  %v2616 = vsel %vm1533, %v2598, 0
  %v2619 = vsel %vm1533, %v2599, 0
  %2621 = vmatpush.bf16.msra.mxu0 0
  %2622 = vmatpush.bf16.msra.mxu0 0
  %2623 = vmatpush.bf16.msra.mxu0 0
  %2624 = vmatpush.bf16.msra.mxu0 0
  %2625 = vmatpush.bf16.msra.mxu0 0
  %2626 = vmatpush.bf16.msra.mxu0 0
  %2627 = vmatpush.bf16.msra.mxu0 0
  %2628 = vmatpush.bf16.msra.mxu0 %v2604
  %2629 = vmatmul.bf16.gmra.mxu0 %v2601
  %v2630 = vpop.f32.mrf.mxu0
  %v2631 = vadd.f32 0.0, %v2630
  %v2632 = vpop.f32.mrf.mxu0
  %2633 = vdwg.mxu0
  %2634 = vmatpush.bf16.msra.mxu0 0
  %2635 = vmatpush.bf16.msra.mxu0 0
  %2636 = vmatpush.bf16.msra.mxu0 0
  %2637 = vmatpush.bf16.msra.mxu0 0
  %2638 = vmatpush.bf16.msra.mxu0 0
  %2639 = vmatpush.bf16.msra.mxu0 0
  %2640 = vmatpush.bf16.msra.mxu0 0
  %2641 = vmatpush.bf16.msra.mxu0 %v2607
  %2642 = vmatmul.bf16.gmra.mxu0 %v2601
  %v2643 = vpop.f32.mrf.mxu0
  %v2644 = vadd.f32 0.0, %v2643
  %v2645 = vpop.f32.mrf.mxu0
  %2646 = vdwg.mxu0
  %2647 = vmatpush.bf16.msra.mxu0 0
  %2648 = vmatpush.bf16.msra.mxu0 0
  %2649 = vmatpush.bf16.msra.mxu0 0
  %2650 = vmatpush.bf16.msra.mxu0 0
  %2651 = vmatpush.bf16.msra.mxu0 0
  %2652 = vmatpush.bf16.msra.mxu0 0
  %2653 = vmatpush.bf16.msra.mxu0 0
  %2654 = vmatpush.bf16.msra.mxu0 %v2610
  %2655 = vmatmul.bf16.gmra.mxu0 %v2601
  %v2656 = vpop.f32.mrf.mxu0
  %v2657 = vadd.f32 0.0, %v2656
  %v2658 = vpop.f32.mrf.mxu0
  %2659 = vdwg.mxu0
  %2660 = vmatpush.bf16.msra.mxu0 0
  %2661 = vmatpush.bf16.msra.mxu0 0
  %2662 = vmatpush.bf16.msra.mxu0 0
  %2663 = vmatpush.bf16.msra.mxu0 0
  %2664 = vmatpush.bf16.msra.mxu0 0
  %2665 = vmatpush.bf16.msra.mxu0 0
  %2666 = vmatpush.bf16.msra.mxu0 0
  %2667 = vmatpush.bf16.msra.mxu0 %v2613
  %2668 = vmatmul.bf16.gmra.mxu0 %v2601
  %v2669 = vpop.f32.mrf.mxu0
  %v2670 = vadd.f32 0.0, %v2669
  %v2671 = vpop.f32.mrf.mxu0
  %2672 = vdwg.mxu0
  %2673 = vmatpush.bf16.msra.mxu0 0
  %2674 = vmatpush.bf16.msra.mxu0 0
  %2675 = vmatpush.bf16.msra.mxu0 0
  %2676 = vmatpush.bf16.msra.mxu0 0
  %2677 = vmatpush.bf16.msra.mxu0 0
  %2678 = vmatpush.bf16.msra.mxu0 0
  %2679 = vmatpush.bf16.msra.mxu0 0
  %2680 = vmatpush.bf16.msra.mxu0 %v2616
  %2681 = vmatmul.bf16.gmra.mxu0 %v2601
  %v2682 = vpop.f32.mrf.mxu0
  %v2683 = vadd.f32 0.0, %v2682
  %v2684 = vpop.f32.mrf.mxu0
  %2685 = vdwg.mxu0
  %2686 = vmatpush.bf16.msra.mxu0 0
  %2687 = vmatpush.bf16.msra.mxu0 0
  %2688 = vmatpush.bf16.msra.mxu0 0
  %2689 = vmatpush.bf16.msra.mxu0 0
  %2690 = vmatpush.bf16.msra.mxu0 0
  %2691 = vmatpush.bf16.msra.mxu0 0
  %2692 = vmatpush.bf16.msra.mxu0 0
  %2693 = vmatpush.bf16.msra.mxu0 %v2619
  %2694 = vmatmul.bf16.gmra.mxu0 %v2601
  %v2695 = vpop.f32.mrf.mxu0
  %v2696 = vadd.f32 0.0, %v2695
  %v2697 = vpop.f32.mrf.mxu0
  %2698 = vdwg.mxu0
  %v2699 = vadd.f32 %v2551, %v2631
  %v2700 = vadd.f32 %v2552, %v2644
  %v2701 = vadd.f32 %v2553, %v2657
  %v2702 = vadd.f32 %v2554, %v2670
  %v2703 = vadd.f32 %v2555, %v2683
  %v2704 = vadd.f32 %v2556, %v2696
  %v2705 = vld [vmem:[#allocation3 + $0x2] sm:$0xff]
  %v2706 = vld [vmem:[#allocation3 + $0xa] sm:$0x3f]
  %s2707 = scalar_lea.vmem %s9, 16
  %v2708 = vld [vmem:[%s2707] sm:$0x3]
  %2710 = vst [vmem:[#allocation1] ss:$4 sm:$0xff] %v2705
  %s2712 = scalar_lea.vmem [#allocation1], 32
  %2713 = vst [vmem:[%s2712] ss:$4 sm:$0xff] %v2706
  %v2714 = vld.sshfl [vmem:[#allocation1] sm:$0xff pattern:$0x73625140]
  %v2716 = vld.sshfl [vmem:[#allocation1 + $0x8] sm:$0xff pattern:$0x73625140]
  %v2718 = vld.sshfl [vmem:[#allocation1 + $0x10] sm:$0xff pattern:$0x73625140]
  %v2720 = vld.sshfl [vmem:[#allocation1 + $0x18] sm:$0xff pattern:$0x73625140]
  %v2722 = vld.sshfl [vmem:[#allocation1 + $0x20] sm:$0xff pattern:$0x73625140]
  %v2724 = vld.sshfl [vmem:[#allocation1 + $0x28] sm:$0xff pattern:$0x73625140]
  %v2726 = vld.sshfl [vmem:[#allocation1 + $0x30] sm:$0xff pattern:$0x73625140]
  %2728 = vrot.lane.b32.xlu0 %v2714, 109
  %v2729 = vpop.permute.xlu0 %2728
  %2730 = vrot.lane.b32.xlu0 %v2716, 109
  %v2731 = vpop.permute.xlu0 %2730
  %2732 = vrot.lane.b32.xlu0 %v2718, 109
  %v2733 = vpop.permute.xlu0 %2732
  %2734 = vrot.lane.b32.xlu0 %v2720, 109
  %v2735 = vpop.permute.xlu0 %2734
  %2736 = vrot.lane.b32.xlu0 %v2722, 109
  %v2737 = vpop.permute.xlu0 %2736
  %2738 = vrot.lane.b32.xlu0 %v2724, 109
  %v2739 = vpop.permute.xlu0 %2738
  %2740 = vrot.lane.b32.xlu0 %v2726, 109
  %v2741 = vpop.permute.xlu0 %2740
  %v2742 = vsel %vm1292, %v2729, %v2731
  %v2743 = vsel %vm1292, %v2731, %v2733
  %v2744 = vsel %vm1292, %v2733, %v2735
  %v2745 = vsel %vm1292, %v2735, %v2737
  %v2746 = vsel %vm1292, %v2737, %v2739
  %v2747 = vsel %vm1292, %v2739, %v2741
  %v2749 = vsel %vm1597, %v2708, 0
  %v2752 = vsel %vm1533, %v2742, 0
  %v2755 = vsel %vm1533, %v2743, 0
  %v2758 = vsel %vm1533, %v2744, 0
  %v2761 = vsel %vm1533, %v2745, 0
  %v2764 = vsel %vm1533, %v2746, 0
  %v2767 = vsel %vm1533, %v2747, 0
  %2769 = vmatpush.bf16.msra.mxu0 0
  %2770 = vmatpush.bf16.msra.mxu0 0
  %2771 = vmatpush.bf16.msra.mxu0 0
  %2772 = vmatpush.bf16.msra.mxu0 0
  %2773 = vmatpush.bf16.msra.mxu0 0
  %2774 = vmatpush.bf16.msra.mxu0 0
  %2775 = vmatpush.bf16.msra.mxu0 0
  %2776 = vmatpush.bf16.msra.mxu0 %v2752
  %2777 = vmatmul.bf16.gmra.mxu0 %v2749
  %v2778 = vpop.f32.mrf.mxu0
  %v2779 = vadd.f32 0.0, %v2778
  %v2780 = vpop.f32.mrf.mxu0
  %2781 = vdwg.mxu0
  %2782 = vmatpush.bf16.msra.mxu0 0
  %2783 = vmatpush.bf16.msra.mxu0 0
  %2784 = vmatpush.bf16.msra.mxu0 0
  %2785 = vmatpush.bf16.msra.mxu0 0
  %2786 = vmatpush.bf16.msra.mxu0 0
  %2787 = vmatpush.bf16.msra.mxu0 0
  %2788 = vmatpush.bf16.msra.mxu0 0
  %2789 = vmatpush.bf16.msra.mxu0 %v2755
  %2790 = vmatmul.bf16.gmra.mxu0 %v2749
  %v2791 = vpop.f32.mrf.mxu0
  %v2792 = vadd.f32 0.0, %v2791
  %v2793 = vpop.f32.mrf.mxu0
  %2794 = vdwg.mxu0
  %2795 = vmatpush.bf16.msra.mxu0 0
  %2796 = vmatpush.bf16.msra.mxu0 0
  %2797 = vmatpush.bf16.msra.mxu0 0
  %2798 = vmatpush.bf16.msra.mxu0 0
  %2799 = vmatpush.bf16.msra.mxu0 0
  %2800 = vmatpush.bf16.msra.mxu0 0
  %2801 = vmatpush.bf16.msra.mxu0 0
  %2802 = vmatpush.bf16.msra.mxu0 %v2758
  %2803 = vmatmul.bf16.gmra.mxu0 %v2749
  %v2804 = vpop.f32.mrf.mxu0
  %v2805 = vadd.f32 0.0, %v2804
  %v2806 = vpop.f32.mrf.mxu0
  %2807 = vdwg.mxu0
  %2808 = vmatpush.bf16.msra.mxu0 0
  %2809 = vmatpush.bf16.msra.mxu0 0
  %2810 = vmatpush.bf16.msra.mxu0 0
  %2811 = vmatpush.bf16.msra.mxu0 0
  %2812 = vmatpush.bf16.msra.mxu0 0
  %2813 = vmatpush.bf16.msra.mxu0 0
  %2814 = vmatpush.bf16.msra.mxu0 0
  %2815 = vmatpush.bf16.msra.mxu0 %v2761
  %2816 = vmatmul.bf16.gmra.mxu0 %v2749
  %v2817 = vpop.f32.mrf.mxu0
  %v2818 = vadd.f32 0.0, %v2817
  %v2819 = vpop.f32.mrf.mxu0
  %2820 = vdwg.mxu0
  %2821 = vmatpush.bf16.msra.mxu0 0
  %2822 = vmatpush.bf16.msra.mxu0 0
  %2823 = vmatpush.bf16.msra.mxu0 0
  %2824 = vmatpush.bf16.msra.mxu0 0
  %2825 = vmatpush.bf16.msra.mxu0 0
  %2826 = vmatpush.bf16.msra.mxu0 0
  %2827 = vmatpush.bf16.msra.mxu0 0
  %2828 = vmatpush.bf16.msra.mxu0 %v2764
  %2829 = vmatmul.bf16.gmra.mxu0 %v2749
  %v2830 = vpop.f32.mrf.mxu0
  %v2831 = vadd.f32 0.0, %v2830
  %v2832 = vpop.f32.mrf.mxu0
  %2833 = vdwg.mxu0
  %2834 = vmatpush.bf16.msra.mxu0 0
  %2835 = vmatpush.bf16.msra.mxu0 0
  %2836 = vmatpush.bf16.msra.mxu0 0
  %2837 = vmatpush.bf16.msra.mxu0 0
  %2838 = vmatpush.bf16.msra.mxu0 0
  %2839 = vmatpush.bf16.msra.mxu0 0
  %2840 = vmatpush.bf16.msra.mxu0 0
  %2841 = vmatpush.bf16.msra.mxu0 %v2767
  %2842 = vmatmul.bf16.gmra.mxu0 %v2749
  %v2843 = vpop.f32.mrf.mxu0
  %v2844 = vadd.f32 0.0, %v2843
  %v2845 = vpop.f32.mrf.mxu0
  %2846 = vdwg.mxu0
  %v2847 = vadd.f32 %v2699, %v2779
  %v2848 = vadd.f32 %v2700, %v2792
  %v2849 = vadd.f32 %v2701, %v2805
  %v2850 = vadd.f32 %v2702, %v2818
  %v2851 = vadd.f32 %v2703, %v2831
  %v2852 = vadd.f32 %v2704, %v2844
  %v2853 = vld [vmem:[%s3] sm:$0xff]
  %v2854 = vld [vmem:[%s3 + $0x8] sm:$0xff]
  %v2855 = vld [vmem:[%s3 + $0x10] sm:$0xff]
  %v2856 = vld [vmem:[%s3 + $0x18] sm:$0xff]
  %v2857 = vld [vmem:[%s3 + $0x20] sm:$0xff]
  %v2858 = vld [vmem:[%s3 + $0x28] sm:$0xff]
  %v2859 = vld [vmem:[%s3 + $0x30] sm:$0xff]
  %v2860 = vld [vmem:[%s3 + $0x38] sm:$0xff]
  %v2861 = vld [vmem:[%s3 + $0x40] sm:$0xff]
  %v2862 = vld [vmem:[%s3 + $0x48] sm:$0xff]
  %v2863 = vld [vmem:[%s3 + $0x50] sm:$0xff]
  %v2864 = vld [vmem:[%s3 + $0x58] sm:$0xff]
  %v2865 = vld [vmem:[%s3 + $0x60] sm:$0xff]
  %v2866 = vld [vmem:[%s3 + $0x68] sm:$0xff]
  %v2867 = vld [vmem:[%s3 + $0x70] sm:$0xff]
  %v2868 = vld [vmem:[%s3 + $0x78] sm:$0xff]
  %v2869 = vld [vmem:[%s3 + $0x80] sm:$0xff]
  %v2870 = vld [vmem:[%s3 + $0x88] sm:$0xff]
  %v2871 = vld [vmem:[%s3 + $0x90] sm:$0xff]
  %v2872 = vld [vmem:[%s3 + $0x98] sm:$0xff]
  %v2873 = vld [vmem:[%s3 + $0xa0] sm:$0xff]
  %v2874 = vld [vmem:[%s3 + $0xa8] sm:$0xff]
  %v2875 = vld [vmem:[%s3 + $0xb0] sm:$0xff]
  %v2876 = vld [vmem:[%s3 + $0xb8] sm:$0xff]
  %v2877 = vld [vmem:[%s3 + $0xc0] sm:$0xff]
  %v2878 = vld [vmem:[%s3 + $0xc8] sm:$0xff]
  %v2879 = vld [vmem:[%s3 + $0xd0] sm:$0xff]
  %v2880 = vld [vmem:[%s3 + $0xd8] sm:$0xff]
  %v2881 = vld [vmem:[%s3 + $0xe0] sm:$0xff]
  %v2882 = vld [vmem:[%s3 + $0xe8] sm:$0xff]
  %v2883 = vld [vmem:[%s3 + $0xf0] sm:$0xff]
  %v2884 = vld [vmem:[%s3 + $0xf8] sm:$0xff]
  %v2885 = vld [vmem:[%s3 + $0x100] sm:$0xff]
  %v2886 = vld [vmem:[%s3 + $0x108] sm:$0xff]
  %v2887 = vld [vmem:[%s3 + $0x110] sm:$0xff]
  %v2888 = vld [vmem:[%s3 + $0x118] sm:$0xff]
  %v2889 = vld [vmem:[%s3 + $0x120] sm:$0xff]
  %v2890 = vld [vmem:[%s3 + $0x128] sm:$0xff]
  %v2891 = vld [vmem:[%s3 + $0x130] sm:$0xff]
  %v2892 = vld [vmem:[%s3 + $0x138] sm:$0xff]
  %v2893 = vld [vmem:[%s3 + $0x140] sm:$0xff]
  %v2894 = vld [vmem:[%s3 + $0x148] sm:$0xff]
  %v2895 = vld [vmem:[%s3 + $0x150] sm:$0xff]
  %v2896 = vld [vmem:[%s3 + $0x158] sm:$0xff]
  %v2897 = vld [vmem:[%s3 + $0x160] sm:$0xff]
  %v2898 = vld [vmem:[%s3 + $0x168] sm:$0xff]
  %v2899 = vld [vmem:[%s3 + $0x170] sm:$0xff]
  %v2900 = vld [vmem:[%s3 + $0x178] sm:$0xff]
  %v2901 = vld [vmem:[%s3 + $0x180] sm:$0xff]
  %v2902 = vld [vmem:[%s3 + $0x188] sm:$0xff]
  %v2903 = vld [vmem:[%s3 + $0x190] sm:$0xff]
  %v2904 = vld [vmem:[%s3 + $0x198] sm:$0xff]
  %v2905 = vld [vmem:[%s3 + $0x1a0] sm:$0xff]
  %v2906 = vld [vmem:[%s3 + $0x1a8] sm:$0xff]
  %v2907 = vld [vmem:[%s3 + $0x1b0] sm:$0xff]
  %v2908 = vld [vmem:[%s3 + $0x1b8] sm:$0xff]
  %v2909 = vld [vmem:[%s3 + $0x1c0] sm:$0xff]
  %v2910 = vld [vmem:[%s3 + $0x1c8] sm:$0xff]
  %v2911 = vld [vmem:[%s3 + $0x1d0] sm:$0xff]
  %v2912 = vld [vmem:[%s3 + $0x1d8] sm:$0xff]
  %v2913 = vld [vmem:[%s3 + $0x1e0] sm:$0xff]
  %v2914 = vld [vmem:[%s3 + $0x1e8] sm:$0xff]
  %v2915 = vld [vmem:[%s3 + $0x1f0] sm:$0xff]
  %v2916 = vld [vmem:[%s3 + $0x1f8] sm:$0xff]
  %v2917 = vld [vmem:[%s3 + $0x200] sm:$0xff]
  %v2918 = vld [vmem:[%s3 + $0x208] sm:$0xff]
  %v2919 = vld [vmem:[%s3 + $0x210] sm:$0xff]
  %v2920 = vld [vmem:[%s3 + $0x218] sm:$0xff]
  %v2921 = vld [vmem:[%s3 + $0x220] sm:$0xff]
  %v2922 = vld [vmem:[%s3 + $0x228] sm:$0xff]
  %v2923 = vld [vmem:[%s3 + $0x230] sm:$0xff]
  %v2924 = vld [vmem:[%s3 + $0x238] sm:$0xff]
  %v2925 = vld [vmem:[%s3 + $0x240] sm:$0xff]
  %v2926 = vld [vmem:[%s3 + $0x248] sm:$0xff]
  %v2927 = vld [vmem:[%s3 + $0x250] sm:$0xff]
  %v2928 = vld [vmem:[%s3 + $0x258] sm:$0xff]
  %v2929 = vld [vmem:[%s3 + $0x260] sm:$0xff]
  %v2930 = vld [vmem:[%s3 + $0x268] sm:$0xff]
  %v2931 = vld [vmem:[%s3 + $0x270] sm:$0xff]
  %v2932 = vld [vmem:[%s3 + $0x278] sm:$0xff]
  %v2933 = vld [vmem:[%s3 + $0x280] sm:$0xff]
  %v2934 = vld [vmem:[%s3 + $0x288] sm:$0xff]
  %v2935 = vld [vmem:[%s3 + $0x290] sm:$0xff]
  %v2936 = vld [vmem:[%s3 + $0x298] sm:$0xff]
  %v2937 = vld [vmem:[%s3 + $0x2a0] sm:$0xff]
  %v2938 = vld [vmem:[%s3 + $0x2a8] sm:$0xff]
  %v2939 = vld [vmem:[%s3 + $0x2b0] sm:$0xff]
  %v2940 = vld [vmem:[%s3 + $0x2b8] sm:$0xff]
  %v2941 = vld [vmem:[%s3 + $0x2c0] sm:$0xff]
  %v2942 = vld [vmem:[%s3 + $0x2c8] sm:$0xff]
  %v2943 = vld [vmem:[%s3 + $0x2d0] sm:$0xff]
  %v2944 = vld [vmem:[%s3 + $0x2d8] sm:$0xff]
  %v2945 = vld [vmem:[%s3 + $0x2e0] sm:$0xff]
  %v2946 = vld [vmem:[%s3 + $0x2e8] sm:$0xff]
  %v2947 = vld [vmem:[%s3 + $0x2f0] sm:$0xff]
  %v2948 = vld [vmem:[%s3 + $0x2f8] sm:$0xff]
  %2949 = vmatpush.msra.mxu0 %v2883
  %2950 = vmatpush.msra.mxu0 %v2881
  %2951 = vmatpush.msra.mxu0 %v2879
  %2952 = vmatpush.msra.mxu0 %v2877
  %2953 = vmatpush.msra.mxu0 %v2875
  %2954 = vmatpush.msra.mxu0 %v2873
  %2955 = vmatpush.msra.mxu0 %v2871
  %2956 = vmatpush.msra.mxu0 %v2869
  %2957 = vmatpush.msra.mxu0 %v2867
  %2958 = vmatpush.msra.mxu0 %v2865
  %2959 = vmatpush.msra.mxu0 %v2863
  %2960 = vmatpush.msra.mxu0 %v2861
  %2961 = vmatpush.msra.mxu0 %v2859
  %2962 = vmatpush.msra.mxu0 %v2857
  %2963 = vmatpush.msra.mxu0 %v2855
  %2964 = vmatpush.msra.mxu0 %v2853
  %2965 = vmatmul.f32.gmra.mxu0 %v2847
  %v2966 = vpop.f32.mrf.mxu0
  %v2967 = vadd.f32 0.0, %v2966
  %2968 = vdwg.mxu0
  %2969 = vmatpush.msra.mxu0 %v2915
  %2970 = vmatpush.msra.mxu0 %v2913
  %2971 = vmatpush.msra.mxu0 %v2911
  %2972 = vmatpush.msra.mxu0 %v2909
  %2973 = vmatpush.msra.mxu0 %v2907
  %2974 = vmatpush.msra.mxu0 %v2905
  %2975 = vmatpush.msra.mxu0 %v2903
  %2976 = vmatpush.msra.mxu0 %v2901
  %2977 = vmatpush.msra.mxu0 %v2899
  %2978 = vmatpush.msra.mxu0 %v2897
  %2979 = vmatpush.msra.mxu0 %v2895
  %2980 = vmatpush.msra.mxu0 %v2893
  %2981 = vmatpush.msra.mxu0 %v2891
  %2982 = vmatpush.msra.mxu0 %v2889
  %2983 = vmatpush.msra.mxu0 %v2887
  %2984 = vmatpush.msra.mxu0 %v2885
  %2985 = vmatmul.f32.gmra.mxu0 %v2848
  %v2986 = vpop.f32.mrf.mxu0
  %v2987 = vadd.f32 %v2967, %v2986
  %2988 = vdwg.mxu0
  %2989 = vmatpush.msra.mxu0 %v2947
  %2990 = vmatpush.msra.mxu0 %v2945
  %2991 = vmatpush.msra.mxu0 %v2943
  %2992 = vmatpush.msra.mxu0 %v2941
  %2993 = vmatpush.msra.mxu0 %v2939
  %2994 = vmatpush.msra.mxu0 %v2937
  %2995 = vmatpush.msra.mxu0 %v2935
  %2996 = vmatpush.msra.mxu0 %v2933
  %2997 = vmatpush.msra.mxu0 %v2931
  %2998 = vmatpush.msra.mxu0 %v2929
  %2999 = vmatpush.msra.mxu0 %v2927
  %3000 = vmatpush.msra.mxu0 %v2925
  %3001 = vmatpush.msra.mxu0 %v2923
  %3002 = vmatpush.msra.mxu0 %v2921
  %3003 = vmatpush.msra.mxu0 %v2919
  %3004 = vmatpush.msra.mxu0 %v2917
  %3005 = vmatmul.f32.gmra.mxu0 %v2849
  %v3006 = vpop.f32.mrf.mxu0
  %v3007 = vadd.f32 %v2987, %v3006
  %3008 = vdwg.mxu0
  %3009 = vmatpush.msra.mxu0 %v2884
  %3010 = vmatpush.msra.mxu0 %v2882
  %3011 = vmatpush.msra.mxu0 %v2880
  %3012 = vmatpush.msra.mxu0 %v2878
  %3013 = vmatpush.msra.mxu0 %v2876
  %3014 = vmatpush.msra.mxu0 %v2874
  %3015 = vmatpush.msra.mxu0 %v2872
  %3016 = vmatpush.msra.mxu0 %v2870
  %3017 = vmatpush.msra.mxu0 %v2868
  %3018 = vmatpush.msra.mxu0 %v2866
  %3019 = vmatpush.msra.mxu0 %v2864
  %3020 = vmatpush.msra.mxu0 %v2862
  %3021 = vmatpush.msra.mxu0 %v2860
  %3022 = vmatpush.msra.mxu0 %v2858
  %3023 = vmatpush.msra.mxu0 %v2856
  %3024 = vmatpush.msra.mxu0 %v2854
  %3025 = vmatmul.f32.gmra.mxu0 %v2847
  %v3026 = vpop.f32.mrf.mxu0
  %v3027 = vadd.f32 0.0, %v3026
  %3028 = vdwg.mxu0
  %3029 = vmatpush.msra.mxu0 %v2916
  %3030 = vmatpush.msra.mxu0 %v2914
  %3031 = vmatpush.msra.mxu0 %v2912
  %3032 = vmatpush.msra.mxu0 %v2910
  %3033 = vmatpush.msra.mxu0 %v2908
  %3034 = vmatpush.msra.mxu0 %v2906
  %3035 = vmatpush.msra.mxu0 %v2904
  %3036 = vmatpush.msra.mxu0 %v2902
  %3037 = vmatpush.msra.mxu0 %v2900
  %3038 = vmatpush.msra.mxu0 %v2898
  %3039 = vmatpush.msra.mxu0 %v2896
  %3040 = vmatpush.msra.mxu0 %v2894
  %3041 = vmatpush.msra.mxu0 %v2892
  %3042 = vmatpush.msra.mxu0 %v2890
  %3043 = vmatpush.msra.mxu0 %v2888
  %3044 = vmatpush.msra.mxu0 %v2886
  %3045 = vmatmul.f32.gmra.mxu0 %v2848
  %v3046 = vpop.f32.mrf.mxu0
  %v3047 = vadd.f32 %v3027, %v3046
  %3048 = vdwg.mxu0
  %3049 = vmatpush.msra.mxu0 %v2948
  %3050 = vmatpush.msra.mxu0 %v2946
  %3051 = vmatpush.msra.mxu0 %v2944
  %3052 = vmatpush.msra.mxu0 %v2942
  %3053 = vmatpush.msra.mxu0 %v2940
  %3054 = vmatpush.msra.mxu0 %v2938
  %3055 = vmatpush.msra.mxu0 %v2936
  %3056 = vmatpush.msra.mxu0 %v2934
  %3057 = vmatpush.msra.mxu0 %v2932
  %3058 = vmatpush.msra.mxu0 %v2930
  %3059 = vmatpush.msra.mxu0 %v2928
  %3060 = vmatpush.msra.mxu0 %v2926
  %3061 = vmatpush.msra.mxu0 %v2924
  %3062 = vmatpush.msra.mxu0 %v2922
  %3063 = vmatpush.msra.mxu0 %v2920
  %3064 = vmatpush.msra.mxu0 %v2918
  %3065 = vmatmul.f32.gmra.mxu0 %v2849
  %v3066 = vpop.f32.mrf.mxu0
  %v3067 = vadd.f32 %v3047, %v3066
  %3068 = vdwg.mxu0
  %3069 = vmatpush.msra.mxu0 %v2883
  %3070 = vmatpush.msra.mxu0 %v2881
  %3071 = vmatpush.msra.mxu0 %v2879
  %3072 = vmatpush.msra.mxu0 %v2877
  %3073 = vmatpush.msra.mxu0 %v2875
  %3074 = vmatpush.msra.mxu0 %v2873
  %3075 = vmatpush.msra.mxu0 %v2871
  %3076 = vmatpush.msra.mxu0 %v2869
  %3077 = vmatpush.msra.mxu0 %v2867
  %3078 = vmatpush.msra.mxu0 %v2865
  %3079 = vmatpush.msra.mxu0 %v2863
  %3080 = vmatpush.msra.mxu0 %v2861
  %3081 = vmatpush.msra.mxu0 %v2859
  %3082 = vmatpush.msra.mxu0 %v2857
  %3083 = vmatpush.msra.mxu0 %v2855
  %3084 = vmatpush.msra.mxu0 %v2853
  %3085 = vmatmul.f32.gmra.mxu0 %v2850
  %v3086 = vpop.f32.mrf.mxu0
  %v3087 = vadd.f32 0.0, %v3086
  %3088 = vdwg.mxu0
  %3089 = vmatpush.msra.mxu0 %v2915
  %3090 = vmatpush.msra.mxu0 %v2913
  %3091 = vmatpush.msra.mxu0 %v2911
  %3092 = vmatpush.msra.mxu0 %v2909
  %3093 = vmatpush.msra.mxu0 %v2907
  %3094 = vmatpush.msra.mxu0 %v2905
  %3095 = vmatpush.msra.mxu0 %v2903
  %3096 = vmatpush.msra.mxu0 %v2901
  %3097 = vmatpush.msra.mxu0 %v2899
  %3098 = vmatpush.msra.mxu0 %v2897
  %3099 = vmatpush.msra.mxu0 %v2895
  %3100 = vmatpush.msra.mxu0 %v2893
  %3101 = vmatpush.msra.mxu0 %v2891
  %3102 = vmatpush.msra.mxu0 %v2889
  %3103 = vmatpush.msra.mxu0 %v2887
  %3104 = vmatpush.msra.mxu0 %v2885
  %3105 = vmatmul.f32.gmra.mxu0 %v2851
  %v3106 = vpop.f32.mrf.mxu0
  %v3107 = vadd.f32 %v3087, %v3106
  %3108 = vdwg.mxu0
  %3109 = vmatpush.msra.mxu0 %v2947
  %3110 = vmatpush.msra.mxu0 %v2945
  %3111 = vmatpush.msra.mxu0 %v2943
  %3112 = vmatpush.msra.mxu0 %v2941
  %3113 = vmatpush.msra.mxu0 %v2939
  %3114 = vmatpush.msra.mxu0 %v2937
  %3115 = vmatpush.msra.mxu0 %v2935
  %3116 = vmatpush.msra.mxu0 %v2933
  %3117 = vmatpush.msra.mxu0 %v2931
  %3118 = vmatpush.msra.mxu0 %v2929
  %3119 = vmatpush.msra.mxu0 %v2927
  %3120 = vmatpush.msra.mxu0 %v2925
  %3121 = vmatpush.msra.mxu0 %v2923
  %3122 = vmatpush.msra.mxu0 %v2921
  %3123 = vmatpush.msra.mxu0 %v2919
  %3124 = vmatpush.msra.mxu0 %v2917
  %3125 = vmatmul.f32.gmra.mxu0 %v2852
  %v3126 = vpop.f32.mrf.mxu0
  %v3127 = vadd.f32 %v3107, %v3126
  %3128 = vdwg.mxu0
  %3129 = vmatpush.msra.mxu0 %v2884
  %3130 = vmatpush.msra.mxu0 %v2882
  %3131 = vmatpush.msra.mxu0 %v2880
  %3132 = vmatpush.msra.mxu0 %v2878
  %3133 = vmatpush.msra.mxu0 %v2876
  %3134 = vmatpush.msra.mxu0 %v2874
  %3135 = vmatpush.msra.mxu0 %v2872
  %3136 = vmatpush.msra.mxu0 %v2870
  %3137 = vmatpush.msra.mxu0 %v2868
  %3138 = vmatpush.msra.mxu0 %v2866
  %3139 = vmatpush.msra.mxu0 %v2864
  %3140 = vmatpush.msra.mxu0 %v2862
  %3141 = vmatpush.msra.mxu0 %v2860
  %3142 = vmatpush.msra.mxu0 %v2858
  %3143 = vmatpush.msra.mxu0 %v2856
  %3144 = vmatpush.msra.mxu0 %v2854
  %3145 = vmatmul.f32.gmra.mxu0 %v2850
  %v3146 = vpop.f32.mrf.mxu0
  %v3147 = vadd.f32 0.0, %v3146
  %3148 = vdwg.mxu0
  %3149 = vmatpush.msra.mxu0 %v2916
  %3150 = vmatpush.msra.mxu0 %v2914
  %3151 = vmatpush.msra.mxu0 %v2912
  %3152 = vmatpush.msra.mxu0 %v2910
  %3153 = vmatpush.msra.mxu0 %v2908
  %3154 = vmatpush.msra.mxu0 %v2906
  %3155 = vmatpush.msra.mxu0 %v2904
  %3156 = vmatpush.msra.mxu0 %v2902
  %3157 = vmatpush.msra.mxu0 %v2900
  %3158 = vmatpush.msra.mxu0 %v2898
  %3159 = vmatpush.msra.mxu0 %v2896
  %3160 = vmatpush.msra.mxu0 %v2894
  %3161 = vmatpush.msra.mxu0 %v2892
  %3162 = vmatpush.msra.mxu0 %v2890
  %3163 = vmatpush.msra.mxu0 %v2888
  %3164 = vmatpush.msra.mxu0 %v2886
  %3165 = vmatmul.f32.gmra.mxu0 %v2851
  %v3166 = vpop.f32.mrf.mxu0
  %v3167 = vadd.f32 %v3147, %v3166
  %3168 = vdwg.mxu0
  %3169 = vmatpush.msra.mxu0 %v2948
  %3170 = vmatpush.msra.mxu0 %v2946
  %3171 = vmatpush.msra.mxu0 %v2944
  %3172 = vmatpush.msra.mxu0 %v2942
  %3173 = vmatpush.msra.mxu0 %v2940
  %3174 = vmatpush.msra.mxu0 %v2938
  %3175 = vmatpush.msra.mxu0 %v2936
  %3176 = vmatpush.msra.mxu0 %v2934
  %3177 = vmatpush.msra.mxu0 %v2932
  %3178 = vmatpush.msra.mxu0 %v2930
  %3179 = vmatpush.msra.mxu0 %v2928
  %3180 = vmatpush.msra.mxu0 %v2926
  %3181 = vmatpush.msra.mxu0 %v2924
  %3182 = vmatpush.msra.mxu0 %v2922
  %3183 = vmatpush.msra.mxu0 %v2920
  %3184 = vmatpush.msra.mxu0 %v2918
  %3185 = vmatmul.f32.gmra.mxu0 %v2852
  %v3186 = vpop.f32.mrf.mxu0
  %v3187 = vadd.f32 %v3167, %v3186
  %3188 = vdwg.mxu0
  %v3189 = vsel %vm258, %v3007, 0.0
  %v3190 = vsel %vm258, %v3067, 0.0
  %v3191 = vadd.f32 %v3189, %v3190
  %3192 = vadd.xlane.f32.xlu0 %v3191
  %v3193 = vpop.xlane.xlu0 %3192
  %v3194 = vadd.f32 %v3193, 0.0
  %v3195 = vsel %vm258, %v3127, 0.0
  %v3196 = vsel %vm258, %v3187, 0.0
  %v3197 = vadd.f32 %v3195, %v3196
  %3198 = vadd.xlane.f32.xlu0 %v3197
  %v3199 = vpop.xlane.xlu0 %3198
  %v3200 = vadd.f32 %v3194, %v3199
  %v3201 = vmul.f32 %v3200, 0.001953125
  %v3202 = vsub.f32 %v3007, %v3201
  %v3203 = vsub.f32 %v3067, %v3201
  %v3204 = vmul.f32 %v3202, %v3202
  %v3205 = vmul.f32 %v3203, %v3203
  %v3206 = vsel %vm258, %v3204, 0.0
  %v3207 = vsel %vm258, %v3205, 0.0
  %v3208 = vadd.f32 %v3206, %v3207
  %3209 = vadd.xlane.f32.xlu0 %v3208
  %v3210 = vpop.xlane.xlu0 %3209
  %v3211 = vadd.f32 %v3210, 0.0
  %v3212 = vsub.f32 %v3127, %v3201
  %v3213 = vsub.f32 %v3187, %v3201
  %v3214 = vmul.f32 %v3212, %v3212
  %v3215 = vmul.f32 %v3213, %v3213
  %v3216 = vsel %vm258, %v3214, 0.0
  %v3217 = vsel %vm258, %v3215, 0.0
  %v3218 = vadd.f32 %v3216, %v3217
  %3219 = vadd.xlane.f32.xlu0 %v3218
  %v3220 = vpop.xlane.xlu0 %3219
  %v3221 = vadd.f32 %v3211, %v3220
  %v3222 = vmul.f32 %v3221, 0.001953125
  %v3223 = vadd.f32 %v3222, 1e-05
  %v3224 = vrsqrt.pop %v3223
  %v3225 = vmul.f32 %v3224, %v3223
  %v3226 = vmul.f32 %v3225, %v3224
  %v3227 = vmul.f32 0.5, %v3226
  %v3228 = vsub.f32 1.5, %v3227
  %v3229 = vmul.f32 %v3224, %v3228
  %vm3230 = vweird.f32 %v3223
  %vm3231 = vweird.f32 %v3224
  %vm3232 = vmor %vm3230, %vm3231
  %v3233 = vsel %vm3232, %v3224, %v3229
  %v3234 = vmul.f32 %v3202, %v3233
  %v3235 = vmul.f32 %v3203, %v3233
  %v3236 = vld [vmem:[%s11] sm:$0xf]
  %3238 = vset.pattern.permute.xlu0 0
  %3239 = vperm.xlu0 %3238, %v3236
  %v3240 = vpop.permute.xlu0 %3239
  %v3242 = vmul.f32 %v3234, %v3240
  %v3243 = vmul.f32 %v3235, %v3240
  %v3244 = vld [vmem:[%s12] sm:$0xf]
  %3246 = vset.pattern.permute.xlu0 0
  %3247 = vperm.xlu0 %3246, %v3244
  %v3248 = vpop.permute.xlu0 %3247
  %v3250 = vadd.f32 %v3242, %v3248
  %v3251 = vadd.f32 %v3243, %v3248
  %v3252 = vmax.f32 %v3250, 0.0
  %v3253 = vmax.f32 %v3251, 0.0
  %v3256 = vrot.slane %v3253, 4
  %v3257 = vsel %vm258, %v3252, %v3256
  %3259 = vst [vmem:[%s13] sm:$0xff] %v3257
  %v3260 = vmul.f32 %v3212, %v3233
  %v3261 = vmul.f32 %v3213, %v3233
  %v3262 = vld [vmem:[%s11] sm:$0xf]
  %3264 = vset.pattern.permute.xlu0 0
  %3265 = vperm.xlu0 %3264, %v3262
  %v3266 = vpop.permute.xlu0 %3265
  %v3268 = vmul.f32 %v3260, %v3266
  %v3269 = vmul.f32 %v3261, %v3266
  %v3270 = vld [vmem:[%s12] sm:$0xf]
  %3272 = vset.pattern.permute.xlu0 0
  %3273 = vperm.xlu0 %3272, %v3270
  %v3274 = vpop.permute.xlu0 %3273
  %v3276 = vadd.f32 %v3268, %v3274
  %v3277 = vadd.f32 %v3269, %v3274
  %v3278 = vmax.f32 %v3276, 0.0
  %v3279 = vmax.f32 %v3277, 0.0
  %v3282 = vrot.slane %v3279, 4
  %v3283 = vsel %vm258, %v3278, %v3282
  %s3285 = scalar_lea.vmem %s13, 8
  %3286 = vst [vmem:[%s3285] sm:$0xff] %v3283
  // Predicated region
  $region54: #{up_forward.1} parent=0 // pred_check
    _
  $region55: #{up_forward.1} parent=0 // pred_check_branch
    %3288 = sbr.rel (0) target = $region57
  $region56: #{up_forward.1} parent=0 // pred_region
    _
  $region57: #{up_forward.1} parent=0 // pred_fallthru
    _
  // Predicated region
  $region58: #{up_forward.1} parent=0 // pred_check
    _
  $region59: #{up_forward.1} parent=0 // pred_check_branch
    %3290 = sbr.rel (0) target = $region61
  $region60: #{up_forward.1} parent=0 // pred_region
    _
  $region61: #{up_forward.1} parent=0 // pred_fallthru
    _

</llo_original>
